<compile_context>
chip_gen: v6e
topology: v6e:2x2x1
jax: 0.10.0
libtpu: 0.0.40
codegen_flags: <defaults>
</compile_context>

<pallas_src>
import math

import jax
import jax.numpy as jnp
import numpy as np
from jax import lax
from jax.experimental import pallas as pl
from jax.experimental.pallas import tpu as pltpu

# Parity classes (di, dj) of the padded input of the *next* conv layer.
CLS = ((0, 0), (0, 1), (1, 0), (1, 1))


# ---------------------------------------------------------------------------
# Fused kernel: conv1 -> conv2 -> conv3 -> fc1 -> fc2 (one batch elem / program)
# ---------------------------------------------------------------------------
def _encoder_kernel(p1_ref, w1_ref, b1_ref, w2_ref, b2_ref, sg_ref,
                    w3_ref, b3_ref, wf1_ref, bf1_ref, wf2_ref, bf2_ref,
                    o_ref,
                    a2_00, a2_01, a2_10, a2_11,
                    a3_00, a3_01, a3_10, a3_11):
    a2 = {CLS[0]: a2_00, CLS[1]: a2_01, CLS[2]: a2_10, CLS[3]: a2_11}
    a3 = {CLS[0]: a3_00, CLS[1]: a3_01, CLS[2]: a3_10, CLS[3]: a3_11}

    # Zero the padded class planes (the untouched border == conv zero padding).
    for ref in (a2_00, a2_01, a2_10, a2_11, a3_00, a3_01, a3_10, a3_11):
        ref[...] = jnp.zeros(ref.shape, ref.dtype)

    # ---- conv1: host-prepared, class-grouped patches -> single MXU matmul ----
    h1 = jnp.dot(p1_ref[...], w1_ref[...], preferred_element_type=jnp.float32)
    h1 = jnp.maximum(h1 + b1_ref[...], 0.0)                      # (256, 32)

    # Scatter conv1's output into conv2's padded parity-class planes (9,9,32).
    for ci, (di, dj) in enumerate(CLS):
        r0, c0 = 1 - di, 1 - dj
        blk = h1[ci * 64:(ci + 1) * 64, :].reshape(8, 8, 32)
        a2[(di, dj)][r0:r0 + 8, c0:c0 + 8, :] = blk

    # ---- conv2: 16 taps, each a contiguous slice of a class plane ----------
    taps = []
    for i in range(4):
        for j in range(4):
            t = a2[(i % 2, j % 2)][i // 2:i // 2 + 8, j // 2:j // 2 + 8, :]
            taps.append(t.reshape(64, 32))
    x2 = jnp.concatenate(taps, axis=1)                           # (64, 512) lane-dense
    h2 = jnp.dot(x2, w2_ref[...], preferred_element_type=jnp.float32)
    h2 = jnp.maximum(h2 + b2_ref[...], 0.0)                      # (64, 32)

    # Regroup conv2's output by parity class with a 0/1 selection matmul, then
    # scatter into conv3's padded class planes (5,9,32).
    g = jnp.dot(sg_ref[...], h2, preferred_element_type=jnp.float32)   # (128, 32)
    for ci, (di, dj) in enumerate(CLS):
        r0, c0 = 1 - di, 1 - dj
        blk = g[ci * 32:(ci + 1) * 32, :].reshape(4, 8, 32)
        a3[(di, dj)][r0:r0 + 4, c0:c0 + 8, :] = blk

    # ---- conv3 (one matmul per output row) + fc1 feature assembly ----------
    feat = []
    for u in range(4):
        taps3 = []
        for i in range(4):
            for j in range(4):
                taps3.append(a3[(i % 2, j % 2)][i // 2 + u, j // 2:j // 2 + 4, :])
        x3 = jnp.concatenate(taps3, axis=1)                      # (4, 512)
        h3 = jnp.dot(x3, w3_ref[...], preferred_element_type=jnp.float32)
        h3 = jnp.maximum(h3 + b3_ref[...], 0.0)                  # (4, 32), rows = ow
        for v in range(4):
            feat.append(h3[v:v + 1, :])                          # (1, 32)
    f = jnp.concatenate(feat, axis=1)                            # (1, 512)

    # ---- fc1 + fc2 ----------------------------------------------------------
    h4 = jnp.maximum(jnp.dot(f, wf1_ref[...], preferred_element_type=jnp.float32)
                     + bf1_ref[...], 0.0)                        # (1, 256)
    h5 = jnp.maximum(jnp.dot(h4, wf2_ref[...], preferred_element_type=jnp.float32)
                     + bf2_ref[...], 0.0)                        # (1, 128)
    o_ref[0] = h5


# ---------------------------------------------------------------------------
# Host-side one-time weight re-layout (no per-call transposes in the fwd path)
# ---------------------------------------------------------------------------
def _conv_weight_matrix(w):
    # (Cout, Cin, 4, 4) -> (16*Cin, Cout); contraction order (i, j, cin)
    cout = w.shape[0]
    return jnp.transpose(w, (2, 3, 1, 0)).reshape(-1, cout)


def _group_matrix():
    # Maps conv2-output rows (oh*8+ow) to grouped rows (class, p, q<8) that are
    # scattered into conv3's padded parity-class planes.  Rows with q>=4 are 0.
    sg = np.zeros((128, 64), np.float32)
    for ci, (di, dj) in enumerate(CLS):
        for p in range(4):
            for q in range(4):
                oh = 2 * p + (1 - di)
                ow = 2 * q + (1 - dj)
                sg[ci * 32 + p * 8 + q, oh * 8 + ow] = 1.0
    return jnp.asarray(sg)


def prepare_params(params):
    """Call once: converts PyTorch-convention weights into kernel-ready form."""
    return {
        "w1": _conv_weight_matrix(params["conv1_w"]),            # (48, 32)
        "b1": params["conv1_b"].reshape(1, 32),
        "w2": _conv_weight_matrix(params["conv2_w"]),            # (512, 32)
        "b2": params["conv2_b"].reshape(1, 32),
        "w3": _conv_weight_matrix(params["conv3_w"]),            # (512, 32)
        "b3": params["conv3_b"].reshape(1, 32),
        # kernel assembles fc1 features in (u, v, c) order; torch flattens (c, u, v)
        "wf1": jnp.transpose(params["fc1_w"].reshape(256, 32, 4, 4),
                             (2, 3, 1, 0)).reshape(512, 256),
        "bf1": params["fc1_b"].reshape(1, 256),
        "wf2": params["fc2_w"].T,                                # (256, 128)
        "bf2": params["fc2_b"].reshape(1, 128),
        "sg": _group_matrix(),                                   # (128, 64)
    }


# ---------------------------------------------------------------------------
# Host prep of the *network input* only: 48-wide conv1 patch rows, pre-grouped
# by the parity class of conv2's padded input.
# ---------------------------------------------------------------------------
def _conv1_patches(x):
    B = x.shape[0]
    xp = jnp.pad(x, ((0, 0), (0, 0), (1, 1), (1, 1)))            # (B,3,34,34)
    pieces = []
    for i in range(4):
        for j in range(4):
            pieces.append(xp[:, :, i:i + 32:2, j:j + 32:2])      # (B,3,16,16)
    p = jnp.stack(pieces, axis=-1).reshape(B, 3, 16, 16, 4, 4)
    p = jnp.transpose(p, (0, 2, 3, 4, 5, 1))                     # (B,oh,ow,i,j,c)
    blocks = []
    for (di, dj) in CLS:
        blk = p[:, 1 - di::2, 1 - dj::2]                         # (B,8,8,4,4,3)
        blocks.append(blk.reshape(B, 64, 48))
    return jnp.concatenate(blocks, axis=1).reshape(B * 256, 48)


# ---------------------------------------------------------------------------
# Forward pass (matches Encoder_conv.forward)
# ---------------------------------------------------------------------------
def encoder_conv_forward(kp, x):
    B = x.shape[0]
    p1 = _conv1_patches(x)                                       # (B*256, 48)

    def resident_spec(a):
        nd = a.ndim
        return pl.BlockSpec(tuple(a.shape), lambda b: (0,) * nd)

    weights = (kp["w1"], kp["b1"], kp["w2"], kp["b2"], kp["sg"],
               kp["w3"], kp["b3"], kp["wf1"], kp["bf1"], kp["wf2"], kp["bf2"])

    flops = 2 * B * (256 * 48 * 32 + 64 * 512 * 32 + 128 * 64 * 32
                     + 4 * 4 * 512 * 32 + 512 * 256 + 256 * 128)
    bytes_accessed = int((p1.size + sum(int(w.size) for w in weights) + B * 128) * 4)

    out = pl.pallas_call(
        _encoder_kernel,
        out_shape=jax.ShapeDtypeStruct((B, 1, 128), jnp.float32),
        grid_spec=pltpu.PrefetchScalarGridSpec(
            num_scalar_prefetch=0,
            grid=(B,),
            in_specs=[pl.BlockSpec((256, 48), lambda b: (b, 0))]
                     + [resident_spec(w) for w in weights],
            out_specs=pl.BlockSpec((1, 1, 128), lambda b: (b, 0, 0)),
            scratch_shapes=(
                [pltpu.VMEM((9, 9, 32), jnp.float32) for _ in range(4)]
                + [pltpu.VMEM((5, 9, 32), jnp.float32) for _ in range(4)]),
        ),
        compiler_params=pltpu.CompilerParams(
            dimension_semantics=("parallel",)),
        cost_estimate=pl.CostEstimate(flops=flops, transcendentals=0,
                                      bytes_accessed=bytes_accessed),
    )(p1, *weights)
    return out.reshape(B, 128)


# ---------------------------------------------------------------------------
# Parameter init (deterministic): kaiming_normal_(nonlinearity='relu'), bias=0
# ---------------------------------------------------------------------------
def kaiming_normal(key, shape, fan_in):
    std = math.sqrt(2.0) / math.sqrt(fan_in)
    return jax.random.normal(key, shape, dtype=jnp.float32) * std


def init_params(key):
    ks = jax.random.split(key, 5)
    return {
        "conv1_w": kaiming_normal(ks[0], (32, 3, 4, 4), 3 * 4 * 4),
        "conv1_b": jnp.zeros((32,), jnp.float32),
        "conv2_w": kaiming_normal(ks[1], (32, 32, 4, 4), 32 * 4 * 4),
        "conv2_b": jnp.zeros((32,), jnp.float32),
        "conv3_w": kaiming_normal(ks[2], (32, 32, 4, 4), 32 * 4 * 4),
        "conv3_b": jnp.zeros((32,), jnp.float32),
        "fc1_w": kaiming_normal(ks[3], (256, 4 * 4 * 32), 4 * 4 * 32),
        "fc1_b": jnp.zeros((256,), jnp.float32),
        "fc2_w": kaiming_normal(ks[4], (128, 256), 256),
        "fc2_b": jnp.zeros((128,), jnp.float32),
    }


# ---------------------------------------------------------------------------
# Pure-JAX reference (silent correctness check)
# ---------------------------------------------------------------------------
def _ref_forward(params, x):
    def conv(x, w, b):
        y = lax.conv_general_dilated(
            x, w, window_strides=(2, 2), padding=((1, 1), (1, 1)),
            dimension_numbers=("NCHW", "OIHW", "NCHW"))
        return jnp.maximum(y + b[None, :, None, None], 0.0)

    h = conv(x, params["conv1_w"], params["conv1_b"])
    h = conv(h, params["conv2_w"], params["conv2_b"])
    h = conv(h, params["conv3_w"], params["conv3_b"])
    flat = h.reshape(h.shape[0], -1)
    fc1 = jnp.maximum(flat @ params["fc1_w"].T + params["fc1_b"], 0.0)
    fc2 = jnp.maximum(fc1 @ params["fc2_w"].T + params["fc2_b"], 0.0)
    return fc2


if __name__ == "__main__":
    key = jax.random.PRNGKey(0)
    pkey, xkey = jax.random.split(key)
    params = init_params(pkey)
    kparams = prepare_params(params)

    # fc1 expects 4*4*32 => conv3 output 4x4 => input spatial 32x32, 3 channels.
    x = jax.random.normal(xkey, (2, 3, 32, 32), dtype=jnp.float32)

    fwd = jax.jit(encoder_conv_forward)
    z = jax.block_until_ready(fwd(kparams, x))

    z_ref = _ref_forward(params, x)
    assert z.shape == (2, 128)
    assert jnp.allclose(z, z_ref, atol=1e-3, rtol=1e-3), float(
        jnp.max(jnp.abs(z - z_ref)))

    print("KERNEL_OK")
</pallas_src>

<mosaic_0001>
module attributes {stable_mosaic.version = 11 : i64} {
  func.func @_encoder_kernel(%arg0: i32, %arg1: memref<256x48xf32, #tpu.memory_space<vmem>>, %arg2: memref<48x32xf32, #tpu.memory_space<vmem>>, %arg3: memref<1x32xf32, #tpu.memory_space<vmem>>, %arg4: memref<512x32xf32, #tpu.memory_space<vmem>>, %arg5: memref<1x32xf32, #tpu.memory_space<vmem>>, %arg6: memref<128x64xf32, #tpu.memory_space<vmem>>, %arg7: memref<512x32xf32, #tpu.memory_space<vmem>>, %arg8: memref<1x32xf32, #tpu.memory_space<vmem>>, %arg9: memref<512x256xf32, #tpu.memory_space<vmem>>, %arg10: memref<1x256xf32, #tpu.memory_space<vmem>>, %arg11: memref<256x128xf32, #tpu.memory_space<vmem>>, %arg12: memref<1x128xf32, #tpu.memory_space<vmem>>, %arg13: memref<1x1x128xf32, #tpu.memory_space<vmem>>, %arg14: memref<9x9x32xf32, #tpu.memory_space<vmem>>, %arg15: memref<9x9x32xf32, #tpu.memory_space<vmem>>, %arg16: memref<9x9x32xf32, #tpu.memory_space<vmem>>, %arg17: memref<9x9x32xf32, #tpu.memory_space<vmem>>, %arg18: memref<5x9x32xf32, #tpu.memory_space<vmem>>, %arg19: memref<5x9x32xf32, #tpu.memory_space<vmem>>, %arg20: memref<5x9x32xf32, #tpu.memory_space<vmem>>, %arg21: memref<5x9x32xf32, #tpu.memory_space<vmem>>) attributes {dimension_semantics = [#tpu.dimension_semantics<parallel>], iteration_bounds = array<i64: 2>, scalar_prefetch = 0 : i64, scratch_operands = 8 : i64, tpu.core_type = #tpu.core_type<tc>, window_params = [{transform_indices = @transform_0, window_bounds = array<i64: 256, 48>}, {pipeline_mode = #tpu.pipeline_mode<synchronous>, transform_indices = @transform_1, window_bounds = array<i64: 48, 32>}, {pipeline_mode = #tpu.pipeline_mode<synchronous>, transform_indices = @transform_2, window_bounds = array<i64: 1, 32>}, {pipeline_mode = #tpu.pipeline_mode<synchronous>, transform_indices = @transform_3, window_bounds = array<i64: 512, 32>}, {pipeline_mode = #tpu.pipeline_mode<synchronous>, transform_indices = @transform_4, window_bounds = array<i64: 1, 32>}, {pipeline_mode = #tpu.pipeline_mode<synchronous>, transform_indices = @transform_5, window_bounds = array<i64: 128, 64>}, {pipeline_mode = #tpu.pipeline_mode<synchronous>, transform_indices = @transform_6, window_bounds = array<i64: 512, 32>}, {pipeline_mode = #tpu.pipeline_mode<synchronous>, transform_indices = @transform_7, window_bounds = array<i64: 1, 32>}, {pipeline_mode = #tpu.pipeline_mode<synchronous>, transform_indices = @transform_8, window_bounds = array<i64: 512, 256>}, {pipeline_mode = #tpu.pipeline_mode<synchronous>, transform_indices = @transform_9, window_bounds = array<i64: 1, 256>}, {pipeline_mode = #tpu.pipeline_mode<synchronous>, transform_indices = @transform_10, window_bounds = array<i64: 256, 128>}, {pipeline_mode = #tpu.pipeline_mode<synchronous>, transform_indices = @transform_11, window_bounds = array<i64: 1, 128>}, {transform_indices = @transform_12, window_bounds = array<i64: 1, 1, 128>}]} {
    %cst = arith.constant 0.000000e+00 : f32
    %0 = vector.broadcast %cst : f32 to vector<9x9x32xf32>
    %c0 = arith.constant 0 : index
    %c0_0 = arith.constant 0 : index
    %c0_1 = arith.constant 0 : index
    %1 = vector.load %arg14[%c0, %c0_0, %c0_1] : memref<9x9x32xf32, #tpu.memory_space<vmem>>, vector<9x9x32xf32>
    tpu.vector_store %arg14[%c0, %c0_0, %c0_1], %0 {strides = array<i32>} : memref<9x9x32xf32, #tpu.memory_space<vmem>>, vector<9x9x32xf32>,
    %cst_2 = arith.constant 0.000000e+00 : f32
    %2 = vector.broadcast %cst_2 : f32 to vector<9x9x32xf32>
    %c0_3 = arith.constant 0 : index
    %c0_4 = arith.constant 0 : index
    %c0_5 = arith.constant 0 : index
    %3 = vector.load %arg15[%c0_3, %c0_4, %c0_5] : memref<9x9x32xf32, #tpu.memory_space<vmem>>, vector<9x9x32xf32>
    tpu.vector_store %arg15[%c0_3, %c0_4, %c0_5], %2 {strides = array<i32>} : memref<9x9x32xf32, #tpu.memory_space<vmem>>, vector<9x9x32xf32>,
    %cst_6 = arith.constant 0.000000e+00 : f32
    %4 = vector.broadcast %cst_6 : f32 to vector<9x9x32xf32>
    %c0_7 = arith.constant 0 : index
    %c0_8 = arith.constant 0 : index
    %c0_9 = arith.constant 0 : index
    %5 = vector.load %arg16[%c0_7, %c0_8, %c0_9] : memref<9x9x32xf32, #tpu.memory_space<vmem>>, vector<9x9x32xf32>
    tpu.vector_store %arg16[%c0_7, %c0_8, %c0_9], %4 {strides = array<i32>} : memref<9x9x32xf32, #tpu.memory_space<vmem>>, vector<9x9x32xf32>,
    %cst_10 = arith.constant 0.000000e+00 : f32
    %6 = vector.broadcast %cst_10 : f32 to vector<9x9x32xf32>
    %c0_11 = arith.constant 0 : index
    %c0_12 = arith.constant 0 : index
    %c0_13 = arith.constant 0 : index
    %7 = vector.load %arg17[%c0_11, %c0_12, %c0_13] : memref<9x9x32xf32, #tpu.memory_space<vmem>>, vector<9x9x32xf32>
    tpu.vector_store %arg17[%c0_11, %c0_12, %c0_13], %6 {strides = array<i32>} : memref<9x9x32xf32, #tpu.memory_space<vmem>>, vector<9x9x32xf32>,
    %cst_14 = arith.constant 0.000000e+00 : f32
    %8 = vector.broadcast %cst_14 : f32 to vector<5x9x32xf32>
    %c0_15 = arith.constant 0 : index
    %c0_16 = arith.constant 0 : index
    %c0_17 = arith.constant 0 : index
    %9 = vector.load %arg18[%c0_15, %c0_16, %c0_17] : memref<5x9x32xf32, #tpu.memory_space<vmem>>, vector<5x9x32xf32>
    tpu.vector_store %arg18[%c0_15, %c0_16, %c0_17], %8 {strides = array<i32>} : memref<5x9x32xf32, #tpu.memory_space<vmem>>, vector<5x9x32xf32>,
    %cst_18 = arith.constant 0.000000e+00 : f32
    %10 = vector.broadcast %cst_18 : f32 to vector<5x9x32xf32>
    %c0_19 = arith.constant 0 : index
    %c0_20 = arith.constant 0 : index
    %c0_21 = arith.constant 0 : index
    %11 = vector.load %arg19[%c0_19, %c0_20, %c0_21] : memref<5x9x32xf32, #tpu.memory_space<vmem>>, vector<5x9x32xf32>
    tpu.vector_store %arg19[%c0_19, %c0_20, %c0_21], %10 {strides = array<i32>} : memref<5x9x32xf32, #tpu.memory_space<vmem>>, vector<5x9x32xf32>,
    %cst_22 = arith.constant 0.000000e+00 : f32
    %12 = vector.broadcast %cst_22 : f32 to vector<5x9x32xf32>
    %c0_23 = arith.constant 0 : index
    %c0_24 = arith.constant 0 : index
    %c0_25 = arith.constant 0 : index
    %13 = vector.load %arg20[%c0_23, %c0_24, %c0_25] : memref<5x9x32xf32, #tpu.memory_space<vmem>>, vector<5x9x32xf32>
    tpu.vector_store %arg20[%c0_23, %c0_24, %c0_25], %12 {strides = array<i32>} : memref<5x9x32xf32, #tpu.memory_space<vmem>>, vector<5x9x32xf32>,
    %cst_26 = arith.constant 0.000000e+00 : f32
    %14 = vector.broadcast %cst_26 : f32 to vector<5x9x32xf32>
    %c0_27 = arith.constant 0 : index
    %c0_28 = arith.constant 0 : index
    %c0_29 = arith.constant 0 : index
    %15 = vector.load %arg21[%c0_27, %c0_28, %c0_29] : memref<5x9x32xf32, #tpu.memory_space<vmem>>, vector<5x9x32xf32>
    tpu.vector_store %arg21[%c0_27, %c0_28, %c0_29], %14 {strides = array<i32>} : memref<5x9x32xf32, #tpu.memory_space<vmem>>, vector<5x9x32xf32>,
    %c0_30 = arith.constant 0 : index
    %c0_31 = arith.constant 0 : index
    %16 = vector.load %arg1[%c0_30, %c0_31] : memref<256x48xf32, #tpu.memory_space<vmem>>, vector<256x48xf32>
    %c0_32 = arith.constant 0 : index
    %c0_33 = arith.constant 0 : index
    %17 = vector.load %arg2[%c0_32, %c0_33] : memref<48x32xf32, #tpu.memory_space<vmem>>, vector<48x32xf32>
    %cst_34 = arith.constant dense<0.000000e+00> : vector<256x32xf32>
    %18 = tpu.matmul %16, %17, %cst_34 {dimension_numbers = #tpu.dot_dimension_numbers<[1], [0], [0], [1], [0, 0, 1, 1], [], []>} : vector<256x48xf32>, vector<48x32xf32>, vector<256x32xf32> -> vector<256x32xf32>
    %c0_35 = arith.constant 0 : index
    %c0_36 = arith.constant 0 : index
    %19 = vector.load %arg3[%c0_35, %c0_36] : memref<1x32xf32, #tpu.memory_space<vmem>>, vector<1x32xf32>
    %20 = vector.broadcast %19 : vector<1x32xf32> to vector<256x32xf32>
    %21 = arith.addf %18, %20 : vector<256x32xf32>
    %cst_37 = arith.constant 0.000000e+00 : f32
    %22 = vector.broadcast %cst_37 : f32 to vector<256x32xf32>
    %23 = arith.maximumf %21, %22 : vector<256x32xf32>
    %24 = vector.extract_strided_slice %23 {offsets = [0, 0], sizes = [64, 32], strides = [1, 1]} : vector<256x32xf32> to vector<64x32xf32>
    %25 = vector.shape_cast %24 : vector<64x32xf32> to vector<8x8x32xf32>
    %c1 = arith.constant 1 : index
    %c1_38 = arith.constant 1 : index
    %c0_39 = arith.constant 0 : index
    %26 = vector.load %arg14[%c1, %c1_38, %c0_39] : memref<9x9x32xf32, #tpu.memory_space<vmem>>, vector<8x8x32xf32>
    tpu.vector_store %arg14[%c1, %c1_38, %c0_39], %25 {strides = array<i32>} : memref<9x9x32xf32, #tpu.memory_space<vmem>>, vector<8x8x32xf32>,
    %27 = vector.extract_strided_slice %23 {offsets = [64, 0], sizes = [64, 32], strides = [1, 1]} : vector<256x32xf32> to vector<64x32xf32>
    %28 = vector.shape_cast %27 : vector<64x32xf32> to vector<8x8x32xf32>
    %c1_40 = arith.constant 1 : index
    %c0_41 = arith.constant 0 : index
    %c0_42 = arith.constant 0 : index
    %29 = vector.load %arg15[%c1_40, %c0_41, %c0_42] : memref<9x9x32xf32, #tpu.memory_space<vmem>>, vector<8x8x32xf32>
    tpu.vector_store %arg15[%c1_40, %c0_41, %c0_42], %28 {strides = array<i32>} : memref<9x9x32xf32, #tpu.memory_space<vmem>>, vector<8x8x32xf32>,
    %30 = vector.extract_strided_slice %23 {offsets = [128, 0], sizes = [64, 32], strides = [1, 1]} : vector<256x32xf32> to vector<64x32xf32>
    %31 = vector.shape_cast %30 : vector<64x32xf32> to vector<8x8x32xf32>
    %c0_43 = arith.constant 0 : index
    %c1_44 = arith.constant 1 : index
    %c0_45 = arith.constant 0 : index
    %32 = vector.load %arg16[%c0_43, %c1_44, %c0_45] : memref<9x9x32xf32, #tpu.memory_space<vmem>>, vector<8x8x32xf32>
    tpu.vector_store %arg16[%c0_43, %c1_44, %c0_45], %31 {strides = array<i32>} : memref<9x9x32xf32, #tpu.memory_space<vmem>>, vector<8x8x32xf32>,
    %33 = vector.extract_strided_slice %23 {offsets = [192, 0], sizes = [64, 32], strides = [1, 1]} : vector<256x32xf32> to vector<64x32xf32>
    %34 = vector.shape_cast %33 : vector<64x32xf32> to vector<8x8x32xf32>
    %c0_46 = arith.constant 0 : index
    %c0_47 = arith.constant 0 : index
    %c0_48 = arith.constant 0 : index
    %35 = vector.load %arg17[%c0_46, %c0_47, %c0_48] : memref<9x9x32xf32, #tpu.memory_space<vmem>>, vector<8x8x32xf32>
    tpu.vector_store %arg17[%c0_46, %c0_47, %c0_48], %34 {strides = array<i32>} : memref<9x9x32xf32, #tpu.memory_space<vmem>>, vector<8x8x32xf32>,
    %c0_49 = arith.constant 0 : index
    %c0_50 = arith.constant 0 : index
    %c0_51 = arith.constant 0 : index
    %36 = vector.load %arg14[%c0_49, %c0_50, %c0_51] : memref<9x9x32xf32, #tpu.memory_space<vmem>>, vector<8x8x32xf32>
    %37 = vector.shape_cast %36 : vector<8x8x32xf32> to vector<64x32xf32>
    %c0_52 = arith.constant 0 : index
    %c0_53 = arith.constant 0 : index
    %c0_54 = arith.constant 0 : index
    %38 = vector.load %arg15[%c0_52, %c0_53, %c0_54] : memref<9x9x32xf32, #tpu.memory_space<vmem>>, vector<8x8x32xf32>
    %39 = vector.shape_cast %38 : vector<8x8x32xf32> to vector<64x32xf32>
    %c0_55 = arith.constant 0 : index
    %c1_56 = arith.constant 1 : index
    %c0_57 = arith.constant 0 : index
    %40 = vector.load %arg14[%c0_55, %c1_56, %c0_57] : memref<9x9x32xf32, #tpu.memory_space<vmem>>, vector<8x8x32xf32>
    %41 = vector.shape_cast %40 : vector<8x8x32xf32> to vector<64x32xf32>
    %c0_58 = arith.constant 0 : index
    %c1_59 = arith.constant 1 : index
    %c0_60 = arith.constant 0 : index
    %42 = vector.load %arg15[%c0_58, %c1_59, %c0_60] : memref<9x9x32xf32, #tpu.memory_space<vmem>>, vector<8x8x32xf32>
    %43 = vector.shape_cast %42 : vector<8x8x32xf32> to vector<64x32xf32>
    %c0_61 = arith.constant 0 : index
    %c0_62 = arith.constant 0 : index
    %c0_63 = arith.constant 0 : index
    %44 = vector.load %arg16[%c0_61, %c0_62, %c0_63] : memref<9x9x32xf32, #tpu.memory_space<vmem>>, vector<8x8x32xf32>
    %45 = vector.shape_cast %44 : vector<8x8x32xf32> to vector<64x32xf32>
    %c0_64 = arith.constant 0 : index
    %c0_65 = arith.constant 0 : index
    %c0_66 = arith.constant 0 : index
    %46 = vector.load %arg17[%c0_64, %c0_65, %c0_66] : memref<9x9x32xf32, #tpu.memory_space<vmem>>, vector<8x8x32xf32>
    %47 = vector.shape_cast %46 : vector<8x8x32xf32> to vector<64x32xf32>
    %c0_67 = arith.constant 0 : index
    %c1_68 = arith.constant 1 : index
    %c0_69 = arith.constant 0 : index
    %48 = vector.load %arg16[%c0_67, %c1_68, %c0_69] : memref<9x9x32xf32, #tpu.memory_space<vmem>>, vector<8x8x32xf32>
    %49 = vector.shape_cast %48 : vector<8x8x32xf32> to vector<64x32xf32>
    %c0_70 = arith.constant 0 : index
    %c1_71 = arith.constant 1 : index
    %c0_72 = arith.constant 0 : index
    %50 = vector.load %arg17[%c0_70, %c1_71, %c0_72] : memref<9x9x32xf32, #tpu.memory_space<vmem>>, vector<8x8x32xf32>
    %51 = vector.shape_cast %50 : vector<8x8x32xf32> to vector<64x32xf32>
    %c1_73 = arith.constant 1 : index
    %c0_74 = arith.constant 0 : index
    %c0_75 = arith.constant 0 : index
    %52 = vector.load %arg14[%c1_73, %c0_74, %c0_75] : memref<9x9x32xf32, #tpu.memory_space<vmem>>, vector<8x8x32xf32>
    %53 = vector.shape_cast %52 : vector<8x8x32xf32> to vector<64x32xf32>
    %c1_76 = arith.constant 1 : index
    %c0_77 = arith.constant 0 : index
    %c0_78 = arith.constant 0 : index
    %54 = vector.load %arg15[%c1_76, %c0_77, %c0_78] : memref<9x9x32xf32, #tpu.memory_space<vmem>>, vector<8x8x32xf32>
    %55 = vector.shape_cast %54 : vector<8x8x32xf32> to vector<64x32xf32>
    %c1_79 = arith.constant 1 : index
    %c1_80 = arith.constant 1 : index
    %c0_81 = arith.constant 0 : index
    %56 = vector.load %arg14[%c1_79, %c1_80, %c0_81] : memref<9x9x32xf32, #tpu.memory_space<vmem>>, vector<8x8x32xf32>
    %57 = vector.shape_cast %56 : vector<8x8x32xf32> to vector<64x32xf32>
    %c1_82 = arith.constant 1 : index
    %c1_83 = arith.constant 1 : index
    %c0_84 = arith.constant 0 : index
    %58 = vector.load %arg15[%c1_82, %c1_83, %c0_84] : memref<9x9x32xf32, #tpu.memory_space<vmem>>, vector<8x8x32xf32>
    %59 = vector.shape_cast %58 : vector<8x8x32xf32> to vector<64x32xf32>
    %c1_85 = arith.constant 1 : index
    %c0_86 = arith.constant 0 : index
    %c0_87 = arith.constant 0 : index
    %60 = vector.load %arg16[%c1_85, %c0_86, %c0_87] : memref<9x9x32xf32, #tpu.memory_space<vmem>>, vector<8x8x32xf32>
    %61 = vector.shape_cast %60 : vector<8x8x32xf32> to vector<64x32xf32>
    %c1_88 = arith.constant 1 : index
    %c0_89 = arith.constant 0 : index
    %c0_90 = arith.constant 0 : index
    %62 = vector.load %arg17[%c1_88, %c0_89, %c0_90] : memref<9x9x32xf32, #tpu.memory_space<vmem>>, vector<8x8x32xf32>
    %63 = vector.shape_cast %62 : vector<8x8x32xf32> to vector<64x32xf32>
    %c1_91 = arith.constant 1 : index
    %c1_92 = arith.constant 1 : index
    %c0_93 = arith.constant 0 : index
    %64 = vector.load %arg16[%c1_91, %c1_92, %c0_93] : memref<9x9x32xf32, #tpu.memory_space<vmem>>, vector<8x8x32xf32>
    %65 = vector.shape_cast %64 : vector<8x8x32xf32> to vector<64x32xf32>
    %c1_94 = arith.constant 1 : index
    %c1_95 = arith.constant 1 : index
    %c0_96 = arith.constant 0 : index
    %66 = vector.load %arg17[%c1_94, %c1_95, %c0_96] : memref<9x9x32xf32, #tpu.memory_space<vmem>>, vector<8x8x32xf32>
    %67 = vector.shape_cast %66 : vector<8x8x32xf32> to vector<64x32xf32>
    %68 = tpu.concatenate %37, %39, %41, %43, %45, %47, %49, %51, %53, %55, %57, %59, %61, %63, %65, %67 in 1 : vector<64x32xf32>, vector<64x32xf32>, vector<64x32xf32>, vector<64x32xf32>, vector<64x32xf32>, vector<64x32xf32>, vector<64x32xf32>, vector<64x32xf32>, vector<64x32xf32>, vector<64x32xf32>, vector<64x32xf32>, vector<64x32xf32>, vector<64x32xf32>, vector<64x32xf32>, vector<64x32xf32>, vector<64x32xf32> -> vector<64x512xf32>
    %c0_97 = arith.constant 0 : index
    %c0_98 = arith.constant 0 : index
    %69 = vector.load %arg4[%c0_97, %c0_98] : memref<512x32xf32, #tpu.memory_space<vmem>>, vector<512x32xf32>
    %cst_99 = arith.constant dense<0.000000e+00> : vector<64x32xf32>
    %70 = tpu.matmul %68, %69, %cst_99 {dimension_numbers = #tpu.dot_dimension_numbers<[1], [0], [0], [1], [0, 0, 1, 1], [], []>} : vector<64x512xf32>, vector<512x32xf32>, vector<64x32xf32> -> vector<64x32xf32>
    %c0_100 = arith.constant 0 : index
    %c0_101 = arith.constant 0 : index
    %71 = vector.load %arg5[%c0_100, %c0_101] : memref<1x32xf32, #tpu.memory_space<vmem>>, vector<1x32xf32>
    %72 = vector.broadcast %71 : vector<1x32xf32> to vector<64x32xf32>
    %73 = arith.addf %70, %72 : vector<64x32xf32>
    %cst_102 = arith.constant 0.000000e+00 : f32
    %74 = vector.broadcast %cst_102 : f32 to vector<64x32xf32>
    %75 = arith.maximumf %73, %74 : vector<64x32xf32>
    %c0_103 = arith.constant 0 : index
    %c0_104 = arith.constant 0 : index
    %76 = vector.load %arg6[%c0_103, %c0_104] : memref<128x64xf32, #tpu.memory_space<vmem>>, vector<128x64xf32>
    %cst_105 = arith.constant dense<0.000000e+00> : vector<128x32xf32>
    %77 = tpu.matmul %76, %75, %cst_105 {dimension_numbers = #tpu.dot_dimension_numbers<[1], [0], [0], [1], [0, 0, 1, 1], [], []>} : vector<128x64xf32>, vector<64x32xf32>, vector<128x32xf32> -> vector<128x32xf32>
    %78 = vector.extract_strided_slice %77 {offsets = [0, 0], sizes = [32, 32], strides = [1, 1]} : vector<128x32xf32> to vector<32x32xf32>
    %79 = vector.shape_cast %78 : vector<32x32xf32> to vector<4x8x32xf32>
    %c1_106 = arith.constant 1 : index
    %c1_107 = arith.constant 1 : index
    %c0_108 = arith.constant 0 : index
    %80 = vector.load %arg18[%c1_106, %c1_107, %c0_108] : memref<5x9x32xf32, #tpu.memory_space<vmem>>, vector<4x8x32xf32>
    tpu.vector_store %arg18[%c1_106, %c1_107, %c0_108], %79 {strides = array<i32>} : memref<5x9x32xf32, #tpu.memory_space<vmem>>, vector<4x8x32xf32>,
    %81 = vector.extract_strided_slice %77 {offsets = [32, 0], sizes = [32, 32], strides = [1, 1]} : vector<128x32xf32> to vector<32x32xf32>
    %82 = vector.shape_cast %81 : vector<32x32xf32> to vector<4x8x32xf32>
    %c1_109 = arith.constant 1 : index
    %c0_110 = arith.constant 0 : index
    %c0_111 = arith.constant 0 : index
    %83 = vector.load %arg19[%c1_109, %c0_110, %c0_111] : memref<5x9x32xf32, #tpu.memory_space<vmem>>, vector<4x8x32xf32>
    tpu.vector_store %arg19[%c1_109, %c0_110, %c0_111], %82 {strides = array<i32>} : memref<5x9x32xf32, #tpu.memory_space<vmem>>, vector<4x8x32xf32>,
    %84 = vector.extract_strided_slice %77 {offsets = [64, 0], sizes = [32, 32], strides = [1, 1]} : vector<128x32xf32> to vector<32x32xf32>
    %85 = vector.shape_cast %84 : vector<32x32xf32> to vector<4x8x32xf32>
    %c0_112 = arith.constant 0 : index
    %c1_113 = arith.constant 1 : index
    %c0_114 = arith.constant 0 : index
    %86 = vector.load %arg20[%c0_112, %c1_113, %c0_114] : memref<5x9x32xf32, #tpu.memory_space<vmem>>, vector<4x8x32xf32>
    tpu.vector_store %arg20[%c0_112, %c1_113, %c0_114], %85 {strides = array<i32>} : memref<5x9x32xf32, #tpu.memory_space<vmem>>, vector<4x8x32xf32>,
    %87 = vector.extract_strided_slice %77 {offsets = [96, 0], sizes = [32, 32], strides = [1, 1]} : vector<128x32xf32> to vector<32x32xf32>
    %88 = vector.shape_cast %87 : vector<32x32xf32> to vector<4x8x32xf32>
    %c0_115 = arith.constant 0 : index
    %c0_116 = arith.constant 0 : index
    %c0_117 = arith.constant 0 : index
    %89 = vector.load %arg21[%c0_115, %c0_116, %c0_117] : memref<5x9x32xf32, #tpu.memory_space<vmem>>, vector<4x8x32xf32>
    tpu.vector_store %arg21[%c0_115, %c0_116, %c0_117], %88 {strides = array<i32>} : memref<5x9x32xf32, #tpu.memory_space<vmem>>, vector<4x8x32xf32>,
    %c0_118 = arith.constant 0 : index
    %c0_119 = arith.constant 0 : index
    %c0_120 = arith.constant 0 : index
    %90 = vector.load %arg18[%c0_118, %c0_119, %c0_120] : memref<5x9x32xf32, #tpu.memory_space<vmem>>, vector<1x4x32xf32>
    %91 = vector.shape_cast %90 : vector<1x4x32xf32> to vector<4x32xf32>
    %c0_121 = arith.constant 0 : index
    %c0_122 = arith.constant 0 : index
    %c0_123 = arith.constant 0 : index
    %92 = vector.load %arg19[%c0_121, %c0_122, %c0_123] : memref<5x9x32xf32, #tpu.memory_space<vmem>>, vector<1x4x32xf32>
    %93 = vector.shape_cast %92 : vector<1x4x32xf32> to vector<4x32xf32>
    %c0_124 = arith.constant 0 : index
    %c1_125 = arith.constant 1 : index
    %c0_126 = arith.constant 0 : index
    %94 = vector.load %arg18[%c0_124, %c1_125, %c0_126] : memref<5x9x32xf32, #tpu.memory_space<vmem>>, vector<1x4x32xf32>
    %95 = vector.shape_cast %94 : vector<1x4x32xf32> to vector<4x32xf32>
    %c0_127 = arith.constant 0 : index
    %c1_128 = arith.constant 1 : index
    %c0_129 = arith.constant 0 : index
    %96 = vector.load %arg19[%c0_127, %c1_128, %c0_129] : memref<5x9x32xf32, #tpu.memory_space<vmem>>, vector<1x4x32xf32>
    %97 = vector.shape_cast %96 : vector<1x4x32xf32> to vector<4x32xf32>
    %c0_130 = arith.constant 0 : index
    %c0_131 = arith.constant 0 : index
    %c0_132 = arith.constant 0 : index
    %98 = vector.load %arg20[%c0_130, %c0_131, %c0_132] : memref<5x9x32xf32, #tpu.memory_space<vmem>>, vector<1x4x32xf32>
    %99 = vector.shape_cast %98 : vector<1x4x32xf32> to vector<4x32xf32>
    %c0_133 = arith.constant 0 : index
    %c0_134 = arith.constant 0 : index
    %c0_135 = arith.constant 0 : index
    %100 = vector.load %arg21[%c0_133, %c0_134, %c0_135] : memref<5x9x32xf32, #tpu.memory_space<vmem>>, vector<1x4x32xf32>
    %101 = vector.shape_cast %100 : vector<1x4x32xf32> to vector<4x32xf32>
    %c0_136 = arith.constant 0 : index
    %c1_137 = arith.constant 1 : index
    %c0_138 = arith.constant 0 : index
    %102 = vector.load %arg20[%c0_136, %c1_137, %c0_138] : memref<5x9x32xf32, #tpu.memory_space<vmem>>, vector<1x4x32xf32>
    %103 = vector.shape_cast %102 : vector<1x4x32xf32> to vector<4x32xf32>
    %c0_139 = arith.constant 0 : index
    %c1_140 = arith.constant 1 : index
    %c0_141 = arith.constant 0 : index
    %104 = vector.load %arg21[%c0_139, %c1_140, %c0_141] : memref<5x9x32xf32, #tpu.memory_space<vmem>>, vector<1x4x32xf32>
    %105 = vector.shape_cast %104 : vector<1x4x32xf32> to vector<4x32xf32>
    %c1_142 = arith.constant 1 : index
    %c0_143 = arith.constant 0 : index
    %c0_144 = arith.constant 0 : index
    %106 = vector.load %arg18[%c1_142, %c0_143, %c0_144] : memref<5x9x32xf32, #tpu.memory_space<vmem>>, vector<1x4x32xf32>
    %107 = vector.shape_cast %106 : vector<1x4x32xf32> to vector<4x32xf32>
    %c1_145 = arith.constant 1 : index
    %c0_146 = arith.constant 0 : index
    %c0_147 = arith.constant 0 : index
    %108 = vector.load %arg19[%c1_145, %c0_146, %c0_147] : memref<5x9x32xf32, #tpu.memory_space<vmem>>, vector<1x4x32xf32>
    %109 = vector.shape_cast %108 : vector<1x4x32xf32> to vector<4x32xf32>
    %c1_148 = arith.constant 1 : index
    %c1_149 = arith.constant 1 : index
    %c0_150 = arith.constant 0 : index
    %110 = vector.load %arg18[%c1_148, %c1_149, %c0_150] : memref<5x9x32xf32, #tpu.memory_space<vmem>>, vector<1x4x32xf32>
    %111 = vector.shape_cast %110 : vector<1x4x32xf32> to vector<4x32xf32>
    %c1_151 = arith.constant 1 : index
    %c1_152 = arith.constant 1 : index
    %c0_153 = arith.constant 0 : index
    %112 = vector.load %arg19[%c1_151, %c1_152, %c0_153] : memref<5x9x32xf32, #tpu.memory_space<vmem>>, vector<1x4x32xf32>
    %113 = vector.shape_cast %112 : vector<1x4x32xf32> to vector<4x32xf32>
    %c1_154 = arith.constant 1 : index
    %c0_155 = arith.constant 0 : index
    %c0_156 = arith.constant 0 : index
    %114 = vector.load %arg20[%c1_154, %c0_155, %c0_156] : memref<5x9x32xf32, #tpu.memory_space<vmem>>, vector<1x4x32xf32>
    %115 = vector.shape_cast %114 : vector<1x4x32xf32> to vector<4x32xf32>
    %c1_157 = arith.constant 1 : index
    %c0_158 = arith.constant 0 : index
    %c0_159 = arith.constant 0 : index
    %116 = vector.load %arg21[%c1_157, %c0_158, %c0_159] : memref<5x9x32xf32, #tpu.memory_space<vmem>>, vector<1x4x32xf32>
    %117 = vector.shape_cast %116 : vector<1x4x32xf32> to vector<4x32xf32>
    %c1_160 = arith.constant 1 : index
    %c1_161 = arith.constant 1 : index
    %c0_162 = arith.constant 0 : index
    %118 = vector.load %arg20[%c1_160, %c1_161, %c0_162] : memref<5x9x32xf32, #tpu.memory_space<vmem>>, vector<1x4x32xf32>
    %119 = vector.shape_cast %118 : vector<1x4x32xf32> to vector<4x32xf32>
    %c1_163 = arith.constant 1 : index
    %c1_164 = arith.constant 1 : index
    %c0_165 = arith.constant 0 : index
    %120 = vector.load %arg21[%c1_163, %c1_164, %c0_165] : memref<5x9x32xf32, #tpu.memory_space<vmem>>, vector<1x4x32xf32>
    %121 = vector.shape_cast %120 : vector<1x4x32xf32> to vector<4x32xf32>
    %122 = tpu.concatenate %91, %93, %95, %97, %99, %101, %103, %105, %107, %109, %111, %113, %115, %117, %119, %121 in 1 : vector<4x32xf32>, vector<4x32xf32>, vector<4x32xf32>, vector<4x32xf32>, vector<4x32xf32>, vector<4x32xf32>, vector<4x32xf32>, vector<4x32xf32>, vector<4x32xf32>, vector<4x32xf32>, vector<4x32xf32>, vector<4x32xf32>, vector<4x32xf32>, vector<4x32xf32>, vector<4x32xf32>, vector<4x32xf32> -> vector<4x512xf32>
    %c0_166 = arith.constant 0 : index
    %c0_167 = arith.constant 0 : index
    %123 = vector.load %arg7[%c0_166, %c0_167] : memref<512x32xf32, #tpu.memory_space<vmem>>, vector<512x32xf32>
    %cst_168 = arith.constant dense<0.000000e+00> : vector<4x32xf32>
    %124 = tpu.matmul %122, %123, %cst_168 {dimension_numbers = #tpu.dot_dimension_numbers<[1], [0], [0], [1], [0, 0, 1, 1], [], []>} : vector<4x512xf32>, vector<512x32xf32>, vector<4x32xf32> -> vector<4x32xf32>
    %c0_169 = arith.constant 0 : index
    %c0_170 = arith.constant 0 : index
    %125 = vector.load %arg8[%c0_169, %c0_170] : memref<1x32xf32, #tpu.memory_space<vmem>>, vector<1x32xf32>
    %126 = vector.broadcast %125 : vector<1x32xf32> to vector<4x32xf32>
    %127 = arith.addf %124, %126 : vector<4x32xf32>
    %cst_171 = arith.constant 0.000000e+00 : f32
    %128 = vector.broadcast %cst_171 : f32 to vector<4x32xf32>
    %129 = arith.maximumf %127, %128 : vector<4x32xf32>
    %130 = vector.extract_strided_slice %129 {offsets = [0, 0], sizes = [1, 32], strides = [1, 1]} : vector<4x32xf32> to vector<1x32xf32>
    %131 = vector.extract_strided_slice %129 {offsets = [1, 0], sizes = [1, 32], strides = [1, 1]} : vector<4x32xf32> to vector<1x32xf32>
    %132 = vector.extract_strided_slice %129 {offsets = [2, 0], sizes = [1, 32], strides = [1, 1]} : vector<4x32xf32> to vector<1x32xf32>
    %133 = vector.extract_strided_slice %129 {offsets = [3, 0], sizes = [1, 32], strides = [1, 1]} : vector<4x32xf32> to vector<1x32xf32>
    %c1_172 = arith.constant 1 : index
    %c0_173 = arith.constant 0 : index
    %c0_174 = arith.constant 0 : index
    %134 = vector.load %arg18[%c1_172, %c0_173, %c0_174] : memref<5x9x32xf32, #tpu.memory_space<vmem>>, vector<1x4x32xf32>
    %135 = vector.shape_cast %134 : vector<1x4x32xf32> to vector<4x32xf32>
    %c1_175 = arith.constant 1 : index
    %c0_176 = arith.constant 0 : index
    %c0_177 = arith.constant 0 : index
    %136 = vector.load %arg19[%c1_175, %c0_176, %c0_177] : memref<5x9x32xf32, #tpu.memory_space<vmem>>, vector<1x4x32xf32>
    %137 = vector.shape_cast %136 : vector<1x4x32xf32> to vector<4x32xf32>
    %c1_178 = arith.constant 1 : index
    %c1_179 = arith.constant 1 : index
    %c0_180 = arith.constant 0 : index
    %138 = vector.load %arg18[%c1_178, %c1_179, %c0_180] : memref<5x9x32xf32, #tpu.memory_space<vmem>>, vector<1x4x32xf32>
    %139 = vector.shape_cast %138 : vector<1x4x32xf32> to vector<4x32xf32>
    %c1_181 = arith.constant 1 : index
    %c1_182 = arith.constant 1 : index
    %c0_183 = arith.constant 0 : index
    %140 = vector.load %arg19[%c1_181, %c1_182, %c0_183] : memref<5x9x32xf32, #tpu.memory_space<vmem>>, vector<1x4x32xf32>
    %141 = vector.shape_cast %140 : vector<1x4x32xf32> to vector<4x32xf32>
    %c1_184 = arith.constant 1 : index
    %c0_185 = arith.constant 0 : index
    %c0_186 = arith.constant 0 : index
    %142 = vector.load %arg20[%c1_184, %c0_185, %c0_186] : memref<5x9x32xf32, #tpu.memory_space<vmem>>, vector<1x4x32xf32>
    %143 = vector.shape_cast %142 : vector<1x4x32xf32> to vector<4x32xf32>
    %c1_187 = arith.constant 1 : index
    %c0_188 = arith.constant 0 : index
    %c0_189 = arith.constant 0 : index
    %144 = vector.load %arg21[%c1_187, %c0_188, %c0_189] : memref<5x9x32xf32, #tpu.memory_space<vmem>>, vector<1x4x32xf32>
    %145 = vector.shape_cast %144 : vector<1x4x32xf32> to vector<4x32xf32>
    %c1_190 = arith.constant 1 : index
    %c1_191 = arith.constant 1 : index
    %c0_192 = arith.constant 0 : index
    %146 = vector.load %arg20[%c1_190, %c1_191, %c0_192] : memref<5x9x32xf32, #tpu.memory_space<vmem>>, vector<1x4x32xf32>
    %147 = vector.shape_cast %146 : vector<1x4x32xf32> to vector<4x32xf32>
    %c1_193 = arith.constant 1 : index
    %c1_194 = arith.constant 1 : index
    %c0_195 = arith.constant 0 : index
    %148 = vector.load %arg21[%c1_193, %c1_194, %c0_195] : memref<5x9x32xf32, #tpu.memory_space<vmem>>, vector<1x4x32xf32>
    %149 = vector.shape_cast %148 : vector<1x4x32xf32> to vector<4x32xf32>
    %c2 = arith.constant 2 : index
    %c0_196 = arith.constant 0 : index
    %c0_197 = arith.constant 0 : index
    %150 = vector.load %arg18[%c2, %c0_196, %c0_197] : memref<5x9x32xf32, #tpu.memory_space<vmem>>, vector<1x4x32xf32>
    %151 = vector.shape_cast %150 : vector<1x4x32xf32> to vector<4x32xf32>
    %c2_198 = arith.constant 2 : index
    %c0_199 = arith.constant 0 : index
    %c0_200 = arith.constant 0 : index
    %152 = vector.load %arg19[%c2_198, %c0_199, %c0_200] : memref<5x9x32xf32, #tpu.memory_space<vmem>>, vector<1x4x32xf32>
    %153 = vector.shape_cast %152 : vector<1x4x32xf32> to vector<4x32xf32>
    %c2_201 = arith.constant 2 : index
    %c1_202 = arith.constant 1 : index
    %c0_203 = arith.constant 0 : index
    %154 = vector.load %arg18[%c2_201, %c1_202, %c0_203] : memref<5x9x32xf32, #tpu.memory_space<vmem>>, vector<1x4x32xf32>
    %155 = vector.shape_cast %154 : vector<1x4x32xf32> to vector<4x32xf32>
    %c2_204 = arith.constant 2 : index
    %c1_205 = arith.constant 1 : index
    %c0_206 = arith.constant 0 : index
    %156 = vector.load %arg19[%c2_204, %c1_205, %c0_206] : memref<5x9x32xf32, #tpu.memory_space<vmem>>, vector<1x4x32xf32>
    %157 = vector.shape_cast %156 : vector<1x4x32xf32> to vector<4x32xf32>
    %c2_207 = arith.constant 2 : index
    %c0_208 = arith.constant 0 : index
    %c0_209 = arith.constant 0 : index
    %158 = vector.load %arg20[%c2_207, %c0_208, %c0_209] : memref<5x9x32xf32, #tpu.memory_space<vmem>>, vector<1x4x32xf32>
    %159 = vector.shape_cast %158 : vector<1x4x32xf32> to vector<4x32xf32>
    %c2_210 = arith.constant 2 : index
    %c0_211 = arith.constant 0 : index
    %c0_212 = arith.constant 0 : index
    %160 = vector.load %arg21[%c2_210, %c0_211, %c0_212] : memref<5x9x32xf32, #tpu.memory_space<vmem>>, vector<1x4x32xf32>
    %161 = vector.shape_cast %160 : vector<1x4x32xf32> to vector<4x32xf32>
    %c2_213 = arith.constant 2 : index
    %c1_214 = arith.constant 1 : index
    %c0_215 = arith.constant 0 : index
    %162 = vector.load %arg20[%c2_213, %c1_214, %c0_215] : memref<5x9x32xf32, #tpu.memory_space<vmem>>, vector<1x4x32xf32>
    %163 = vector.shape_cast %162 : vector<1x4x32xf32> to vector<4x32xf32>
    %c2_216 = arith.constant 2 : index
    %c1_217 = arith.constant 1 : index
    %c0_218 = arith.constant 0 : index
    %164 = vector.load %arg21[%c2_216, %c1_217, %c0_218] : memref<5x9x32xf32, #tpu.memory_space<vmem>>, vector<1x4x32xf32>
    %165 = vector.shape_cast %164 : vector<1x4x32xf32> to vector<4x32xf32>
    %166 = tpu.concatenate %135, %137, %139, %141, %143, %145, %147, %149, %151, %153, %155, %157, %159, %161, %163, %165 in 1 : vector<4x32xf32>, vector<4x32xf32>, vector<4x32xf32>, vector<4x32xf32>, vector<4x32xf32>, vector<4x32xf32>, vector<4x32xf32>, vector<4x32xf32>, vector<4x32xf32>, vector<4x32xf32>, vector<4x32xf32>, vector<4x32xf32>, vector<4x32xf32>, vector<4x32xf32>, vector<4x32xf32>, vector<4x32xf32> -> vector<4x512xf32>
    %c0_219 = arith.constant 0 : index
    %c0_220 = arith.constant 0 : index
    %167 = vector.load %arg7[%c0_219, %c0_220] : memref<512x32xf32, #tpu.memory_space<vmem>>, vector<512x32xf32>
    %cst_221 = arith.constant dense<0.000000e+00> : vector<4x32xf32>
    %168 = tpu.matmul %166, %167, %cst_221 {dimension_numbers = #tpu.dot_dimension_numbers<[1], [0], [0], [1], [0, 0, 1, 1], [], []>} : vector<4x512xf32>, vector<512x32xf32>, vector<4x32xf32> -> vector<4x32xf32>
    %c0_222 = arith.constant 0 : index
    %c0_223 = arith.constant 0 : index
    %169 = vector.load %arg8[%c0_222, %c0_223] : memref<1x32xf32, #tpu.memory_space<vmem>>, vector<1x32xf32>
    %170 = vector.broadcast %169 : vector<1x32xf32> to vector<4x32xf32>
    %171 = arith.addf %168, %170 : vector<4x32xf32>
    %cst_224 = arith.constant 0.000000e+00 : f32
    %172 = vector.broadcast %cst_224 : f32 to vector<4x32xf32>
    %173 = arith.maximumf %171, %172 : vector<4x32xf32>
    %174 = vector.extract_strided_slice %173 {offsets = [0, 0], sizes = [1, 32], strides = [1, 1]} : vector<4x32xf32> to vector<1x32xf32>
    %175 = vector.extract_strided_slice %173 {offsets = [1, 0], sizes = [1, 32], strides = [1, 1]} : vector<4x32xf32> to vector<1x32xf32>
    %176 = vector.extract_strided_slice %173 {offsets = [2, 0], sizes = [1, 32], strides = [1, 1]} : vector<4x32xf32> to vector<1x32xf32>
    %177 = vector.extract_strided_slice %173 {offsets = [3, 0], sizes = [1, 32], strides = [1, 1]} : vector<4x32xf32> to vector<1x32xf32>
    %c2_225 = arith.constant 2 : index
    %c0_226 = arith.constant 0 : index
    %c0_227 = arith.constant 0 : index
    %178 = vector.load %arg18[%c2_225, %c0_226, %c0_227] : memref<5x9x32xf32, #tpu.memory_space<vmem>>, vector<1x4x32xf32>
    %179 = vector.shape_cast %178 : vector<1x4x32xf32> to vector<4x32xf32>
    %c2_228 = arith.constant 2 : index
    %c0_229 = arith.constant 0 : index
    %c0_230 = arith.constant 0 : index
    %180 = vector.load %arg19[%c2_228, %c0_229, %c0_230] : memref<5x9x32xf32, #tpu.memory_space<vmem>>, vector<1x4x32xf32>
    %181 = vector.shape_cast %180 : vector<1x4x32xf32> to vector<4x32xf32>
    %c2_231 = arith.constant 2 : index
    %c1_232 = arith.constant 1 : index
    %c0_233 = arith.constant 0 : index
    %182 = vector.load %arg18[%c2_231, %c1_232, %c0_233] : memref<5x9x32xf32, #tpu.memory_space<vmem>>, vector<1x4x32xf32>
    %183 = vector.shape_cast %182 : vector<1x4x32xf32> to vector<4x32xf32>
    %c2_234 = arith.constant 2 : index
    %c1_235 = arith.constant 1 : index
    %c0_236 = arith.constant 0 : index
    %184 = vector.load %arg19[%c2_234, %c1_235, %c0_236] : memref<5x9x32xf32, #tpu.memory_space<vmem>>, vector<1x4x32xf32>
    %185 = vector.shape_cast %184 : vector<1x4x32xf32> to vector<4x32xf32>
    %c2_237 = arith.constant 2 : index
    %c0_238 = arith.constant 0 : index
    %c0_239 = arith.constant 0 : index
    %186 = vector.load %arg20[%c2_237, %c0_238, %c0_239] : memref<5x9x32xf32, #tpu.memory_space<vmem>>, vector<1x4x32xf32>
    %187 = vector.shape_cast %186 : vector<1x4x32xf32> to vector<4x32xf32>
    %c2_240 = arith.constant 2 : index
    %c0_241 = arith.constant 0 : index
    %c0_242 = arith.constant 0 : index
    %188 = vector.load %arg21[%c2_240, %c0_241, %c0_242] : memref<5x9x32xf32, #tpu.memory_space<vmem>>, vector<1x4x32xf32>
    %189 = vector.shape_cast %188 : vector<1x4x32xf32> to vector<4x32xf32>
    %c2_243 = arith.constant 2 : index
    %c1_244 = arith.constant 1 : index
    %c0_245 = arith.constant 0 : index
    %190 = vector.load %arg20[%c2_243, %c1_244, %c0_245] : memref<5x9x32xf32, #tpu.memory_space<vmem>>, vector<1x4x32xf32>
    %191 = vector.shape_cast %190 : vector<1x4x32xf32> to vector<4x32xf32>
    %c2_246 = arith.constant 2 : index
    %c1_247 = arith.constant 1 : index
    %c0_248 = arith.constant 0 : index
    %192 = vector.load %arg21[%c2_246, %c1_247, %c0_248] : memref<5x9x32xf32, #tpu.memory_space<vmem>>, vector<1x4x32xf32>
    %193 = vector.shape_cast %192 : vector<1x4x32xf32> to vector<4x32xf32>
    %c3 = arith.constant 3 : index
    %c0_249 = arith.constant 0 : index
    %c0_250 = arith.constant 0 : index
    %194 = vector.load %arg18[%c3, %c0_249, %c0_250] : memref<5x9x32xf32, #tpu.memory_space<vmem>>, vector<1x4x32xf32>
    %195 = vector.shape_cast %194 : vector<1x4x32xf32> to vector<4x32xf32>
    %c3_251 = arith.constant 3 : index
    %c0_252 = arith.constant 0 : index
    %c0_253 = arith.constant 0 : index
    %196 = vector.load %arg19[%c3_251, %c0_252, %c0_253] : memref<5x9x32xf32, #tpu.memory_space<vmem>>, vector<1x4x32xf32>
    %197 = vector.shape_cast %196 : vector<1x4x32xf32> to vector<4x32xf32>
    %c3_254 = arith.constant 3 : index
    %c1_255 = arith.constant 1 : index
    %c0_256 = arith.constant 0 : index
    %198 = vector.load %arg18[%c3_254, %c1_255, %c0_256] : memref<5x9x32xf32, #tpu.memory_space<vmem>>, vector<1x4x32xf32>
    %199 = vector.shape_cast %198 : vector<1x4x32xf32> to vector<4x32xf32>
    %c3_257 = arith.constant 3 : index
    %c1_258 = arith.constant 1 : index
    %c0_259 = arith.constant 0 : index
    %200 = vector.load %arg19[%c3_257, %c1_258, %c0_259] : memref<5x9x32xf32, #tpu.memory_space<vmem>>, vector<1x4x32xf32>
    %201 = vector.shape_cast %200 : vector<1x4x32xf32> to vector<4x32xf32>
    %c3_260 = arith.constant 3 : index
    %c0_261 = arith.constant 0 : index
    %c0_262 = arith.constant 0 : index
    %202 = vector.load %arg20[%c3_260, %c0_261, %c0_262] : memref<5x9x32xf32, #tpu.memory_space<vmem>>, vector<1x4x32xf32>
    %203 = vector.shape_cast %202 : vector<1x4x32xf32> to vector<4x32xf32>
    %c3_263 = arith.constant 3 : index
    %c0_264 = arith.constant 0 : index
    %c0_265 = arith.constant 0 : index
    %204 = vector.load %arg21[%c3_263, %c0_264, %c0_265] : memref<5x9x32xf32, #tpu.memory_space<vmem>>, vector<1x4x32xf32>
    %205 = vector.shape_cast %204 : vector<1x4x32xf32> to vector<4x32xf32>
    %c3_266 = arith.constant 3 : index
    %c1_267 = arith.constant 1 : index
    %c0_268 = arith.constant 0 : index
    %206 = vector.load %arg20[%c3_266, %c1_267, %c0_268] : memref<5x9x32xf32, #tpu.memory_space<vmem>>, vector<1x4x32xf32>
    %207 = vector.shape_cast %206 : vector<1x4x32xf32> to vector<4x32xf32>
    %c3_269 = arith.constant 3 : index
    %c1_270 = arith.constant 1 : index
    %c0_271 = arith.constant 0 : index
    %208 = vector.load %arg21[%c3_269, %c1_270, %c0_271] : memref<5x9x32xf32, #tpu.memory_space<vmem>>, vector<1x4x32xf32>
    %209 = vector.shape_cast %208 : vector<1x4x32xf32> to vector<4x32xf32>
    %210 = tpu.concatenate %179, %181, %183, %185, %187, %189, %191, %193, %195, %197, %199, %201, %203, %205, %207, %209 in 1 : vector<4x32xf32>, vector<4x32xf32>, vector<4x32xf32>, vector<4x32xf32>, vector<4x32xf32>, vector<4x32xf32>, vector<4x32xf32>, vector<4x32xf32>, vector<4x32xf32>, vector<4x32xf32>, vector<4x32xf32>, vector<4x32xf32>, vector<4x32xf32>, vector<4x32xf32>, vector<4x32xf32>, vector<4x32xf32> -> vector<4x512xf32>
    %c0_272 = arith.constant 0 : index
    %c0_273 = arith.constant 0 : index
    %211 = vector.load %arg7[%c0_272, %c0_273] : memref<512x32xf32, #tpu.memory_space<vmem>>, vector<512x32xf32>
    %cst_274 = arith.constant dense<0.000000e+00> : vector<4x32xf32>
    %212 = tpu.matmul %210, %211, %cst_274 {dimension_numbers = #tpu.dot_dimension_numbers<[1], [0], [0], [1], [0, 0, 1, 1], [], []>} : vector<4x512xf32>, vector<512x32xf32>, vector<4x32xf32> -> vector<4x32xf32>
    %c0_275 = arith.constant 0 : index
    %c0_276 = arith.constant 0 : index
    %213 = vector.load %arg8[%c0_275, %c0_276] : memref<1x32xf32, #tpu.memory_space<vmem>>, vector<1x32xf32>
    %214 = vector.broadcast %213 : vector<1x32xf32> to vector<4x32xf32>
    %215 = arith.addf %212, %214 : vector<4x32xf32>
    %cst_277 = arith.constant 0.000000e+00 : f32
    %216 = vector.broadcast %cst_277 : f32 to vector<4x32xf32>
    %217 = arith.maximumf %215, %216 : vector<4x32xf32>
    %218 = vector.extract_strided_slice %217 {offsets = [0, 0], sizes = [1, 32], strides = [1, 1]} : vector<4x32xf32> to vector<1x32xf32>
    %219 = vector.extract_strided_slice %217 {offsets = [1, 0], sizes = [1, 32], strides = [1, 1]} : vector<4x32xf32> to vector<1x32xf32>
    %220 = vector.extract_strided_slice %217 {offsets = [2, 0], sizes = [1, 32], strides = [1, 1]} : vector<4x32xf32> to vector<1x32xf32>
    %221 = vector.extract_strided_slice %217 {offsets = [3, 0], sizes = [1, 32], strides = [1, 1]} : vector<4x32xf32> to vector<1x32xf32>
    %c3_278 = arith.constant 3 : index
    %c0_279 = arith.constant 0 : index
    %c0_280 = arith.constant 0 : index
    %222 = vector.load %arg18[%c3_278, %c0_279, %c0_280] : memref<5x9x32xf32, #tpu.memory_space<vmem>>, vector<1x4x32xf32>
    %223 = vector.shape_cast %222 : vector<1x4x32xf32> to vector<4x32xf32>
    %c3_281 = arith.constant 3 : index
    %c0_282 = arith.constant 0 : index
    %c0_283 = arith.constant 0 : index
    %224 = vector.load %arg19[%c3_281, %c0_282, %c0_283] : memref<5x9x32xf32, #tpu.memory_space<vmem>>, vector<1x4x32xf32>
    %225 = vector.shape_cast %224 : vector<1x4x32xf32> to vector<4x32xf32>
    %c3_284 = arith.constant 3 : index
    %c1_285 = arith.constant 1 : index
    %c0_286 = arith.constant 0 : index
    %226 = vector.load %arg18[%c3_284, %c1_285, %c0_286] : memref<5x9x32xf32, #tpu.memory_space<vmem>>, vector<1x4x32xf32>
    %227 = vector.shape_cast %226 : vector<1x4x32xf32> to vector<4x32xf32>
    %c3_287 = arith.constant 3 : index
    %c1_288 = arith.constant 1 : index
    %c0_289 = arith.constant 0 : index
    %228 = vector.load %arg19[%c3_287, %c1_288, %c0_289] : memref<5x9x32xf32, #tpu.memory_space<vmem>>, vector<1x4x32xf32>
    %229 = vector.shape_cast %228 : vector<1x4x32xf32> to vector<4x32xf32>
    %c3_290 = arith.constant 3 : index
    %c0_291 = arith.constant 0 : index
    %c0_292 = arith.constant 0 : index
    %230 = vector.load %arg20[%c3_290, %c0_291, %c0_292] : memref<5x9x32xf32, #tpu.memory_space<vmem>>, vector<1x4x32xf32>
    %231 = vector.shape_cast %230 : vector<1x4x32xf32> to vector<4x32xf32>
    %c3_293 = arith.constant 3 : index
    %c0_294 = arith.constant 0 : index
    %c0_295 = arith.constant 0 : index
    %232 = vector.load %arg21[%c3_293, %c0_294, %c0_295] : memref<5x9x32xf32, #tpu.memory_space<vmem>>, vector<1x4x32xf32>
    %233 = vector.shape_cast %232 : vector<1x4x32xf32> to vector<4x32xf32>
    %c3_296 = arith.constant 3 : index
    %c1_297 = arith.constant 1 : index
    %c0_298 = arith.constant 0 : index
    %234 = vector.load %arg20[%c3_296, %c1_297, %c0_298] : memref<5x9x32xf32, #tpu.memory_space<vmem>>, vector<1x4x32xf32>
    %235 = vector.shape_cast %234 : vector<1x4x32xf32> to vector<4x32xf32>
    %c3_299 = arith.constant 3 : index
    %c1_300 = arith.constant 1 : index
    %c0_301 = arith.constant 0 : index
    %236 = vector.load %arg21[%c3_299, %c1_300, %c0_301] : memref<5x9x32xf32, #tpu.memory_space<vmem>>, vector<1x4x32xf32>
    %237 = vector.shape_cast %236 : vector<1x4x32xf32> to vector<4x32xf32>
    %c4 = arith.constant 4 : index
    %c0_302 = arith.constant 0 : index
    %c0_303 = arith.constant 0 : index
    %238 = vector.load %arg18[%c4, %c0_302, %c0_303] : memref<5x9x32xf32, #tpu.memory_space<vmem>>, vector<1x4x32xf32>
    %239 = vector.shape_cast %238 : vector<1x4x32xf32> to vector<4x32xf32>
    %c4_304 = arith.constant 4 : index
    %c0_305 = arith.constant 0 : index
    %c0_306 = arith.constant 0 : index
    %240 = vector.load %arg19[%c4_304, %c0_305, %c0_306] : memref<5x9x32xf32, #tpu.memory_space<vmem>>, vector<1x4x32xf32>
    %241 = vector.shape_cast %240 : vector<1x4x32xf32> to vector<4x32xf32>
    %c4_307 = arith.constant 4 : index
    %c1_308 = arith.constant 1 : index
    %c0_309 = arith.constant 0 : index
    %242 = vector.load %arg18[%c4_307, %c1_308, %c0_309] : memref<5x9x32xf32, #tpu.memory_space<vmem>>, vector<1x4x32xf32>
    %243 = vector.shape_cast %242 : vector<1x4x32xf32> to vector<4x32xf32>
    %c4_310 = arith.constant 4 : index
    %c1_311 = arith.constant 1 : index
    %c0_312 = arith.constant 0 : index
    %244 = vector.load %arg19[%c4_310, %c1_311, %c0_312] : memref<5x9x32xf32, #tpu.memory_space<vmem>>, vector<1x4x32xf32>
    %245 = vector.shape_cast %244 : vector<1x4x32xf32> to vector<4x32xf32>
    %c4_313 = arith.constant 4 : index
    %c0_314 = arith.constant 0 : index
    %c0_315 = arith.constant 0 : index
    %246 = vector.load %arg20[%c4_313, %c0_314, %c0_315] : memref<5x9x32xf32, #tpu.memory_space<vmem>>, vector<1x4x32xf32>
    %247 = vector.shape_cast %246 : vector<1x4x32xf32> to vector<4x32xf32>
    %c4_316 = arith.constant 4 : index
    %c0_317 = arith.constant 0 : index
    %c0_318 = arith.constant 0 : index
    %248 = vector.load %arg21[%c4_316, %c0_317, %c0_318] : memref<5x9x32xf32, #tpu.memory_space<vmem>>, vector<1x4x32xf32>
    %249 = vector.shape_cast %248 : vector<1x4x32xf32> to vector<4x32xf32>
    %c4_319 = arith.constant 4 : index
    %c1_320 = arith.constant 1 : index
    %c0_321 = arith.constant 0 : index
    %250 = vector.load %arg20[%c4_319, %c1_320, %c0_321] : memref<5x9x32xf32, #tpu.memory_space<vmem>>, vector<1x4x32xf32>
    %251 = vector.shape_cast %250 : vector<1x4x32xf32> to vector<4x32xf32>
    %c4_322 = arith.constant 4 : index
    %c1_323 = arith.constant 1 : index
    %c0_324 = arith.constant 0 : index
    %252 = vector.load %arg21[%c4_322, %c1_323, %c0_324] : memref<5x9x32xf32, #tpu.memory_space<vmem>>, vector<1x4x32xf32>
    %253 = vector.shape_cast %252 : vector<1x4x32xf32> to vector<4x32xf32>
    %254 = tpu.concatenate %223, %225, %227, %229, %231, %233, %235, %237, %239, %241, %243, %245, %247, %249, %251, %253 in 1 : vector<4x32xf32>, vector<4x32xf32>, vector<4x32xf32>, vector<4x32xf32>, vector<4x32xf32>, vector<4x32xf32>, vector<4x32xf32>, vector<4x32xf32>, vector<4x32xf32>, vector<4x32xf32>, vector<4x32xf32>, vector<4x32xf32>, vector<4x32xf32>, vector<4x32xf32>, vector<4x32xf32>, vector<4x32xf32> -> vector<4x512xf32>
    %c0_325 = arith.constant 0 : index
    %c0_326 = arith.constant 0 : index
    %255 = vector.load %arg7[%c0_325, %c0_326] : memref<512x32xf32, #tpu.memory_space<vmem>>, vector<512x32xf32>
    %cst_327 = arith.constant dense<0.000000e+00> : vector<4x32xf32>
    %256 = tpu.matmul %254, %255, %cst_327 {dimension_numbers = #tpu.dot_dimension_numbers<[1], [0], [0], [1], [0, 0, 1, 1], [], []>} : vector<4x512xf32>, vector<512x32xf32>, vector<4x32xf32> -> vector<4x32xf32>
    %c0_328 = arith.constant 0 : index
    %c0_329 = arith.constant 0 : index
    %257 = vector.load %arg8[%c0_328, %c0_329] : memref<1x32xf32, #tpu.memory_space<vmem>>, vector<1x32xf32>
    %258 = vector.broadcast %257 : vector<1x32xf32> to vector<4x32xf32>
    %259 = arith.addf %256, %258 : vector<4x32xf32>
    %cst_330 = arith.constant 0.000000e+00 : f32
    %260 = vector.broadcast %cst_330 : f32 to vector<4x32xf32>
    %261 = arith.maximumf %259, %260 : vector<4x32xf32>
    %262 = vector.extract_strided_slice %261 {offsets = [0, 0], sizes = [1, 32], strides = [1, 1]} : vector<4x32xf32> to vector<1x32xf32>
    %263 = vector.extract_strided_slice %261 {offsets = [1, 0], sizes = [1, 32], strides = [1, 1]} : vector<4x32xf32> to vector<1x32xf32>
    %264 = vector.extract_strided_slice %261 {offsets = [2, 0], sizes = [1, 32], strides = [1, 1]} : vector<4x32xf32> to vector<1x32xf32>
    %265 = vector.extract_strided_slice %261 {offsets = [3, 0], sizes = [1, 32], strides = [1, 1]} : vector<4x32xf32> to vector<1x32xf32>
    %266 = tpu.concatenate %130, %131, %132, %133, %174, %175, %176, %177, %218, %219, %220, %221, %262, %263, %264, %265 in 1 : vector<1x32xf32>, vector<1x32xf32>, vector<1x32xf32>, vector<1x32xf32>, vector<1x32xf32>, vector<1x32xf32>, vector<1x32xf32>, vector<1x32xf32>, vector<1x32xf32>, vector<1x32xf32>, vector<1x32xf32>, vector<1x32xf32>, vector<1x32xf32>, vector<1x32xf32>, vector<1x32xf32>, vector<1x32xf32> -> vector<1x512xf32>
    %c0_331 = arith.constant 0 : index
    %c0_332 = arith.constant 0 : index
    %267 = vector.load %arg9[%c0_331, %c0_332] : memref<512x256xf32, #tpu.memory_space<vmem>>, vector<512x256xf32>
    %cst_333 = arith.constant dense<0.000000e+00> : vector<1x256xf32>
    %268 = tpu.matmul %266, %267, %cst_333 {dimension_numbers = #tpu.dot_dimension_numbers<[1], [0], [0], [1], [0, 0, 1, 1], [], []>} : vector<1x512xf32>, vector<512x256xf32>, vector<1x256xf32> -> vector<1x256xf32>
    %c0_334 = arith.constant 0 : index
    %c0_335 = arith.constant 0 : index
    %269 = vector.load %arg10[%c0_334, %c0_335] : memref<1x256xf32, #tpu.memory_space<vmem>>, vector<1x256xf32>
    %270 = arith.addf %268, %269 : vector<1x256xf32>
    %cst_336 = arith.constant 0.000000e+00 : f32
    %271 = vector.broadcast %cst_336 : f32 to vector<1x256xf32>
    %272 = arith.maximumf %270, %271 : vector<1x256xf32>
    %c0_337 = arith.constant 0 : index
    %c0_338 = arith.constant 0 : index
    %273 = vector.load %arg11[%c0_337, %c0_338] : memref<256x128xf32, #tpu.memory_space<vmem>>, vector<256x128xf32>
    %cst_339 = arith.constant dense<0.000000e+00> : vector<1x128xf32>
    %274 = tpu.matmul %272, %273, %cst_339 {dimension_numbers = #tpu.dot_dimension_numbers<[1], [0], [0], [1], [0, 0, 1, 1], [], []>} : vector<1x256xf32>, vector<256x128xf32>, vector<1x128xf32> -> vector<1x128xf32>
    %c0_340 = arith.constant 0 : index
    %c0_341 = arith.constant 0 : index
    %275 = vector.load %arg12[%c0_340, %c0_341] : memref<1x128xf32, #tpu.memory_space<vmem>>, vector<1x128xf32>
    %276 = arith.addf %274, %275 : vector<1x128xf32>
    %cst_342 = arith.constant 0.000000e+00 : f32
    %277 = vector.broadcast %cst_342 : f32 to vector<1x128xf32>
    %278 = arith.maximumf %276, %277 : vector<1x128xf32>
    %c0_343 = arith.constant 0 : index
    %c0_344 = arith.constant 0 : index
    %c0_345 = arith.constant 0 : index
    %279 = vector.load %arg13[%c0_343, %c0_344, %c0_345] : memref<1x1x128xf32, #tpu.memory_space<vmem>>, vector<1x1x128xf32>
    %280 = vector.shape_cast %279 : vector<1x1x128xf32> to vector<1x128xf32>
    %281 = vector.shape_cast %278 : vector<1x128xf32> to vector<1x1x128xf32>
    tpu.vector_store %arg13[%c0_343, %c0_344, %c0_345], %281 {strides = array<i32>} : memref<1x1x128xf32, #tpu.memory_space<vmem>>, vector<1x1x128xf32>,
    return
  }
  func.func @transform_0(%arg0: i32) -> (i32, i32) {
    %c0_i32 = arith.constant 0 : i32
    %c0_i32_0 = arith.constant 0 : i32
    return %arg0, %c0_i32 : i32, i32
  }
  func.func @transform_1(%arg0: i32) -> (i32, i32) {
    %c0_i32 = arith.constant 0 : i32
    %c0_i32_0 = arith.constant 0 : i32
    %c0_i32_1 = arith.constant 0 : i32
    return %c0_i32, %c0_i32_0 : i32, i32
  }
  func.func @transform_2(%arg0: i32) -> (i32, i32) {
    %c0_i32 = arith.constant 0 : i32
    %c0_i32_0 = arith.constant 0 : i32
    %c0_i32_1 = arith.constant 0 : i32
    return %c0_i32, %c0_i32_0 : i32, i32
  }
  func.func @transform_3(%arg0: i32) -> (i32, i32) {
    %c0_i32 = arith.constant 0 : i32
    %c0_i32_0 = arith.constant 0 : i32
    %c0_i32_1 = arith.constant 0 : i32
    return %c0_i32, %c0_i32_0 : i32, i32
  }
  func.func @transform_4(%arg0: i32) -> (i32, i32) {
    %c0_i32 = arith.constant 0 : i32
    %c0_i32_0 = arith.constant 0 : i32
    %c0_i32_1 = arith.constant 0 : i32
    return %c0_i32, %c0_i32_0 : i32, i32
  }
  func.func @transform_5(%arg0: i32) -> (i32, i32) {
    %c0_i32 = arith.constant 0 : i32
    %c0_i32_0 = arith.constant 0 : i32
    %c0_i32_1 = arith.constant 0 : i32
    return %c0_i32, %c0_i32_0 : i32, i32
  }
  func.func @transform_6(%arg0: i32) -> (i32, i32) {
    %c0_i32 = arith.constant 0 : i32
    %c0_i32_0 = arith.constant 0 : i32
    %c0_i32_1 = arith.constant 0 : i32
    return %c0_i32, %c0_i32_0 : i32, i32
  }
  func.func @transform_7(%arg0: i32) -> (i32, i32) {
    %c0_i32 = arith.constant 0 : i32
    %c0_i32_0 = arith.constant 0 : i32
    %c0_i32_1 = arith.constant 0 : i32
    return %c0_i32, %c0_i32_0 : i32, i32
  }
  func.func @transform_8(%arg0: i32) -> (i32, i32) {
    %c0_i32 = arith.constant 0 : i32
    %c0_i32_0 = arith.constant 0 : i32
    %c0_i32_1 = arith.constant 0 : i32
    return %c0_i32, %c0_i32_0 : i32, i32
  }
  func.func @transform_9(%arg0: i32) -> (i32, i32) {
    %c0_i32 = arith.constant 0 : i32
    %c0_i32_0 = arith.constant 0 : i32
    %c0_i32_1 = arith.constant 0 : i32
    return %c0_i32, %c0_i32_0 : i32, i32
  }
  func.func @transform_10(%arg0: i32) -> (i32, i32) {
    %c0_i32 = arith.constant 0 : i32
    %c0_i32_0 = arith.constant 0 : i32
    %c0_i32_1 = arith.constant 0 : i32
    return %c0_i32, %c0_i32_0 : i32, i32
  }
  func.func @transform_11(%arg0: i32) -> (i32, i32) {
    %c0_i32 = arith.constant 0 : i32
    %c0_i32_0 = arith.constant 0 : i32
    %c0_i32_1 = arith.constant 0 : i32
    return %c0_i32, %c0_i32_0 : i32, i32
  }
  func.func @transform_12(%arg0: i32) -> (i32, i32, i32) {
    %c0_i32 = arith.constant 0 : i32
    %c0_i32_0 = arith.constant 0 : i32
    %c0_i32_1 = arith.constant 0 : i32
    return %arg0, %c0_i32, %c0_i32_0 : i32, i32, i32
  }
}

</mosaic_0001>

<llo_original>
// kernel: encoder_conv_forward.1
$region0: #{encoder_conv_forward.1}
  #allocation0 [shape = 'u32[]', space=smem, size = 0x4, offset = 0x4, fixed_abs, tag = 'smem constant byte address 0x4 - core index']
  #allocation1 [shape = 'u32[144,128]{1,0:T(1,128)}', space=vmem, size = 0x12000, scoped, tag = 'internal scratch']
  #allocation2 [shape = 'f32[9,9,32]{2,1,0:T(8,128)}', space=vmem, size = 0x12000, scoped, tag = 'scratch operand']
  #allocation3 [shape = 'f32[9,9,32]{2,1,0:T(8,128)}', space=vmem, size = 0x12000, scoped, tag = 'scratch operand']
  #allocation4 [shape = 'f32[9,9,32]{2,1,0:T(8,128)}', space=vmem, size = 0x12000, scoped, tag = 'scratch operand']
  #allocation5 [shape = 'f32[9,9,32]{2,1,0:T(8,128)}', space=vmem, size = 0x12000, scoped, tag = 'scratch operand']
  #allocation6 [shape = 'f32[5,9,32]{2,1,0:T(8,128)}', space=vmem, size = 0xa000, scoped, tag = 'scratch operand']
  #allocation7 [shape = 'f32[5,9,32]{2,1,0:T(8,128)}', space=vmem, size = 0xa000, scoped, tag = 'scratch operand']
  #allocation8 [shape = 'f32[5,9,32]{2,1,0:T(8,128)}', space=vmem, size = 0xa000, scoped, tag = 'scratch operand']
  #allocation9 [shape = 'f32[5,9,32]{2,1,0:T(8,128)}', space=vmem, size = 0xa000, scoped, tag = 'scratch operand']
  %s0 = inlined_call_operand.vmem [shape: f32[512,48], index: 0, kind: input, shape index: {}]
  %s1 = inlined_call_operand.vmem [shape: f32[48,32], index: 1, kind: input, shape index: {}]
  %s2 = inlined_call_operand.vmem [shape: f32[1,32], index: 2, kind: input, shape index: {}]
  %s3 = inlined_call_operand.vmem [shape: f32[512,32], index: 3, kind: input, shape index: {}]
  %s4 = inlined_call_operand.vmem [shape: f32[1,32], index: 4, kind: input, shape index: {}]
  %s5 = inlined_call_operand.vmem [shape: f32[128,64], index: 5, kind: input, shape index: {}]
  %s6 = inlined_call_operand.vmem [shape: f32[512,32], index: 6, kind: input, shape index: {}]
  %s7 = inlined_call_operand.vmem [shape: f32[1,32], index: 7, kind: input, shape index: {}]
  %s8 = inlined_call_operand.vmem [shape: f32[512,256], index: 8, kind: input, shape index: {}]
  %s9 = inlined_call_operand.vmem [shape: f32[1,256], index: 9, kind: input, shape index: {}]
  %s10 = inlined_call_operand.vmem [shape: f32[256,128], index: 10, kind: input, shape index: {}]
  %s11 = inlined_call_operand.vmem [shape: f32[1,128], index: 11, kind: input, shape index: {}]
  %s12 = inlined_call_operand.hbm [shape: f32[2,1,128], index: 12, kind: output, shape index: {}]
  %s13 = sld [smem:[#allocation0]]
  $region81: #{encoder_conv_forward.1} parent=0
    _
  %s15 = ssub.s32 1, %s13
  %s16 = scalar_select 0, %s15, %s13
  $region1: #{encoder_conv_forward.1} parent=0
    #allocation10 [shape = 'u8[1024]{0}', space=vmem, size = 0x400, scoped, tag = 'output window, operand 0']
    #allocation11 [shape = 's32[2]{0}', space=sflag, size = 0x8, scoped, tag = 'scoped memory for encoder_conv_forward.1']
    %17 = vsyncpa [#allocation11], 0
    %s18 = scalar_lea.sflag [#allocation11], 1
    %19 = vsyncpa %s18, 0
    loop: start=0, step=1, limit=4
    $region2: #{encoder_conv_forward.1} parent=1 // loop_pre_header
      _
    $region3: #{encoder_conv_forward.1} parent=1 // loop_header
      %s21 = sphi 0, %s25
      %p22 = scmp.ge.s32.totalorder %s21, 4
      %s31 = sphi 0, %s33
      %s34 = sphi 0, %s31
      %s35 = sphi 0, %s34
      %s51 = sphi 0, %s35
      %s55 = sphi 0, %s55
      %s57 = sphi 0, %s55
      %s58 = sphi 0, %s57
      %s72 = sphi 0, %s58
      %s76 = sphi 0, %s76
      %s78 = sphi 0, %s76
      %s79 = sphi 0, %s78
      %s93 = sphi 0, %s79
      %s97 = sphi 0, %s97
      %s99 = sphi 0, %s97
      %s100 = sphi 0, %s99
      %s114 = sphi 0, %s100
      %s118 = sphi 0, %s118
      %s120 = sphi 0, %s118
      %s121 = sphi 0, %s120
      %s135 = sphi 0, %s121
      %s139 = sphi 0, %s139
      %s141 = sphi 0, %s139
      %s142 = sphi 0, %s141
      %s156 = sphi 0, %s142
      %s160 = sphi 0, %s160
      %s162 = sphi 0, %s160
      %s163 = sphi 0, %s162
      %s177 = sphi 0, %s163
      %s181 = sphi 0, %s181
      %s183 = sphi 0, %s181
      %s184 = sphi 0, %s183
      %s198 = sphi 0, %s184
      %s202 = sphi 0, %s202
      %s204 = sphi 0, %s202
      %s205 = sphi 0, %s204
      %s219 = sphi 0, %s205
      %s223 = sphi 0, %s223
      %s225 = sphi 0, %s223
      %s226 = sphi 0, %s225
      %s240 = sphi 0, %s226
      %s244 = sphi 0, %s244
      %s246 = sphi 0, %s244
      %s247 = sphi 0, %s246
      %s261 = sphi 0, %s247
      %s265 = sphi 0, %s265
      %s267 = sphi 0, %s265
      %s268 = sphi 0, %s267
      %s282 = sphi 0, %s268
      %s288 = sphi 0, %s290
      %s291 = sphi 0, %s288
      %s292 = sphi 0, %s291
      %s308 = sphi 0, %s292
    $region4: #{encoder_conv_forward.1} parent=1 // loop_header_branch
      %24 = sbr.rel (%p22) target = $region8
    $region5: #{encoder_conv_forward.1} parent=1 // loop_body
      %s26 = ssub.s32 %s21, 1
      %s27 = ssub.s32 %s21, 2
      %s28 = sadd.s32 %s21, 1
      %s29 = ssub.s32 %s21, %s28
      %p30 = scmp.eq.s32.totalorder %s29, 0
      %s32 = sadd.s32 %s31, 1
      %s33 = scalar_select %p30, %s31, %s32
      %p36 = pneg %p30
      %p37 = scmp.eq.s32.totalorder %s21, 1
      %p38 = por %p36, %p37
      %p39 = scmp.ne.s32.totalorder %s31, %s34
      %p40 = scmp.eq.s32.totalorder %s21, 0
      %p41 = por %p39, %p40
      %p42 = scmp.ne.s32.totalorder %s31, %s34
      %p43 = scmp.eq.s32.totalorder %s26, 1
      %p44 = por %p42, %p43
      %p45 = scmp.ne.s32.totalorder %s34, %s35
      %p46 = scmp.eq.s32.totalorder %s26, 0
      %p47 = por %p45, %p46
      %p48 = scmp.ne.s32.totalorder %s34, %s35
      %p49 = scmp.eq.s32.totalorder %s27, 1
      %p50 = por %p48, %p49
      %p52 = scmp.ne.s32.totalorder %s35, %s51
      %p53 = scmp.eq.s32.totalorder %s27, 0
      %p54 = por %p52, %p53
      %s56 = sadd.s32 %s55, 1
      %p59 = scmp.eq.s32.totalorder %s21, 1
      %p60 = scmp.ne.s32.totalorder %s55, %s57
      %p61 = scmp.eq.s32.totalorder %s21, 0
      %p62 = por %p60, %p61
      %p63 = scmp.ne.s32.totalorder %s55, %s57
      %p64 = scmp.eq.s32.totalorder %s26, 1
      %p65 = por %p63, %p64
      %p66 = scmp.ne.s32.totalorder %s57, %s58
      %p67 = scmp.eq.s32.totalorder %s26, 0
      %p68 = por %p66, %p67
      %p69 = scmp.ne.s32.totalorder %s57, %s58
      %p70 = scmp.eq.s32.totalorder %s27, 1
      %p71 = por %p69, %p70
      %p73 = scmp.ne.s32.totalorder %s58, %s72
      %p74 = scmp.eq.s32.totalorder %s27, 0
      %p75 = por %p73, %p74
      %s77 = sadd.s32 %s76, 1
      %p80 = scmp.eq.s32.totalorder %s21, 1
      %p81 = scmp.ne.s32.totalorder %s76, %s78
      %p82 = scmp.eq.s32.totalorder %s21, 0
      %p83 = por %p81, %p82
      %p84 = scmp.ne.s32.totalorder %s76, %s78
      %p85 = scmp.eq.s32.totalorder %s26, 1
      %p86 = por %p84, %p85
      %p87 = scmp.ne.s32.totalorder %s78, %s79
      %p88 = scmp.eq.s32.totalorder %s26, 0
      %p89 = por %p87, %p88
      %p90 = scmp.ne.s32.totalorder %s78, %s79
      %p91 = scmp.eq.s32.totalorder %s27, 1
      %p92 = por %p90, %p91
      %p94 = scmp.ne.s32.totalorder %s79, %s93
      %p95 = scmp.eq.s32.totalorder %s27, 0
      %p96 = por %p94, %p95
      %s98 = sadd.s32 %s97, 1
      %p101 = scmp.eq.s32.totalorder %s21, 1
      %p102 = scmp.ne.s32.totalorder %s97, %s99
      %p103 = scmp.eq.s32.totalorder %s21, 0
      %p104 = por %p102, %p103
      %p105 = scmp.ne.s32.totalorder %s97, %s99
      %p106 = scmp.eq.s32.totalorder %s26, 1
      %p107 = por %p105, %p106
      %p108 = scmp.ne.s32.totalorder %s99, %s100
      %p109 = scmp.eq.s32.totalorder %s26, 0
      %p110 = por %p108, %p109
      %p111 = scmp.ne.s32.totalorder %s99, %s100
      %p112 = scmp.eq.s32.totalorder %s27, 1
      %p113 = por %p111, %p112
      %p115 = scmp.ne.s32.totalorder %s100, %s114
      %p116 = scmp.eq.s32.totalorder %s27, 0
      %p117 = por %p115, %p116
      %s119 = sadd.s32 %s118, 1
      %p122 = scmp.eq.s32.totalorder %s21, 1
      %p123 = scmp.ne.s32.totalorder %s118, %s120
      %p124 = scmp.eq.s32.totalorder %s21, 0
      %p125 = por %p123, %p124
      %p126 = scmp.ne.s32.totalorder %s118, %s120
      %p127 = scmp.eq.s32.totalorder %s26, 1
      %p128 = por %p126, %p127
      %p129 = scmp.ne.s32.totalorder %s120, %s121
      %p130 = scmp.eq.s32.totalorder %s26, 0
      %p131 = por %p129, %p130
      %p132 = scmp.ne.s32.totalorder %s120, %s121
      %p133 = scmp.eq.s32.totalorder %s27, 1
      %p134 = por %p132, %p133
      %p136 = scmp.ne.s32.totalorder %s121, %s135
      %p137 = scmp.eq.s32.totalorder %s27, 0
      %p138 = por %p136, %p137
      %s140 = sadd.s32 %s139, 1
      %p143 = scmp.eq.s32.totalorder %s21, 1
      %p144 = scmp.ne.s32.totalorder %s139, %s141
      %p145 = scmp.eq.s32.totalorder %s21, 0
      %p146 = por %p144, %p145
      %p147 = scmp.ne.s32.totalorder %s139, %s141
      %p148 = scmp.eq.s32.totalorder %s26, 1
      %p149 = por %p147, %p148
      %p150 = scmp.ne.s32.totalorder %s141, %s142
      %p151 = scmp.eq.s32.totalorder %s26, 0
      %p152 = por %p150, %p151
      %p153 = scmp.ne.s32.totalorder %s141, %s142
      %p154 = scmp.eq.s32.totalorder %s27, 1
      %p155 = por %p153, %p154
      %p157 = scmp.ne.s32.totalorder %s142, %s156
      %p158 = scmp.eq.s32.totalorder %s27, 0
      %p159 = por %p157, %p158
      %s161 = sadd.s32 %s160, 1
      %p164 = scmp.eq.s32.totalorder %s21, 1
      %p165 = scmp.ne.s32.totalorder %s160, %s162
      %p166 = scmp.eq.s32.totalorder %s21, 0
      %p167 = por %p165, %p166
      %p168 = scmp.ne.s32.totalorder %s160, %s162
      %p169 = scmp.eq.s32.totalorder %s26, 1
      %p170 = por %p168, %p169
      %p171 = scmp.ne.s32.totalorder %s162, %s163
      %p172 = scmp.eq.s32.totalorder %s26, 0
      %p173 = por %p171, %p172
      %p174 = scmp.ne.s32.totalorder %s162, %s163
      %p175 = scmp.eq.s32.totalorder %s27, 1
      %p176 = por %p174, %p175
      %p178 = scmp.ne.s32.totalorder %s163, %s177
      %p179 = scmp.eq.s32.totalorder %s27, 0
      %p180 = por %p178, %p179
      %s182 = sadd.s32 %s181, 1
      %p185 = scmp.eq.s32.totalorder %s21, 1
      %p186 = scmp.ne.s32.totalorder %s181, %s183
      %p187 = scmp.eq.s32.totalorder %s21, 0
      %p188 = por %p186, %p187
      %p189 = scmp.ne.s32.totalorder %s181, %s183
      %p190 = scmp.eq.s32.totalorder %s26, 1
      %p191 = por %p189, %p190
      %p192 = scmp.ne.s32.totalorder %s183, %s184
      %p193 = scmp.eq.s32.totalorder %s26, 0
      %p194 = por %p192, %p193
      %p195 = scmp.ne.s32.totalorder %s183, %s184
      %p196 = scmp.eq.s32.totalorder %s27, 1
      %p197 = por %p195, %p196
      %p199 = scmp.ne.s32.totalorder %s184, %s198
      %p200 = scmp.eq.s32.totalorder %s27, 0
      %p201 = por %p199, %p200
      %s203 = sadd.s32 %s202, 1
      %p206 = scmp.eq.s32.totalorder %s21, 1
      %p207 = scmp.ne.s32.totalorder %s202, %s204
      %p208 = scmp.eq.s32.totalorder %s21, 0
      %p209 = por %p207, %p208
      %p210 = scmp.ne.s32.totalorder %s202, %s204
      %p211 = scmp.eq.s32.totalorder %s26, 1
      %p212 = por %p210, %p211
      %p213 = scmp.ne.s32.totalorder %s204, %s205
      %p214 = scmp.eq.s32.totalorder %s26, 0
      %p215 = por %p213, %p214
      %p216 = scmp.ne.s32.totalorder %s204, %s205
      %p217 = scmp.eq.s32.totalorder %s27, 1
      %p218 = por %p216, %p217
      %p220 = scmp.ne.s32.totalorder %s205, %s219
      %p221 = scmp.eq.s32.totalorder %s27, 0
      %p222 = por %p220, %p221
      %s224 = sadd.s32 %s223, 1
      %p227 = scmp.eq.s32.totalorder %s21, 1
      %p228 = scmp.ne.s32.totalorder %s223, %s225
      %p229 = scmp.eq.s32.totalorder %s21, 0
      %p230 = por %p228, %p229
      %p231 = scmp.ne.s32.totalorder %s223, %s225
      %p232 = scmp.eq.s32.totalorder %s26, 1
      %p233 = por %p231, %p232
      %p234 = scmp.ne.s32.totalorder %s225, %s226
      %p235 = scmp.eq.s32.totalorder %s26, 0
      %p236 = por %p234, %p235
      %p237 = scmp.ne.s32.totalorder %s225, %s226
      %p238 = scmp.eq.s32.totalorder %s27, 1
      %p239 = por %p237, %p238
      %p241 = scmp.ne.s32.totalorder %s226, %s240
      %p242 = scmp.eq.s32.totalorder %s27, 0
      %p243 = por %p241, %p242
      %s245 = sadd.s32 %s244, 1
      %p248 = scmp.eq.s32.totalorder %s21, 1
      %p249 = scmp.ne.s32.totalorder %s244, %s246
      %p250 = scmp.eq.s32.totalorder %s21, 0
      %p251 = por %p249, %p250
      %p252 = scmp.ne.s32.totalorder %s244, %s246
      %p253 = scmp.eq.s32.totalorder %s26, 1
      %p254 = por %p252, %p253
      %p255 = scmp.ne.s32.totalorder %s246, %s247
      %p256 = scmp.eq.s32.totalorder %s26, 0
      %p257 = por %p255, %p256
      %p258 = scmp.ne.s32.totalorder %s246, %s247
      %p259 = scmp.eq.s32.totalorder %s27, 1
      %p260 = por %p258, %p259
      %p262 = scmp.ne.s32.totalorder %s247, %s261
      %p263 = scmp.eq.s32.totalorder %s27, 0
      %p264 = por %p262, %p263
      %s266 = sadd.s32 %s265, 1
      %p269 = scmp.eq.s32.totalorder %s21, 1
      %p270 = scmp.ne.s32.totalorder %s265, %s267
      %p271 = scmp.eq.s32.totalorder %s21, 0
      %p272 = por %p270, %p271
      %p273 = scmp.ne.s32.totalorder %s265, %s267
      %p274 = scmp.eq.s32.totalorder %s26, 1
      %p275 = por %p273, %p274
      %p276 = scmp.ne.s32.totalorder %s267, %s268
      %p277 = scmp.eq.s32.totalorder %s26, 0
      %p278 = por %p276, %p277
      %p279 = scmp.ne.s32.totalorder %s267, %s268
      %p280 = scmp.eq.s32.totalorder %s27, 1
      %p281 = por %p279, %p280
      %p283 = scmp.ne.s32.totalorder %s268, %s282
      %p284 = scmp.eq.s32.totalorder %s27, 0
      %p285 = por %p283, %p284
      %s286 = ssub.s32 %s21, %s28
      %p287 = scmp.eq.s32.totalorder %s286, 0
      %s289 = sadd.s32 %s288, 1
      %s290 = scalar_select %p287, %s288, %s289
      %p293 = pneg %p287
      %p294 = scmp.eq.s32.totalorder %s21, 1
      %p295 = por %p293, %p294
      %p296 = scmp.ne.s32.totalorder %s288, %s291
      %p297 = scmp.eq.s32.totalorder %s21, 0
      %p298 = por %p296, %p297
      %p299 = scmp.ne.s32.totalorder %s288, %s291
      %p300 = scmp.eq.s32.totalorder %s26, 1
      %p301 = por %p299, %p300
      %p302 = scmp.ne.s32.totalorder %s291, %s292
      %p303 = scmp.eq.s32.totalorder %s26, 0
      %p304 = por %p302, %p303
      %p305 = scmp.ne.s32.totalorder %s291, %s292
      %p306 = scmp.eq.s32.totalorder %s27, 1
      %p307 = por %p305, %p306
      %p309 = scmp.ne.s32.totalorder %s292, %s308
      %p310 = scmp.eq.s32.totalorder %s27, 0
      %p311 = por %p309, %p310
      %p312 = scmp.le.s32.totalorder 1, %s21
      %p313 = scmp.lt.s32.totalorder %s21, 3
      %p314 = pnand %p312, %p313
      %p315 = pneg %p314
      // Predicated region
      $region9: #{encoder_conv_forward.1} parent=5 // pred_check
        _
      $region10: #{encoder_conv_forward.1} parent=5 // pred_check_branch
        %317 = sbr.rel (%p314) target = $region12
      $region11: #{encoder_conv_forward.1} parent=5 // pred_region
        %s318 = ssub.s32 %s21, 1
        // Predicated region
        $region13: #{encoder_conv_forward.1} parent=11 // pred_check
          %p319 = pneg %p68
        $region14: #{encoder_conv_forward.1} parent=11 // pred_check_branch
          %321 = sbr.rel (%p319) target = $region16
        $region15: #{encoder_conv_forward.1} parent=11 // pred_region
          _
        $region16: #{encoder_conv_forward.1} parent=11 // pred_fallthru
          _
        // Predicated region
        $region17: #{encoder_conv_forward.1} parent=11 // pred_check
          %p322 = pneg %p89
        $region18: #{encoder_conv_forward.1} parent=11 // pred_check_branch
          %324 = sbr.rel (%p322) target = $region20
        $region19: #{encoder_conv_forward.1} parent=11 // pred_region
          _
        $region20: #{encoder_conv_forward.1} parent=11 // pred_fallthru
          _
        // Predicated region
        $region21: #{encoder_conv_forward.1} parent=11 // pred_check
          %p325 = pneg %p110
        $region22: #{encoder_conv_forward.1} parent=11 // pred_check_branch
          %327 = sbr.rel (%p325) target = $region24
        $region23: #{encoder_conv_forward.1} parent=11 // pred_region
          _
        $region24: #{encoder_conv_forward.1} parent=11 // pred_fallthru
          _
        // Predicated region
        $region25: #{encoder_conv_forward.1} parent=11 // pred_check
          %p328 = pneg %p131
        $region26: #{encoder_conv_forward.1} parent=11 // pred_check_branch
          %330 = sbr.rel (%p328) target = $region28
        $region27: #{encoder_conv_forward.1} parent=11 // pred_region
          _
        $region28: #{encoder_conv_forward.1} parent=11 // pred_fallthru
          _
        // Predicated region
        $region29: #{encoder_conv_forward.1} parent=11 // pred_check
          %p331 = pneg %p152
        $region30: #{encoder_conv_forward.1} parent=11 // pred_check_branch
          %333 = sbr.rel (%p331) target = $region32
        $region31: #{encoder_conv_forward.1} parent=11 // pred_region
          _
        $region32: #{encoder_conv_forward.1} parent=11 // pred_fallthru
          _
        // Predicated region
        $region33: #{encoder_conv_forward.1} parent=11 // pred_check
          %p334 = pneg %p173
        $region34: #{encoder_conv_forward.1} parent=11 // pred_check_branch
          %336 = sbr.rel (%p334) target = $region36
        $region35: #{encoder_conv_forward.1} parent=11 // pred_region
          _
        $region36: #{encoder_conv_forward.1} parent=11 // pred_fallthru
          _
        // Predicated region
        $region37: #{encoder_conv_forward.1} parent=11 // pred_check
          %p337 = pneg %p194
        $region38: #{encoder_conv_forward.1} parent=11 // pred_check_branch
          %339 = sbr.rel (%p337) target = $region40
        $region39: #{encoder_conv_forward.1} parent=11 // pred_region
          _
        $region40: #{encoder_conv_forward.1} parent=11 // pred_fallthru
          _
        // Predicated region
        $region41: #{encoder_conv_forward.1} parent=11 // pred_check
          %p340 = pneg %p215
        $region42: #{encoder_conv_forward.1} parent=11 // pred_check_branch
          %342 = sbr.rel (%p340) target = $region44
        $region43: #{encoder_conv_forward.1} parent=11 // pred_region
          _
        $region44: #{encoder_conv_forward.1} parent=11 // pred_fallthru
          _
        // Predicated region
        $region45: #{encoder_conv_forward.1} parent=11 // pred_check
          %p343 = pneg %p236
        $region46: #{encoder_conv_forward.1} parent=11 // pred_check_branch
          %345 = sbr.rel (%p343) target = $region48
        $region47: #{encoder_conv_forward.1} parent=11 // pred_region
          _
        $region48: #{encoder_conv_forward.1} parent=11 // pred_fallthru
          _
        // Predicated region
        $region49: #{encoder_conv_forward.1} parent=11 // pred_check
          %p346 = pneg %p257
        $region50: #{encoder_conv_forward.1} parent=11 // pred_check_branch
          %348 = sbr.rel (%p346) target = $region52
        $region51: #{encoder_conv_forward.1} parent=11 // pred_region
          _
        $region52: #{encoder_conv_forward.1} parent=11 // pred_fallthru
          _
        // Predicated region
        $region53: #{encoder_conv_forward.1} parent=11 // pred_check
          %p349 = pneg %p278
        $region54: #{encoder_conv_forward.1} parent=11 // pred_check_branch
          %351 = sbr.rel (%p349) target = $region56
        $region55: #{encoder_conv_forward.1} parent=11 // pred_region
          _
        $region56: #{encoder_conv_forward.1} parent=11 // pred_fallthru
          _
      $region12: #{encoder_conv_forward.1} parent=5 // pred_fallthru
        _
      %p352 = scmp.lt.s32.totalorder %s21, 2
      // Predicated region
      $region57: #{encoder_conv_forward.1} parent=5 // pred_check
        %p353 = pneg %p352
      $region58: #{encoder_conv_forward.1} parent=5 // pred_check_branch
        %355 = sbr.rel (%p353) target = $region60
      $region59: #{encoder_conv_forward.1} parent=5 // pred_region
        // Predicated region
        $region61: #{encoder_conv_forward.1} parent=59 // pred_check
          %p356 = pneg %p41
        $region62: #{encoder_conv_forward.1} parent=59 // pred_check_branch
          %358 = sbr.rel (%p356) target = $region64
        $region63: #{encoder_conv_forward.1} parent=59 // pred_region
          %s359 = smul.u32 32, %s21
          %p360 = scmp.lt.s32.totalorder %s359, 63
          %s361 = scalar_select %p360, %s359, 63
          %s362 = smul.addr %s361, 8
          %s363 = scalar_lea.vmem %s0, %s362
          %s364 = smul.u32 32, %s21
        $region64: #{encoder_conv_forward.1} parent=59 // pred_fallthru
          _
      $region60: #{encoder_conv_forward.1} parent=5 // pred_fallthru
        _
      %p365 = scmp.le.s32.totalorder 1, %s21
      %p366 = scmp.lt.s32.totalorder %s21, 3
      %p367 = pnand %p365, %p366
      %p368 = pneg %p367
      // Predicated region
      $region65: #{encoder_conv_forward.1} parent=5 // pred_check
        _
      $region66: #{encoder_conv_forward.1} parent=5 // pred_check_branch
        %370 = sbr.rel (%p367) target = $region68
      $region67: #{encoder_conv_forward.1} parent=5 // pred_region
        %s371 = ssub.s32 %s21, 1
        %s372 = smul.u32 32, %s26
        %p373 = scmp.lt.s32.totalorder %s372, 63
        %s374 = scalar_select %p373, %s372, 63
        %s375 = smul.addr %s374, 8
        %s376 = scalar_lea.vmem %s0, %s375
        %p377 = pneg %p47
        %p378 = pneg %p44
        %p379 = pneg %p68
        %p380 = pneg %p65
        %p381 = pneg %p89
        %p382 = pneg %p86
        %p383 = pneg %p110
        %p384 = pneg %p107
        %p385 = pneg %p131
        %p386 = pneg %p128
        %p387 = pneg %p152
        %p388 = pneg %p149
        %p389 = pneg %p173
        %p390 = pneg %p170
        %p391 = pneg %p194
        %p392 = pneg %p191
        %p393 = pneg %p215
        %p394 = pneg %p212
        %p395 = pneg %p236
        %p396 = pneg %p233
        %p397 = pneg %p257
        %p398 = pneg %p254
        %p399 = pneg %p278
        %p400 = pneg %p275
        %p401 = pneg %p304
        %p402 = pneg %p301
        %s403 = sand.u32 %s291, 1
        %s404 = scalar_lea.sflag [#allocation11], %s403
        %s405 = sand.u32 %s291, 1
        %s406 = scalar_lea.vmem [#allocation10], %s405
        %s407 = smul.u32 32, %s26
        %p408 = scmp.lt.s32.totalorder %s407, 63
        %s409 = scalar_select %p408, %s407, 63
        %s410 = smul.addr %s409, 8
        %s411 = scalar_lea.vmem %s0, %s410
        %s412 = smul.u32 32, %s26
        %vm413 = vcmask 261120
        %414 = vst.msk [vmem:[#allocation2] sm:$0xff] %vm413, 0.0
        %vm415 = vcmask 253952
        %416 = vst.msk [vmem:[#allocation2 + $0x8] sm:$0x1] %vm415, 0.0
        %417 = vst.msk [vmem:[#allocation2 + $0x10] sm:$0xff] %vm413, 0.0
        %418 = vst.msk [vmem:[#allocation2 + $0x18] sm:$0x1] %vm415, 0.0
        %419 = vst.msk [vmem:[#allocation2 + $0x20] sm:$0xff] %vm413, 0.0
        %420 = vst.msk [vmem:[#allocation2 + $0x28] sm:$0x1] %vm415, 0.0
        %421 = vst.msk [vmem:[#allocation2 + $0x30] sm:$0xff] %vm413, 0.0
        %422 = vst.msk [vmem:[#allocation2 + $0x38] sm:$0x1] %vm415, 0.0
        %423 = vst.msk [vmem:[#allocation2 + $0x40] sm:$0xff] %vm413, 0.0
        %424 = vst.msk [vmem:[#allocation2 + $0x48] sm:$0x1] %vm415, 0.0
        %425 = vst.msk [vmem:[#allocation2 + $0x50] sm:$0xff] %vm413, 0.0
        %426 = vst.msk [vmem:[#allocation2 + $0x58] sm:$0x1] %vm415, 0.0
        %427 = vst.msk [vmem:[#allocation2 + $0x60] sm:$0xff] %vm413, 0.0
        %428 = vst.msk [vmem:[#allocation2 + $0x68] sm:$0x1] %vm415, 0.0
        %429 = vst.msk [vmem:[#allocation2 + $0x70] sm:$0xff] %vm413, 0.0
        %430 = vst.msk [vmem:[#allocation2 + $0x78] sm:$0x1] %vm415, 0.0
        %431 = vst.msk [vmem:[#allocation2 + $0x80] sm:$0xff] %vm413, 0.0
        %432 = vst.msk [vmem:[#allocation2 + $0x88] sm:$0x1] %vm415, 0.0
        %433 = vst.msk [vmem:[#allocation3] sm:$0xff] %vm413, 0.0
        %434 = vst.msk [vmem:[#allocation3 + $0x8] sm:$0x1] %vm415, 0.0
        %435 = vst.msk [vmem:[#allocation3 + $0x10] sm:$0xff] %vm413, 0.0
        %436 = vst.msk [vmem:[#allocation3 + $0x18] sm:$0x1] %vm415, 0.0
        %437 = vst.msk [vmem:[#allocation3 + $0x20] sm:$0xff] %vm413, 0.0
        %438 = vst.msk [vmem:[#allocation3 + $0x28] sm:$0x1] %vm415, 0.0
        %439 = vst.msk [vmem:[#allocation3 + $0x30] sm:$0xff] %vm413, 0.0
        %440 = vst.msk [vmem:[#allocation3 + $0x38] sm:$0x1] %vm415, 0.0
        %441 = vst.msk [vmem:[#allocation3 + $0x40] sm:$0xff] %vm413, 0.0
        %442 = vst.msk [vmem:[#allocation3 + $0x48] sm:$0x1] %vm415, 0.0
        %443 = vst.msk [vmem:[#allocation3 + $0x50] sm:$0xff] %vm413, 0.0
        %444 = vst.msk [vmem:[#allocation3 + $0x58] sm:$0x1] %vm415, 0.0
        %445 = vst.msk [vmem:[#allocation3 + $0x60] sm:$0xff] %vm413, 0.0
        %446 = vst.msk [vmem:[#allocation3 + $0x68] sm:$0x1] %vm415, 0.0
        %447 = vst.msk [vmem:[#allocation3 + $0x70] sm:$0xff] %vm413, 0.0
        %448 = vst.msk [vmem:[#allocation3 + $0x78] sm:$0x1] %vm415, 0.0
        %449 = vst.msk [vmem:[#allocation3 + $0x80] sm:$0xff] %vm413, 0.0
        %450 = vst.msk [vmem:[#allocation3 + $0x88] sm:$0x1] %vm415, 0.0
        %451 = vst.msk [vmem:[#allocation4] sm:$0xff] %vm413, 0.0
        %452 = vst.msk [vmem:[#allocation4 + $0x8] sm:$0x1] %vm415, 0.0
        %453 = vst.msk [vmem:[#allocation4 + $0x10] sm:$0xff] %vm413, 0.0
        %454 = vst.msk [vmem:[#allocation4 + $0x18] sm:$0x1] %vm415, 0.0
        %455 = vst.msk [vmem:[#allocation4 + $0x20] sm:$0xff] %vm413, 0.0
        %456 = vst.msk [vmem:[#allocation4 + $0x28] sm:$0x1] %vm415, 0.0
        %457 = vst.msk [vmem:[#allocation4 + $0x30] sm:$0xff] %vm413, 0.0
        %458 = vst.msk [vmem:[#allocation4 + $0x38] sm:$0x1] %vm415, 0.0
        %459 = vst.msk [vmem:[#allocation4 + $0x40] sm:$0xff] %vm413, 0.0
        %460 = vst.msk [vmem:[#allocation4 + $0x48] sm:$0x1] %vm415, 0.0
        %461 = vst.msk [vmem:[#allocation4 + $0x50] sm:$0xff] %vm413, 0.0
        %462 = vst.msk [vmem:[#allocation4 + $0x58] sm:$0x1] %vm415, 0.0
        %463 = vst.msk [vmem:[#allocation4 + $0x60] sm:$0xff] %vm413, 0.0
        %464 = vst.msk [vmem:[#allocation4 + $0x68] sm:$0x1] %vm415, 0.0
        %465 = vst.msk [vmem:[#allocation4 + $0x70] sm:$0xff] %vm413, 0.0
        %466 = vst.msk [vmem:[#allocation4 + $0x78] sm:$0x1] %vm415, 0.0
        %467 = vst.msk [vmem:[#allocation4 + $0x80] sm:$0xff] %vm413, 0.0
        %468 = vst.msk [vmem:[#allocation4 + $0x88] sm:$0x1] %vm415, 0.0
        %469 = vst.msk [vmem:[#allocation5] sm:$0xff] %vm413, 0.0
        %470 = vst.msk [vmem:[#allocation5 + $0x8] sm:$0x1] %vm415, 0.0
        %471 = vst.msk [vmem:[#allocation5 + $0x10] sm:$0xff] %vm413, 0.0
        %472 = vst.msk [vmem:[#allocation5 + $0x18] sm:$0x1] %vm415, 0.0
        %473 = vst.msk [vmem:[#allocation5 + $0x20] sm:$0xff] %vm413, 0.0
        %474 = vst.msk [vmem:[#allocation5 + $0x28] sm:$0x1] %vm415, 0.0
        %475 = vst.msk [vmem:[#allocation5 + $0x30] sm:$0xff] %vm413, 0.0
        %476 = vst.msk [vmem:[#allocation5 + $0x38] sm:$0x1] %vm415, 0.0
        %477 = vst.msk [vmem:[#allocation5 + $0x40] sm:$0xff] %vm413, 0.0
        %478 = vst.msk [vmem:[#allocation5 + $0x48] sm:$0x1] %vm415, 0.0
        %479 = vst.msk [vmem:[#allocation5 + $0x50] sm:$0xff] %vm413, 0.0
        %480 = vst.msk [vmem:[#allocation5 + $0x58] sm:$0x1] %vm415, 0.0
        %481 = vst.msk [vmem:[#allocation5 + $0x60] sm:$0xff] %vm413, 0.0
        %482 = vst.msk [vmem:[#allocation5 + $0x68] sm:$0x1] %vm415, 0.0
        %483 = vst.msk [vmem:[#allocation5 + $0x70] sm:$0xff] %vm413, 0.0
        %484 = vst.msk [vmem:[#allocation5 + $0x78] sm:$0x1] %vm415, 0.0
        %485 = vst.msk [vmem:[#allocation5 + $0x80] sm:$0xff] %vm413, 0.0
        %486 = vst.msk [vmem:[#allocation5 + $0x88] sm:$0x1] %vm415, 0.0
        %487 = vst.msk [vmem:[#allocation6] sm:$0xff] %vm413, 0.0
        %488 = vst.msk [vmem:[#allocation6 + $0x8] sm:$0x1] %vm415, 0.0
        %489 = vst.msk [vmem:[#allocation6 + $0x10] sm:$0xff] %vm413, 0.0
        %490 = vst.msk [vmem:[#allocation6 + $0x18] sm:$0x1] %vm415, 0.0
        %491 = vst.msk [vmem:[#allocation6 + $0x20] sm:$0xff] %vm413, 0.0
        %492 = vst.msk [vmem:[#allocation6 + $0x28] sm:$0x1] %vm415, 0.0
        %493 = vst.msk [vmem:[#allocation6 + $0x30] sm:$0xff] %vm413, 0.0
        %494 = vst.msk [vmem:[#allocation6 + $0x38] sm:$0x1] %vm415, 0.0
        %495 = vst.msk [vmem:[#allocation6 + $0x40] sm:$0xff] %vm413, 0.0
        %496 = vst.msk [vmem:[#allocation6 + $0x48] sm:$0x1] %vm415, 0.0
        %497 = vst.msk [vmem:[#allocation7] sm:$0xff] %vm413, 0.0
        %498 = vst.msk [vmem:[#allocation7 + $0x8] sm:$0x1] %vm415, 0.0
        %499 = vst.msk [vmem:[#allocation7 + $0x10] sm:$0xff] %vm413, 0.0
        %500 = vst.msk [vmem:[#allocation7 + $0x18] sm:$0x1] %vm415, 0.0
        %501 = vst.msk [vmem:[#allocation7 + $0x20] sm:$0xff] %vm413, 0.0
        %502 = vst.msk [vmem:[#allocation7 + $0x28] sm:$0x1] %vm415, 0.0
        %503 = vst.msk [vmem:[#allocation7 + $0x30] sm:$0xff] %vm413, 0.0
        %504 = vst.msk [vmem:[#allocation7 + $0x38] sm:$0x1] %vm415, 0.0
        %505 = vst.msk [vmem:[#allocation7 + $0x40] sm:$0xff] %vm413, 0.0
        %506 = vst.msk [vmem:[#allocation7 + $0x48] sm:$0x1] %vm415, 0.0
        %507 = vst.msk [vmem:[#allocation8] sm:$0xff] %vm413, 0.0
        %508 = vst.msk [vmem:[#allocation8 + $0x8] sm:$0x1] %vm415, 0.0
        %509 = vst.msk [vmem:[#allocation8 + $0x10] sm:$0xff] %vm413, 0.0
        %510 = vst.msk [vmem:[#allocation8 + $0x18] sm:$0x1] %vm415, 0.0
        %511 = vst.msk [vmem:[#allocation8 + $0x20] sm:$0xff] %vm413, 0.0
        %512 = vst.msk [vmem:[#allocation8 + $0x28] sm:$0x1] %vm415, 0.0
        %513 = vst.msk [vmem:[#allocation8 + $0x30] sm:$0xff] %vm413, 0.0
        %514 = vst.msk [vmem:[#allocation8 + $0x38] sm:$0x1] %vm415, 0.0
        %515 = vst.msk [vmem:[#allocation8 + $0x40] sm:$0xff] %vm413, 0.0
        %516 = vst.msk [vmem:[#allocation8 + $0x48] sm:$0x1] %vm415, 0.0
        %517 = vst.msk [vmem:[#allocation9] sm:$0xff] %vm413, 0.0
        %518 = vst.msk [vmem:[#allocation9 + $0x8] sm:$0x1] %vm415, 0.0
        %519 = vst.msk [vmem:[#allocation9 + $0x10] sm:$0xff] %vm413, 0.0
        %520 = vst.msk [vmem:[#allocation9 + $0x18] sm:$0x1] %vm415, 0.0
        %521 = vst.msk [vmem:[#allocation9 + $0x20] sm:$0xff] %vm413, 0.0
        %522 = vst.msk [vmem:[#allocation9 + $0x28] sm:$0x1] %vm415, 0.0
        %523 = vst.msk [vmem:[#allocation9 + $0x30] sm:$0xff] %vm413, 0.0
        %524 = vst.msk [vmem:[#allocation9 + $0x38] sm:$0x1] %vm415, 0.0
        %525 = vst.msk [vmem:[#allocation9 + $0x40] sm:$0xff] %vm413, 0.0
        %526 = vst.msk [vmem:[#allocation9 + $0x48] sm:$0x1] %vm415, 0.0
        %v527 = vld [vmem:[%s411] sm:$0xff]
        %v528 = vld [vmem:[%s411 + $0x8] sm:$0xff]
        %v529 = vld [vmem:[%s411 + $0x10] sm:$0xff]
        %v530 = vld [vmem:[%s411 + $0x18] sm:$0xff]
        %v531 = vld [vmem:[%s411 + $0x20] sm:$0xff]
        %v532 = vld [vmem:[%s411 + $0x28] sm:$0xff]
        %v533 = vld [vmem:[%s411 + $0x30] sm:$0xff]
        %v534 = vld [vmem:[%s411 + $0x38] sm:$0xff]
        %v535 = vld [vmem:[%s411 + $0x40] sm:$0xff]
        %v536 = vld [vmem:[%s411 + $0x48] sm:$0xff]
        %v537 = vld [vmem:[%s411 + $0x50] sm:$0xff]
        %v538 = vld [vmem:[%s411 + $0x58] sm:$0xff]
        %v539 = vld [vmem:[%s411 + $0x60] sm:$0xff]
        %v540 = vld [vmem:[%s411 + $0x68] sm:$0xff]
        %v541 = vld [vmem:[%s411 + $0x70] sm:$0xff]
        %v542 = vld [vmem:[%s411 + $0x78] sm:$0xff]
        %v543 = vld [vmem:[%s411 + $0x80] sm:$0xff]
        %v544 = vld [vmem:[%s411 + $0x88] sm:$0xff]
        %v545 = vld [vmem:[%s411 + $0x90] sm:$0xff]
        %v546 = vld [vmem:[%s411 + $0x98] sm:$0xff]
        %v547 = vld [vmem:[%s411 + $0xa0] sm:$0xff]
        %v548 = vld [vmem:[%s411 + $0xa8] sm:$0xff]
        %v549 = vld [vmem:[%s411 + $0xb0] sm:$0xff]
        %v550 = vld [vmem:[%s411 + $0xb8] sm:$0xff]
        %v551 = vld [vmem:[%s411 + $0xc0] sm:$0xff]
        %v552 = vld [vmem:[%s411 + $0xc8] sm:$0xff]
        %v553 = vld [vmem:[%s411 + $0xd0] sm:$0xff]
        %v554 = vld [vmem:[%s411 + $0xd8] sm:$0xff]
        %v555 = vld [vmem:[%s411 + $0xe0] sm:$0xff]
        %v556 = vld [vmem:[%s411 + $0xe8] sm:$0xff]
        %v557 = vld [vmem:[%s411 + $0xf0] sm:$0xff]
        %v558 = vld [vmem:[%s411 + $0xf8] sm:$0xff]
        %v559 = vld [vmem:[%s1] sm:$0xff]
        %v560 = vld [vmem:[%s1 + $0x8] sm:$0xff]
        %v561 = vld [vmem:[%s1 + $0x10] sm:$0xff]
        %v562 = vld [vmem:[%s1 + $0x18] sm:$0xff]
        %v563 = vld [vmem:[%s1 + $0x20] sm:$0xff]
        %v564 = vld [vmem:[%s1 + $0x28] sm:$0xff]
        %v565 = vld [vmem:[%s2] sm:$0x1]
        %v567 = vlaneseq
        %v568 = vshrl.u32 %v567, 7
        %v569 = vsub.s32 0, %v568
        %v570 = vrot.slane %v565, %v569
        %vm572 = vcmask 392192
        %v574 = vsel %vm572, %v527, 0
        %v577 = vsel %vm572, %v528, 0
        %v580 = vsel %vm572, %v529, 0
        %v583 = vsel %vm572, %v530, 0
        %v586 = vsel %vm572, %v531, 0
        %v589 = vsel %vm572, %v532, 0
        %v592 = vsel %vm572, %v533, 0
        %v595 = vsel %vm572, %v534, 0
        %v598 = vsel %vm572, %v535, 0
        %v601 = vsel %vm572, %v536, 0
        %v604 = vsel %vm572, %v537, 0
        %v607 = vsel %vm572, %v538, 0
        %v610 = vsel %vm572, %v539, 0
        %v613 = vsel %vm572, %v540, 0
        %v616 = vsel %vm572, %v541, 0
        %v619 = vsel %vm572, %v542, 0
        %v622 = vsel %vm572, %v543, 0
        %v625 = vsel %vm572, %v544, 0
        %v628 = vsel %vm572, %v545, 0
        %v631 = vsel %vm572, %v546, 0
        %v634 = vsel %vm572, %v547, 0
        %v637 = vsel %vm572, %v548, 0
        %v640 = vsel %vm572, %v549, 0
        %v643 = vsel %vm572, %v550, 0
        %v646 = vsel %vm572, %v551, 0
        %v649 = vsel %vm572, %v552, 0
        %v652 = vsel %vm572, %v553, 0
        %v655 = vsel %vm572, %v554, 0
        %v658 = vsel %vm572, %v555, 0
        %v661 = vsel %vm572, %v556, 0
        %v664 = vsel %vm572, %v557, 0
        %v667 = vsel %vm572, %v558, 0
        %669 = vmatprep.subr.mxu0 0.0
        %670 = vmatpush1.msra.mxu0 0.0
        %671 = vmatprep.subr.mxu0 0.0
        %672 = vmatpush1.msra.mxu0 0.0
        %673 = vmatprep.subr.mxu0 0.0
        %674 = vmatpush1.msra.mxu0 0.0
        %675 = vmatprep.subr.mxu0 0.0
        %676 = vmatpush1.msra.mxu0 0.0
        %677 = vmatprep.subr.mxu0 0.0
        %678 = vmatpush1.msra.mxu0 0.0
        %679 = vmatprep.subr.mxu0 0.0
        %680 = vmatpush1.msra.mxu0 0.0
        %681 = vmatprep.subr.mxu0 0.0
        %682 = vmatpush1.msra.mxu0 0.0
        %683 = vmatprep.subr.mxu0 0.0
        %684 = vmatpush1.msra.mxu0 0.0
        %685 = vmatprep.subr.mxu0 0.0
        %686 = vmatpush1.msra.mxu0 0.0
        %687 = vmatprep.subr.mxu0 0.0
        %688 = vmatpush1.msra.mxu0 0.0
        %689 = vmatprep.subr.mxu0 0.0
        %690 = vmatpush1.msra.mxu0 %v564
        %691 = vmatprep.subr.mxu0 0.0
        %692 = vmatpush1.msra.mxu0 %v563
        %693 = vmatprep.subr.mxu0 0.0
        %694 = vmatpush1.msra.mxu0 %v562
        %695 = vmatprep.subr.mxu0 0.0
        %696 = vmatpush1.msra.mxu0 %v561
        %697 = vmatprep.subr.mxu0 0.0
        %698 = vmatpush1.msra.mxu0 %v560
        %699 = vmatprep.subr.mxu0 0.0
        %700 = vmatpush1.msra.mxu0 %v559
        %701 = vmatprep.subr.mxu0 0.0
        %702 = vmatpush2.msra.mxu0 0.0
        %703 = vmatprep.subr.mxu0 0.0
        %704 = vmatpush2.msra.mxu0 0.0
        %705 = vmatprep.subr.mxu0 0.0
        %706 = vmatpush2.msra.mxu0 0.0
        %707 = vmatprep.subr.mxu0 0.0
        %708 = vmatpush2.msra.mxu0 0.0
        %709 = vmatprep.subr.mxu0 0.0
        %710 = vmatpush2.msra.mxu0 0.0
        %711 = vmatprep.subr.mxu0 0.0
        %712 = vmatpush2.msra.mxu0 0.0
        %713 = vmatprep.subr.mxu0 0.0
        %714 = vmatpush2.msra.mxu0 0.0
        %715 = vmatprep.subr.mxu0 0.0
        %716 = vmatpush2.msra.mxu0 0.0
        %717 = vmatprep.subr.mxu0 0.0
        %718 = vmatpush2.msra.mxu0 0.0
        %719 = vmatprep.subr.mxu0 0.0
        %720 = vmatpush2.msra.mxu0 0.0
        %721 = vmatprep.subr.mxu0 0.0
        %722 = vmatpush2.msra.mxu0 0.0
        %723 = vmatprep.subr.mxu0 0.0
        %724 = vmatpush2.msra.mxu0 0.0
        %725 = vmatprep.subr.mxu0 0.0
        %726 = vmatpush2.msra.mxu0 0.0
        %727 = vmatprep.subr.mxu0 0.0
        %728 = vmatpush2.msra.mxu0 0.0
        %729 = vmatprep.subr.mxu0 0.0
        %730 = vmatpush2.msra.mxu0 0.0
        %731 = vmatprep.subr.mxu0 0.0
        %732 = vmatpush2.msra.mxu0 0.0
        %733 = vmatprep.mubr.f32.mxu0 0.0
        %734 = vmatmul.mubr.f32.gmra.mxu0 %v574
        %v735 = vpop.f32.mrf.mxu0
        %v736 = vadd.f32 %v570, %v735
        %v737 = vpop.f32.mrf.mxu0
        %738 = vmatprep.mubr.f32.mxu0 0.0
        %739 = vmatmul.mubr.f32.gmra.mxu0 %v577
        %v740 = vpop.f32.mrf.mxu0
        %v741 = vadd.f32 %v570, %v740
        %v742 = vpop.f32.mrf.mxu0
        %743 = vmatprep.mubr.f32.mxu0 0.0
        %744 = vmatmul.mubr.f32.gmra.mxu0 %v580
        %v745 = vpop.f32.mrf.mxu0
        %v746 = vadd.f32 %v570, %v745
        %v747 = vpop.f32.mrf.mxu0
        %748 = vmatprep.mubr.f32.mxu0 0.0
        %749 = vmatmul.mubr.f32.gmra.mxu0 %v583
        %v750 = vpop.f32.mrf.mxu0
        %v751 = vadd.f32 %v570, %v750
        %v752 = vpop.f32.mrf.mxu0
        %753 = vmatprep.mubr.f32.mxu0 0.0
        %754 = vmatmul.mubr.f32.gmra.mxu0 %v586
        %v755 = vpop.f32.mrf.mxu0
        %v756 = vadd.f32 %v570, %v755
        %v757 = vpop.f32.mrf.mxu0
        %758 = vmatprep.mubr.f32.mxu0 0.0
        %759 = vmatmul.mubr.f32.gmra.mxu0 %v589
        %v760 = vpop.f32.mrf.mxu0
        %v761 = vadd.f32 %v570, %v760
        %v762 = vpop.f32.mrf.mxu0
        %763 = vmatprep.mubr.f32.mxu0 0.0
        %764 = vmatmul.mubr.f32.gmra.mxu0 %v592
        %v765 = vpop.f32.mrf.mxu0
        %v766 = vadd.f32 %v570, %v765
        %v767 = vpop.f32.mrf.mxu0
        %768 = vmatprep.mubr.f32.mxu0 0.0
        %769 = vmatmul.mubr.f32.gmra.mxu0 %v595
        %v770 = vpop.f32.mrf.mxu0
        %v771 = vadd.f32 %v570, %v770
        %v772 = vpop.f32.mrf.mxu0
        %773 = vmatprep.mubr.f32.mxu0 0.0
        %774 = vmatmul.mubr.f32.gmra.mxu0 %v598
        %v775 = vpop.f32.mrf.mxu0
        %v776 = vadd.f32 %v570, %v775
        %v777 = vpop.f32.mrf.mxu0
        %778 = vmatprep.mubr.f32.mxu0 0.0
        %779 = vmatmul.mubr.f32.gmra.mxu0 %v601
        %v780 = vpop.f32.mrf.mxu0
        %v781 = vadd.f32 %v570, %v780
        %v782 = vpop.f32.mrf.mxu0
        %783 = vmatprep.mubr.f32.mxu0 0.0
        %784 = vmatmul.mubr.f32.gmra.mxu0 %v604
        %v785 = vpop.f32.mrf.mxu0
        %v786 = vadd.f32 %v570, %v785
        %v787 = vpop.f32.mrf.mxu0
        %788 = vmatprep.mubr.f32.mxu0 0.0
        %789 = vmatmul.mubr.f32.gmra.mxu0 %v607
        %v790 = vpop.f32.mrf.mxu0
        %v791 = vadd.f32 %v570, %v790
        %v792 = vpop.f32.mrf.mxu0
        %793 = vmatprep.mubr.f32.mxu0 0.0
        %794 = vmatmul.mubr.f32.gmra.mxu0 %v610
        %v795 = vpop.f32.mrf.mxu0
        %v796 = vadd.f32 %v570, %v795
        %v797 = vpop.f32.mrf.mxu0
        %798 = vmatprep.mubr.f32.mxu0 0.0
        %799 = vmatmul.mubr.f32.gmra.mxu0 %v613
        %v800 = vpop.f32.mrf.mxu0
        %v801 = vadd.f32 %v570, %v800
        %v802 = vpop.f32.mrf.mxu0
        %803 = vmatprep.mubr.f32.mxu0 0.0
        %804 = vmatmul.mubr.f32.gmra.mxu0 %v616
        %v805 = vpop.f32.mrf.mxu0
        %v806 = vadd.f32 %v570, %v805
        %v807 = vpop.f32.mrf.mxu0
        %808 = vmatprep.mubr.f32.mxu0 0.0
        %809 = vmatmul.mubr.f32.gmra.mxu0 %v619
        %v810 = vpop.f32.mrf.mxu0
        %v811 = vadd.f32 %v570, %v810
        %v812 = vpop.f32.mrf.mxu0
        %813 = vmatprep.mubr.f32.mxu0 0.0
        %814 = vmatmul.mubr.f32.gmra.mxu0 %v622
        %v815 = vpop.f32.mrf.mxu0
        %v816 = vadd.f32 %v570, %v815
        %v817 = vpop.f32.mrf.mxu0
        %818 = vmatprep.mubr.f32.mxu0 0.0
        %819 = vmatmul.mubr.f32.gmra.mxu0 %v625
        %v820 = vpop.f32.mrf.mxu0
        %v821 = vadd.f32 %v570, %v820
        %v822 = vpop.f32.mrf.mxu0
        %823 = vmatprep.mubr.f32.mxu0 0.0
        %824 = vmatmul.mubr.f32.gmra.mxu0 %v628
        %v825 = vpop.f32.mrf.mxu0
        %v826 = vadd.f32 %v570, %v825
        %v827 = vpop.f32.mrf.mxu0
        %828 = vmatprep.mubr.f32.mxu0 0.0
        %829 = vmatmul.mubr.f32.gmra.mxu0 %v631
        %v830 = vpop.f32.mrf.mxu0
        %v831 = vadd.f32 %v570, %v830
        %v832 = vpop.f32.mrf.mxu0
        %833 = vmatprep.mubr.f32.mxu0 0.0
        %834 = vmatmul.mubr.f32.gmra.mxu0 %v634
        %v835 = vpop.f32.mrf.mxu0
        %v836 = vadd.f32 %v570, %v835
        %v837 = vpop.f32.mrf.mxu0
        %838 = vmatprep.mubr.f32.mxu0 0.0
        %839 = vmatmul.mubr.f32.gmra.mxu0 %v637
        %v840 = vpop.f32.mrf.mxu0
        %v841 = vadd.f32 %v570, %v840
        %v842 = vpop.f32.mrf.mxu0
        %843 = vmatprep.mubr.f32.mxu0 0.0
        %844 = vmatmul.mubr.f32.gmra.mxu0 %v640
        %v845 = vpop.f32.mrf.mxu0
        %v846 = vadd.f32 %v570, %v845
        %v847 = vpop.f32.mrf.mxu0
        %848 = vmatprep.mubr.f32.mxu0 0.0
        %849 = vmatmul.mubr.f32.gmra.mxu0 %v643
        %v850 = vpop.f32.mrf.mxu0
        %v851 = vadd.f32 %v570, %v850
        %v852 = vpop.f32.mrf.mxu0
        %853 = vmatprep.mubr.f32.mxu0 0.0
        %854 = vmatmul.mubr.f32.gmra.mxu0 %v646
        %v855 = vpop.f32.mrf.mxu0
        %v856 = vadd.f32 %v570, %v855
        %v857 = vpop.f32.mrf.mxu0
        %858 = vmatprep.mubr.f32.mxu0 0.0
        %859 = vmatmul.mubr.f32.gmra.mxu0 %v649
        %v860 = vpop.f32.mrf.mxu0
        %v861 = vadd.f32 %v570, %v860
        %v862 = vpop.f32.mrf.mxu0
        %863 = vmatprep.mubr.f32.mxu0 0.0
        %864 = vmatmul.mubr.f32.gmra.mxu0 %v652
        %v865 = vpop.f32.mrf.mxu0
        %v866 = vadd.f32 %v570, %v865
        %v867 = vpop.f32.mrf.mxu0
        %868 = vmatprep.mubr.f32.mxu0 0.0
        %869 = vmatmul.mubr.f32.gmra.mxu0 %v655
        %v870 = vpop.f32.mrf.mxu0
        %v871 = vadd.f32 %v570, %v870
        %v872 = vpop.f32.mrf.mxu0
        %873 = vmatprep.mubr.f32.mxu0 0.0
        %874 = vmatmul.mubr.f32.gmra.mxu0 %v658
        %v875 = vpop.f32.mrf.mxu0
        %v876 = vadd.f32 %v570, %v875
        %v877 = vpop.f32.mrf.mxu0
        %878 = vmatprep.mubr.f32.mxu0 0.0
        %879 = vmatmul.mubr.f32.gmra.mxu0 %v661
        %v880 = vpop.f32.mrf.mxu0
        %v881 = vadd.f32 %v570, %v880
        %v882 = vpop.f32.mrf.mxu0
        %883 = vmatprep.mubr.f32.mxu0 0.0
        %884 = vmatmul.mubr.f32.gmra.mxu0 %v664
        %v885 = vpop.f32.mrf.mxu0
        %v886 = vadd.f32 %v570, %v885
        %v887 = vpop.f32.mrf.mxu0
        %888 = vmatprep.mubr.f32.mxu0 0.0
        %889 = vmatmul.mubr.f32.gmra.mxu0 %v667
        %v890 = vpop.f32.mrf.mxu0
        %v891 = vadd.f32 %v570, %v890
        %v892 = vpop.f32.mrf.mxu0
        %893 = vdwg.mxu0
        %v894 = vmax.f32 %v736, 0.0
        %v895 = vmax.f32 %v741, 0.0
        %v896 = vmax.f32 %v746, 0.0
        %v897 = vmax.f32 %v751, 0.0
        %v898 = vmax.f32 %v756, 0.0
        %v899 = vmax.f32 %v761, 0.0
        %v900 = vmax.f32 %v766, 0.0
        %v901 = vmax.f32 %v771, 0.0
        %v902 = vmax.f32 %v776, 0.0
        %v903 = vmax.f32 %v781, 0.0
        %v904 = vmax.f32 %v786, 0.0
        %v905 = vmax.f32 %v791, 0.0
        %v906 = vmax.f32 %v796, 0.0
        %v907 = vmax.f32 %v801, 0.0
        %v908 = vmax.f32 %v806, 0.0
        %v909 = vmax.f32 %v811, 0.0
        %v910 = vmax.f32 %v816, 0.0
        %v911 = vmax.f32 %v821, 0.0
        %v912 = vmax.f32 %v826, 0.0
        %v913 = vmax.f32 %v831, 0.0
        %v914 = vmax.f32 %v836, 0.0
        %v915 = vmax.f32 %v841, 0.0
        %v916 = vmax.f32 %v846, 0.0
        %v917 = vmax.f32 %v851, 0.0
        %v918 = vmax.f32 %v856, 0.0
        %v919 = vmax.f32 %v861, 0.0
        %v920 = vmax.f32 %v866, 0.0
        %v921 = vmax.f32 %v871, 0.0
        %v922 = vmax.f32 %v876, 0.0
        %v923 = vmax.f32 %v881, 0.0
        %v924 = vmax.f32 %v886, 0.0
        %v925 = vmax.f32 %v891, 0.0
        %s926 = scalar_lea.vmem [#allocation2], 16
        %927 = vst.msk [vmem:[%s926 + $0x1] sm:$0xff] %vm413, %v894
        %928 = vst.msk [vmem:[%s926 + $0x11] sm:$0xff] %vm413, %v895
        %929 = vst.msk [vmem:[%s926 + $0x21] sm:$0xff] %vm413, %v896
        %930 = vst.msk [vmem:[%s926 + $0x31] sm:$0xff] %vm413, %v897
        %931 = vst.msk [vmem:[%s926 + $0x41] sm:$0xff] %vm413, %v898
        %932 = vst.msk [vmem:[%s926 + $0x51] sm:$0xff] %vm413, %v899
        %933 = vst.msk [vmem:[%s926 + $0x61] sm:$0xff] %vm413, %v900
        %934 = vst.msk [vmem:[%s926 + $0x71] sm:$0xff] %vm413, %v901
        %s935 = scalar_lea.vmem [#allocation3], 16
        %936 = vst.msk [vmem:[%s935] sm:$0xff] %vm413, %v902
        %937 = vst.msk [vmem:[%s935 + $0x10] sm:$0xff] %vm413, %v903
        %938 = vst.msk [vmem:[%s935 + $0x20] sm:$0xff] %vm413, %v904
        %939 = vst.msk [vmem:[%s935 + $0x30] sm:$0xff] %vm413, %v905
        %940 = vst.msk [vmem:[%s935 + $0x40] sm:$0xff] %vm413, %v906
        %941 = vst.msk [vmem:[%s935 + $0x50] sm:$0xff] %vm413, %v907
        %942 = vst.msk [vmem:[%s935 + $0x60] sm:$0xff] %vm413, %v908
        %943 = vst.msk [vmem:[%s935 + $0x70] sm:$0xff] %vm413, %v909
        %944 = vst.msk [vmem:[#allocation4 + $0x1] sm:$0xff] %vm413, %v910
        %945 = vst.msk [vmem:[#allocation4 + $0x11] sm:$0xff] %vm413, %v911
        %946 = vst.msk [vmem:[#allocation4 + $0x21] sm:$0xff] %vm413, %v912
        %947 = vst.msk [vmem:[#allocation4 + $0x31] sm:$0xff] %vm413, %v913
        %948 = vst.msk [vmem:[#allocation4 + $0x41] sm:$0xff] %vm413, %v914
        %949 = vst.msk [vmem:[#allocation4 + $0x51] sm:$0xff] %vm413, %v915
        %950 = vst.msk [vmem:[#allocation4 + $0x61] sm:$0xff] %vm413, %v916
        %951 = vst.msk [vmem:[#allocation4 + $0x71] sm:$0xff] %vm413, %v917
        %952 = vst.msk [vmem:[#allocation5] sm:$0xff] %vm413, %v918
        %953 = vst.msk [vmem:[#allocation5 + $0x10] sm:$0xff] %vm413, %v919
        %954 = vst.msk [vmem:[#allocation5 + $0x20] sm:$0xff] %vm413, %v920
        %955 = vst.msk [vmem:[#allocation5 + $0x30] sm:$0xff] %vm413, %v921
        %956 = vst.msk [vmem:[#allocation5 + $0x40] sm:$0xff] %vm413, %v922
        %957 = vst.msk [vmem:[#allocation5 + $0x50] sm:$0xff] %vm413, %v923
        %958 = vst.msk [vmem:[#allocation5 + $0x60] sm:$0xff] %vm413, %v924
        %959 = vst.msk [vmem:[#allocation5 + $0x70] sm:$0xff] %vm413, %v925
        %v960 = vld [vmem:[#allocation2] sm:$0xff]
        %v961 = vld [vmem:[#allocation2 + $0x10] sm:$0xff]
        %v962 = vld [vmem:[#allocation2 + $0x20] sm:$0xff]
        %v963 = vld [vmem:[#allocation2 + $0x30] sm:$0xff]
        %v964 = vld [vmem:[#allocation2 + $0x40] sm:$0xff]
        %v965 = vld [vmem:[#allocation2 + $0x50] sm:$0xff]
        %v966 = vld [vmem:[#allocation2 + $0x60] sm:$0xff]
        %v967 = vld [vmem:[#allocation2 + $0x70] sm:$0xff]
        %v968 = vld [vmem:[#allocation3] sm:$0xff]
        %v969 = vld [vmem:[#allocation3 + $0x10] sm:$0xff]
        %v970 = vld [vmem:[#allocation3 + $0x20] sm:$0xff]
        %v971 = vld [vmem:[#allocation3 + $0x30] sm:$0xff]
        %v972 = vld [vmem:[#allocation3 + $0x40] sm:$0xff]
        %v973 = vld [vmem:[#allocation3 + $0x50] sm:$0xff]
        %v974 = vld [vmem:[#allocation3 + $0x60] sm:$0xff]
        %v975 = vld [vmem:[#allocation3 + $0x70] sm:$0xff]
        %v976 = vld [vmem:[#allocation2 + $0x1] sm:$0xff]
        %v977 = vld [vmem:[#allocation2 + $0x11] sm:$0xff]
        %v978 = vld [vmem:[#allocation2 + $0x21] sm:$0xff]
        %v979 = vld [vmem:[#allocation2 + $0x31] sm:$0xff]
        %v980 = vld [vmem:[#allocation2 + $0x41] sm:$0xff]
        %v981 = vld [vmem:[#allocation2 + $0x51] sm:$0xff]
        %v982 = vld [vmem:[#allocation2 + $0x61] sm:$0xff]
        %v983 = vld [vmem:[#allocation2 + $0x71] sm:$0xff]
        %v984 = vld [vmem:[#allocation3 + $0x1] sm:$0xff]
        %v985 = vld [vmem:[#allocation3 + $0x11] sm:$0xff]
        %v986 = vld [vmem:[#allocation3 + $0x21] sm:$0xff]
        %v987 = vld [vmem:[#allocation3 + $0x31] sm:$0xff]
        %v988 = vld [vmem:[#allocation3 + $0x41] sm:$0xff]
        %v989 = vld [vmem:[#allocation3 + $0x51] sm:$0xff]
        %v990 = vld [vmem:[#allocation3 + $0x61] sm:$0xff]
        %v991 = vld [vmem:[#allocation3 + $0x71] sm:$0xff]
        %v992 = vld [vmem:[#allocation4] sm:$0xff]
        %v993 = vld [vmem:[#allocation4 + $0x10] sm:$0xff]
        %v994 = vld [vmem:[#allocation4 + $0x20] sm:$0xff]
        %v995 = vld [vmem:[#allocation4 + $0x30] sm:$0xff]
        %v996 = vld [vmem:[#allocation4 + $0x40] sm:$0xff]
        %v997 = vld [vmem:[#allocation4 + $0x50] sm:$0xff]
        %v998 = vld [vmem:[#allocation4 + $0x60] sm:$0xff]
        %v999 = vld [vmem:[#allocation4 + $0x70] sm:$0xff]
        %v1000 = vld [vmem:[#allocation5] sm:$0xff]
        %v1001 = vld [vmem:[#allocation5 + $0x10] sm:$0xff]
        %v1002 = vld [vmem:[#allocation5 + $0x20] sm:$0xff]
        %v1003 = vld [vmem:[#allocation5 + $0x30] sm:$0xff]
        %v1004 = vld [vmem:[#allocation5 + $0x40] sm:$0xff]
        %v1005 = vld [vmem:[#allocation5 + $0x50] sm:$0xff]
        %v1006 = vld [vmem:[#allocation5 + $0x60] sm:$0xff]
        %v1007 = vld [vmem:[#allocation5 + $0x70] sm:$0xff]
        %v1008 = vld [vmem:[#allocation4 + $0x1] sm:$0xff]
        %v1009 = vld [vmem:[#allocation4 + $0x11] sm:$0xff]
        %v1010 = vld [vmem:[#allocation4 + $0x21] sm:$0xff]
        %v1011 = vld [vmem:[#allocation4 + $0x31] sm:$0xff]
        %v1012 = vld [vmem:[#allocation4 + $0x41] sm:$0xff]
        %v1013 = vld [vmem:[#allocation4 + $0x51] sm:$0xff]
        %v1014 = vld [vmem:[#allocation4 + $0x61] sm:$0xff]
        %v1015 = vld [vmem:[#allocation4 + $0x71] sm:$0xff]
        %v1016 = vld [vmem:[#allocation5 + $0x1] sm:$0xff]
        %v1017 = vld [vmem:[#allocation5 + $0x11] sm:$0xff]
        %v1018 = vld [vmem:[#allocation5 + $0x21] sm:$0xff]
        %v1019 = vld [vmem:[#allocation5 + $0x31] sm:$0xff]
        %v1020 = vld [vmem:[#allocation5 + $0x41] sm:$0xff]
        %v1021 = vld [vmem:[#allocation5 + $0x51] sm:$0xff]
        %v1022 = vld [vmem:[#allocation5 + $0x61] sm:$0xff]
        %v1023 = vld [vmem:[#allocation5 + $0x71] sm:$0xff]
        %v1024 = vld [vmem:[%s926] sm:$0xff]
        %v1025 = vld [vmem:[%s926 + $0x10] sm:$0xff]
        %v1026 = vld [vmem:[%s926 + $0x20] sm:$0xff]
        %v1027 = vld [vmem:[%s926 + $0x30] sm:$0xff]
        %v1028 = vld [vmem:[%s926 + $0x40] sm:$0xff]
        %v1029 = vld [vmem:[%s926 + $0x50] sm:$0xff]
        %v1030 = vld [vmem:[%s926 + $0x60] sm:$0xff]
        %v1031 = vld [vmem:[%s926 + $0x70] sm:$0xff]
        %v1032 = vld [vmem:[%s935] sm:$0xff]
        %v1033 = vld [vmem:[%s935 + $0x10] sm:$0xff]
        %v1034 = vld [vmem:[%s935 + $0x20] sm:$0xff]
        %v1035 = vld [vmem:[%s935 + $0x30] sm:$0xff]
        %v1036 = vld [vmem:[%s935 + $0x40] sm:$0xff]
        %v1037 = vld [vmem:[%s935 + $0x50] sm:$0xff]
        %v1038 = vld [vmem:[%s935 + $0x60] sm:$0xff]
        %v1039 = vld [vmem:[%s935 + $0x70] sm:$0xff]
        %v1040 = vld [vmem:[%s926 + $0x1] sm:$0xff]
        %v1041 = vld [vmem:[%s926 + $0x11] sm:$0xff]
        %v1042 = vld [vmem:[%s926 + $0x21] sm:$0xff]
        %v1043 = vld [vmem:[%s926 + $0x31] sm:$0xff]
        %v1044 = vld [vmem:[%s926 + $0x41] sm:$0xff]
        %v1045 = vld [vmem:[%s926 + $0x51] sm:$0xff]
        %v1046 = vld [vmem:[%s926 + $0x61] sm:$0xff]
        %v1047 = vld [vmem:[%s926 + $0x71] sm:$0xff]
        %v1048 = vld [vmem:[%s935 + $0x1] sm:$0xff]
        %v1049 = vld [vmem:[%s935 + $0x11] sm:$0xff]
        %v1050 = vld [vmem:[%s935 + $0x21] sm:$0xff]
        %v1051 = vld [vmem:[%s935 + $0x31] sm:$0xff]
        %v1052 = vld [vmem:[%s935 + $0x41] sm:$0xff]
        %v1053 = vld [vmem:[%s935 + $0x51] sm:$0xff]
        %v1054 = vld [vmem:[%s935 + $0x61] sm:$0xff]
        %v1055 = vld [vmem:[%s935 + $0x71] sm:$0xff]
        %s1056 = scalar_lea.vmem [#allocation4], 16
        %v1057 = vld [vmem:[%s1056] sm:$0xff]
        %v1058 = vld [vmem:[%s1056 + $0x10] sm:$0xff]
        %v1059 = vld [vmem:[%s1056 + $0x20] sm:$0xff]
        %v1060 = vld [vmem:[%s1056 + $0x30] sm:$0xff]
        %v1061 = vld [vmem:[%s1056 + $0x40] sm:$0xff]
        %v1062 = vld [vmem:[%s1056 + $0x50] sm:$0xff]
        %v1063 = vld [vmem:[%s1056 + $0x60] sm:$0xff]
        %v1064 = vld [vmem:[%s1056 + $0x70] sm:$0xff]
        %s1065 = scalar_lea.vmem [#allocation5], 16
        %v1066 = vld [vmem:[%s1065] sm:$0xff]
        %v1067 = vld [vmem:[%s1065 + $0x10] sm:$0xff]
        %v1068 = vld [vmem:[%s1065 + $0x20] sm:$0xff]
        %v1069 = vld [vmem:[%s1065 + $0x30] sm:$0xff]
        %v1070 = vld [vmem:[%s1065 + $0x40] sm:$0xff]
        %v1071 = vld [vmem:[%s1065 + $0x50] sm:$0xff]
        %v1072 = vld [vmem:[%s1065 + $0x60] sm:$0xff]
        %v1073 = vld [vmem:[%s1065 + $0x70] sm:$0xff]
        %v1074 = vld [vmem:[%s1056 + $0x1] sm:$0xff]
        %v1075 = vld [vmem:[%s1056 + $0x11] sm:$0xff]
        %v1076 = vld [vmem:[%s1056 + $0x21] sm:$0xff]
        %v1077 = vld [vmem:[%s1056 + $0x31] sm:$0xff]
        %v1078 = vld [vmem:[%s1056 + $0x41] sm:$0xff]
        %v1079 = vld [vmem:[%s1056 + $0x51] sm:$0xff]
        %v1080 = vld [vmem:[%s1056 + $0x61] sm:$0xff]
        %v1081 = vld [vmem:[%s1056 + $0x71] sm:$0xff]
        %v1082 = vld [vmem:[%s1065 + $0x1] sm:$0xff]
        %v1083 = vld [vmem:[%s1065 + $0x11] sm:$0xff]
        %v1084 = vld [vmem:[%s1065 + $0x21] sm:$0xff]
        %v1085 = vld [vmem:[%s1065 + $0x31] sm:$0xff]
        %v1086 = vld [vmem:[%s1065 + $0x41] sm:$0xff]
        %v1087 = vld [vmem:[%s1065 + $0x51] sm:$0xff]
        %v1088 = vld [vmem:[%s1065 + $0x61] sm:$0xff]
        %v1089 = vld [vmem:[%s1065 + $0x71] sm:$0xff]
        %1098 = vrot.lane.b32.xlu0 %v968, 32
        %v1099 = vpop.permute.xlu0 %1098
        %1100 = vrot.lane.b32.xlu0 %v969, 32
        %v1101 = vpop.permute.xlu0 %1100
        %1102 = vrot.lane.b32.xlu0 %v970, 32
        %v1103 = vpop.permute.xlu0 %1102
        %1104 = vrot.lane.b32.xlu0 %v971, 32
        %v1105 = vpop.permute.xlu0 %1104
        %1106 = vrot.lane.b32.xlu0 %v972, 32
        %v1107 = vpop.permute.xlu0 %1106
        %1108 = vrot.lane.b32.xlu0 %v973, 32
        %v1109 = vpop.permute.xlu0 %1108
        %1110 = vrot.lane.b32.xlu0 %v974, 32
        %v1111 = vpop.permute.xlu0 %1110
        %1112 = vrot.lane.b32.xlu0 %v975, 32
        %v1113 = vpop.permute.xlu0 %1112
        %1130 = vrot.lane.b32.xlu0 %v976, 64
        %v1131 = vpop.permute.xlu0 %1130
        %1132 = vrot.lane.b32.xlu0 %v977, 64
        %v1133 = vpop.permute.xlu0 %1132
        %1134 = vrot.lane.b32.xlu0 %v978, 64
        %v1135 = vpop.permute.xlu0 %1134
        %1136 = vrot.lane.b32.xlu0 %v979, 64
        %v1137 = vpop.permute.xlu0 %1136
        %1138 = vrot.lane.b32.xlu0 %v980, 64
        %v1139 = vpop.permute.xlu0 %1138
        %1140 = vrot.lane.b32.xlu0 %v981, 64
        %v1141 = vpop.permute.xlu0 %1140
        %1142 = vrot.lane.b32.xlu0 %v982, 64
        %v1143 = vpop.permute.xlu0 %1142
        %1144 = vrot.lane.b32.xlu0 %v983, 64
        %v1145 = vpop.permute.xlu0 %1144
        %1162 = vrot.lane.b32.xlu0 %v984, 96
        %v1163 = vpop.permute.xlu0 %1162
        %1164 = vrot.lane.b32.xlu0 %v985, 96
        %v1165 = vpop.permute.xlu0 %1164
        %1166 = vrot.lane.b32.xlu0 %v986, 96
        %v1167 = vpop.permute.xlu0 %1166
        %1168 = vrot.lane.b32.xlu0 %v987, 96
        %v1169 = vpop.permute.xlu0 %1168
        %1170 = vrot.lane.b32.xlu0 %v988, 96
        %v1171 = vpop.permute.xlu0 %1170
        %1172 = vrot.lane.b32.xlu0 %v989, 96
        %v1173 = vpop.permute.xlu0 %1172
        %1174 = vrot.lane.b32.xlu0 %v990, 96
        %v1175 = vpop.permute.xlu0 %1174
        %1176 = vrot.lane.b32.xlu0 %v991, 96
        %v1177 = vpop.permute.xlu0 %1176
        %1194 = vrot.lane.b32.xlu0 %v1000, 32
        %v1195 = vpop.permute.xlu0 %1194
        %1196 = vrot.lane.b32.xlu0 %v1001, 32
        %v1197 = vpop.permute.xlu0 %1196
        %1198 = vrot.lane.b32.xlu0 %v1002, 32
        %v1199 = vpop.permute.xlu0 %1198
        %1200 = vrot.lane.b32.xlu0 %v1003, 32
        %v1201 = vpop.permute.xlu0 %1200
        %1202 = vrot.lane.b32.xlu0 %v1004, 32
        %v1203 = vpop.permute.xlu0 %1202
        %1204 = vrot.lane.b32.xlu0 %v1005, 32
        %v1205 = vpop.permute.xlu0 %1204
        %1206 = vrot.lane.b32.xlu0 %v1006, 32
        %v1207 = vpop.permute.xlu0 %1206
        %1208 = vrot.lane.b32.xlu0 %v1007, 32
        %v1209 = vpop.permute.xlu0 %1208
        %1226 = vrot.lane.b32.xlu0 %v1008, 64
        %v1227 = vpop.permute.xlu0 %1226
        %1228 = vrot.lane.b32.xlu0 %v1009, 64
        %v1229 = vpop.permute.xlu0 %1228
        %1230 = vrot.lane.b32.xlu0 %v1010, 64
        %v1231 = vpop.permute.xlu0 %1230
        %1232 = vrot.lane.b32.xlu0 %v1011, 64
        %v1233 = vpop.permute.xlu0 %1232
        %1234 = vrot.lane.b32.xlu0 %v1012, 64
        %v1235 = vpop.permute.xlu0 %1234
        %1236 = vrot.lane.b32.xlu0 %v1013, 64
        %v1237 = vpop.permute.xlu0 %1236
        %1238 = vrot.lane.b32.xlu0 %v1014, 64
        %v1239 = vpop.permute.xlu0 %1238
        %1240 = vrot.lane.b32.xlu0 %v1015, 64
        %v1241 = vpop.permute.xlu0 %1240
        %1258 = vrot.lane.b32.xlu0 %v1016, 96
        %v1259 = vpop.permute.xlu0 %1258
        %1260 = vrot.lane.b32.xlu0 %v1017, 96
        %v1261 = vpop.permute.xlu0 %1260
        %1262 = vrot.lane.b32.xlu0 %v1018, 96
        %v1263 = vpop.permute.xlu0 %1262
        %1264 = vrot.lane.b32.xlu0 %v1019, 96
        %v1265 = vpop.permute.xlu0 %1264
        %1266 = vrot.lane.b32.xlu0 %v1020, 96
        %v1267 = vpop.permute.xlu0 %1266
        %1268 = vrot.lane.b32.xlu0 %v1021, 96
        %v1269 = vpop.permute.xlu0 %1268
        %1270 = vrot.lane.b32.xlu0 %v1022, 96
        %v1271 = vpop.permute.xlu0 %1270
        %1272 = vrot.lane.b32.xlu0 %v1023, 96
        %v1273 = vpop.permute.xlu0 %1272
        %1290 = vrot.lane.b32.xlu0 %v1032, 32
        %v1291 = vpop.permute.xlu0 %1290
        %1292 = vrot.lane.b32.xlu0 %v1033, 32
        %v1293 = vpop.permute.xlu0 %1292
        %1294 = vrot.lane.b32.xlu0 %v1034, 32
        %v1295 = vpop.permute.xlu0 %1294
        %1296 = vrot.lane.b32.xlu0 %v1035, 32
        %v1297 = vpop.permute.xlu0 %1296
        %1298 = vrot.lane.b32.xlu0 %v1036, 32
        %v1299 = vpop.permute.xlu0 %1298
        %1300 = vrot.lane.b32.xlu0 %v1037, 32
        %v1301 = vpop.permute.xlu0 %1300
        %1302 = vrot.lane.b32.xlu0 %v1038, 32
        %v1303 = vpop.permute.xlu0 %1302
        %1304 = vrot.lane.b32.xlu0 %v1039, 32
        %v1305 = vpop.permute.xlu0 %1304
        %1322 = vrot.lane.b32.xlu0 %v1040, 64
        %v1323 = vpop.permute.xlu0 %1322
        %1324 = vrot.lane.b32.xlu0 %v1041, 64
        %v1325 = vpop.permute.xlu0 %1324
        %1326 = vrot.lane.b32.xlu0 %v1042, 64
        %v1327 = vpop.permute.xlu0 %1326
        %1328 = vrot.lane.b32.xlu0 %v1043, 64
        %v1329 = vpop.permute.xlu0 %1328
        %1330 = vrot.lane.b32.xlu0 %v1044, 64
        %v1331 = vpop.permute.xlu0 %1330
        %1332 = vrot.lane.b32.xlu0 %v1045, 64
        %v1333 = vpop.permute.xlu0 %1332
        %1334 = vrot.lane.b32.xlu0 %v1046, 64
        %v1335 = vpop.permute.xlu0 %1334
        %1336 = vrot.lane.b32.xlu0 %v1047, 64
        %v1337 = vpop.permute.xlu0 %1336
        %1354 = vrot.lane.b32.xlu0 %v1048, 96
        %v1355 = vpop.permute.xlu0 %1354
        %1356 = vrot.lane.b32.xlu0 %v1049, 96
        %v1357 = vpop.permute.xlu0 %1356
        %1358 = vrot.lane.b32.xlu0 %v1050, 96
        %v1359 = vpop.permute.xlu0 %1358
        %1360 = vrot.lane.b32.xlu0 %v1051, 96
        %v1361 = vpop.permute.xlu0 %1360
        %1362 = vrot.lane.b32.xlu0 %v1052, 96
        %v1363 = vpop.permute.xlu0 %1362
        %1364 = vrot.lane.b32.xlu0 %v1053, 96
        %v1365 = vpop.permute.xlu0 %1364
        %1366 = vrot.lane.b32.xlu0 %v1054, 96
        %v1367 = vpop.permute.xlu0 %1366
        %1368 = vrot.lane.b32.xlu0 %v1055, 96
        %v1369 = vpop.permute.xlu0 %1368
        %1386 = vrot.lane.b32.xlu0 %v1066, 32
        %v1387 = vpop.permute.xlu0 %1386
        %1388 = vrot.lane.b32.xlu0 %v1067, 32
        %v1389 = vpop.permute.xlu0 %1388
        %1390 = vrot.lane.b32.xlu0 %v1068, 32
        %v1391 = vpop.permute.xlu0 %1390
        %1392 = vrot.lane.b32.xlu0 %v1069, 32
        %v1393 = vpop.permute.xlu0 %1392
        %1394 = vrot.lane.b32.xlu0 %v1070, 32
        %v1395 = vpop.permute.xlu0 %1394
        %1396 = vrot.lane.b32.xlu0 %v1071, 32
        %v1397 = vpop.permute.xlu0 %1396
        %1398 = vrot.lane.b32.xlu0 %v1072, 32
        %v1399 = vpop.permute.xlu0 %1398
        %1400 = vrot.lane.b32.xlu0 %v1073, 32
        %v1401 = vpop.permute.xlu0 %1400
        %1418 = vrot.lane.b32.xlu0 %v1074, 64
        %v1419 = vpop.permute.xlu0 %1418
        %1420 = vrot.lane.b32.xlu0 %v1075, 64
        %v1421 = vpop.permute.xlu0 %1420
        %1422 = vrot.lane.b32.xlu0 %v1076, 64
        %v1423 = vpop.permute.xlu0 %1422
        %1424 = vrot.lane.b32.xlu0 %v1077, 64
        %v1425 = vpop.permute.xlu0 %1424
        %1426 = vrot.lane.b32.xlu0 %v1078, 64
        %v1427 = vpop.permute.xlu0 %1426
        %1428 = vrot.lane.b32.xlu0 %v1079, 64
        %v1429 = vpop.permute.xlu0 %1428
        %1430 = vrot.lane.b32.xlu0 %v1080, 64
        %v1431 = vpop.permute.xlu0 %1430
        %1432 = vrot.lane.b32.xlu0 %v1081, 64
        %v1433 = vpop.permute.xlu0 %1432
        %1450 = vrot.lane.b32.xlu0 %v1082, 96
        %v1451 = vpop.permute.xlu0 %1450
        %1452 = vrot.lane.b32.xlu0 %v1083, 96
        %v1453 = vpop.permute.xlu0 %1452
        %1454 = vrot.lane.b32.xlu0 %v1084, 96
        %v1455 = vpop.permute.xlu0 %1454
        %1456 = vrot.lane.b32.xlu0 %v1085, 96
        %v1457 = vpop.permute.xlu0 %1456
        %1458 = vrot.lane.b32.xlu0 %v1086, 96
        %v1459 = vpop.permute.xlu0 %1458
        %1460 = vrot.lane.b32.xlu0 %v1087, 96
        %v1461 = vpop.permute.xlu0 %1460
        %1462 = vrot.lane.b32.xlu0 %v1088, 96
        %v1463 = vpop.permute.xlu0 %1462
        %1464 = vrot.lane.b32.xlu0 %v1089, 96
        %v1465 = vpop.permute.xlu0 %1464
        %v1474 = vsel %vm413, %v960, %v1099
        %v1475 = vsel %vm413, %v961, %v1101
        %v1476 = vsel %vm413, %v962, %v1103
        %v1477 = vsel %vm413, %v963, %v1105
        %v1478 = vsel %vm413, %v964, %v1107
        %v1479 = vsel %vm413, %v965, %v1109
        %v1480 = vsel %vm413, %v966, %v1111
        %v1481 = vsel %vm413, %v967, %v1113
        %vm1482 = vcmask 523264
        %v1483 = vsel %vm1482, %v1474, %v1131
        %v1484 = vsel %vm1482, %v1475, %v1133
        %v1485 = vsel %vm1482, %v1476, %v1135
        %v1486 = vsel %vm1482, %v1477, %v1137
        %v1487 = vsel %vm1482, %v1478, %v1139
        %v1488 = vsel %vm1482, %v1479, %v1141
        %v1489 = vsel %vm1482, %v1480, %v1143
        %v1490 = vsel %vm1482, %v1481, %v1145
        %vm1491 = vcmask 785408
        %v1492 = vsel %vm1491, %v1483, %v1163
        %v1493 = vsel %vm1491, %v1484, %v1165
        %v1494 = vsel %vm1491, %v1485, %v1167
        %v1495 = vsel %vm1491, %v1486, %v1169
        %v1496 = vsel %vm1491, %v1487, %v1171
        %v1497 = vsel %vm1491, %v1488, %v1173
        %v1498 = vsel %vm1491, %v1489, %v1175
        %v1499 = vsel %vm1491, %v1490, %v1177
        %v1500 = vsel %vm413, %v992, %v1195
        %v1501 = vsel %vm413, %v993, %v1197
        %v1502 = vsel %vm413, %v994, %v1199
        %v1503 = vsel %vm413, %v995, %v1201
        %v1504 = vsel %vm413, %v996, %v1203
        %v1505 = vsel %vm413, %v997, %v1205
        %v1506 = vsel %vm413, %v998, %v1207
        %v1507 = vsel %vm413, %v999, %v1209
        %v1508 = vsel %vm1482, %v1500, %v1227
        %v1509 = vsel %vm1482, %v1501, %v1229
        %v1510 = vsel %vm1482, %v1502, %v1231
        %v1511 = vsel %vm1482, %v1503, %v1233
        %v1512 = vsel %vm1482, %v1504, %v1235
        %v1513 = vsel %vm1482, %v1505, %v1237
        %v1514 = vsel %vm1482, %v1506, %v1239
        %v1515 = vsel %vm1482, %v1507, %v1241
        %v1516 = vsel %vm1491, %v1508, %v1259
        %v1517 = vsel %vm1491, %v1509, %v1261
        %v1518 = vsel %vm1491, %v1510, %v1263
        %v1519 = vsel %vm1491, %v1511, %v1265
        %v1520 = vsel %vm1491, %v1512, %v1267
        %v1521 = vsel %vm1491, %v1513, %v1269
        %v1522 = vsel %vm1491, %v1514, %v1271
        %v1523 = vsel %vm1491, %v1515, %v1273
        %v1524 = vsel %vm413, %v1024, %v1291
        %v1525 = vsel %vm413, %v1025, %v1293
        %v1526 = vsel %vm413, %v1026, %v1295
        %v1527 = vsel %vm413, %v1027, %v1297
        %v1528 = vsel %vm413, %v1028, %v1299
        %v1529 = vsel %vm413, %v1029, %v1301
        %v1530 = vsel %vm413, %v1030, %v1303
        %v1531 = vsel %vm413, %v1031, %v1305
        %v1532 = vsel %vm1482, %v1524, %v1323
        %v1533 = vsel %vm1482, %v1525, %v1325
        %v1534 = vsel %vm1482, %v1526, %v1327
        %v1535 = vsel %vm1482, %v1527, %v1329
        %v1536 = vsel %vm1482, %v1528, %v1331
        %v1537 = vsel %vm1482, %v1529, %v1333
        %v1538 = vsel %vm1482, %v1530, %v1335
        %v1539 = vsel %vm1482, %v1531, %v1337
        %v1540 = vsel %vm1491, %v1532, %v1355
        %v1541 = vsel %vm1491, %v1533, %v1357
        %v1542 = vsel %vm1491, %v1534, %v1359
        %v1543 = vsel %vm1491, %v1535, %v1361
        %v1544 = vsel %vm1491, %v1536, %v1363
        %v1545 = vsel %vm1491, %v1537, %v1365
        %v1546 = vsel %vm1491, %v1538, %v1367
        %v1547 = vsel %vm1491, %v1539, %v1369
        %v1548 = vsel %vm413, %v1057, %v1387
        %v1549 = vsel %vm413, %v1058, %v1389
        %v1550 = vsel %vm413, %v1059, %v1391
        %v1551 = vsel %vm413, %v1060, %v1393
        %v1552 = vsel %vm413, %v1061, %v1395
        %v1553 = vsel %vm413, %v1062, %v1397
        %v1554 = vsel %vm413, %v1063, %v1399
        %v1555 = vsel %vm413, %v1064, %v1401
        %v1556 = vsel %vm1482, %v1548, %v1419
        %v1557 = vsel %vm1482, %v1549, %v1421
        %v1558 = vsel %vm1482, %v1550, %v1423
        %v1559 = vsel %vm1482, %v1551, %v1425
        %v1560 = vsel %vm1482, %v1552, %v1427
        %v1561 = vsel %vm1482, %v1553, %v1429
        %v1562 = vsel %vm1482, %v1554, %v1431
        %v1563 = vsel %vm1482, %v1555, %v1433
        %v1564 = vsel %vm1491, %v1556, %v1451
        %v1565 = vsel %vm1491, %v1557, %v1453
        %v1566 = vsel %vm1491, %v1558, %v1455
        %v1567 = vsel %vm1491, %v1559, %v1457
        %v1568 = vsel %vm1491, %v1560, %v1459
        %v1569 = vsel %vm1491, %v1561, %v1461
        %v1570 = vsel %vm1491, %v1562, %v1463
        %v1571 = vsel %vm1491, %v1563, %v1465
        %v1572 = vld [vmem:[%s3] sm:$0xff]
        %v1573 = vld [vmem:[%s3 + $0x8] sm:$0xff]
        %v1574 = vld [vmem:[%s3 + $0x10] sm:$0xff]
        %v1575 = vld [vmem:[%s3 + $0x18] sm:$0xff]
        %v1576 = vld [vmem:[%s3 + $0x20] sm:$0xff]
        %v1577 = vld [vmem:[%s3 + $0x28] sm:$0xff]
        %v1578 = vld [vmem:[%s3 + $0x30] sm:$0xff]
        %v1579 = vld [vmem:[%s3 + $0x38] sm:$0xff]
        %v1580 = vld [vmem:[%s3 + $0x40] sm:$0xff]
        %v1581 = vld [vmem:[%s3 + $0x48] sm:$0xff]
        %v1582 = vld [vmem:[%s3 + $0x50] sm:$0xff]
        %v1583 = vld [vmem:[%s3 + $0x58] sm:$0xff]
        %v1584 = vld [vmem:[%s3 + $0x60] sm:$0xff]
        %v1585 = vld [vmem:[%s3 + $0x68] sm:$0xff]
        %v1586 = vld [vmem:[%s3 + $0x70] sm:$0xff]
        %v1587 = vld [vmem:[%s3 + $0x78] sm:$0xff]
        %v1588 = vld [vmem:[%s3 + $0x80] sm:$0xff]
        %v1589 = vld [vmem:[%s3 + $0x88] sm:$0xff]
        %v1590 = vld [vmem:[%s3 + $0x90] sm:$0xff]
        %v1591 = vld [vmem:[%s3 + $0x98] sm:$0xff]
        %v1592 = vld [vmem:[%s3 + $0xa0] sm:$0xff]
        %v1593 = vld [vmem:[%s3 + $0xa8] sm:$0xff]
        %v1594 = vld [vmem:[%s3 + $0xb0] sm:$0xff]
        %v1595 = vld [vmem:[%s3 + $0xb8] sm:$0xff]
        %v1596 = vld [vmem:[%s3 + $0xc0] sm:$0xff]
        %v1597 = vld [vmem:[%s3 + $0xc8] sm:$0xff]
        %v1598 = vld [vmem:[%s3 + $0xd0] sm:$0xff]
        %v1599 = vld [vmem:[%s3 + $0xd8] sm:$0xff]
        %v1600 = vld [vmem:[%s3 + $0xe0] sm:$0xff]
        %v1601 = vld [vmem:[%s3 + $0xe8] sm:$0xff]
        %v1602 = vld [vmem:[%s3 + $0xf0] sm:$0xff]
        %v1603 = vld [vmem:[%s3 + $0xf8] sm:$0xff]
        %v1604 = vld [vmem:[%s3 + $0x100] sm:$0xff]
        %v1605 = vld [vmem:[%s3 + $0x108] sm:$0xff]
        %v1606 = vld [vmem:[%s3 + $0x110] sm:$0xff]
        %v1607 = vld [vmem:[%s3 + $0x118] sm:$0xff]
        %v1608 = vld [vmem:[%s3 + $0x120] sm:$0xff]
        %v1609 = vld [vmem:[%s3 + $0x128] sm:$0xff]
        %v1610 = vld [vmem:[%s3 + $0x130] sm:$0xff]
        %v1611 = vld [vmem:[%s3 + $0x138] sm:$0xff]
        %v1612 = vld [vmem:[%s3 + $0x140] sm:$0xff]
        %v1613 = vld [vmem:[%s3 + $0x148] sm:$0xff]
        %v1614 = vld [vmem:[%s3 + $0x150] sm:$0xff]
        %v1615 = vld [vmem:[%s3 + $0x158] sm:$0xff]
        %v1616 = vld [vmem:[%s3 + $0x160] sm:$0xff]
        %v1617 = vld [vmem:[%s3 + $0x168] sm:$0xff]
        %v1618 = vld [vmem:[%s3 + $0x170] sm:$0xff]
        %v1619 = vld [vmem:[%s3 + $0x178] sm:$0xff]
        %v1620 = vld [vmem:[%s3 + $0x180] sm:$0xff]
        %v1621 = vld [vmem:[%s3 + $0x188] sm:$0xff]
        %v1622 = vld [vmem:[%s3 + $0x190] sm:$0xff]
        %v1623 = vld [vmem:[%s3 + $0x198] sm:$0xff]
        %v1624 = vld [vmem:[%s3 + $0x1a0] sm:$0xff]
        %v1625 = vld [vmem:[%s3 + $0x1a8] sm:$0xff]
        %v1626 = vld [vmem:[%s3 + $0x1b0] sm:$0xff]
        %v1627 = vld [vmem:[%s3 + $0x1b8] sm:$0xff]
        %v1628 = vld [vmem:[%s3 + $0x1c0] sm:$0xff]
        %v1629 = vld [vmem:[%s3 + $0x1c8] sm:$0xff]
        %v1630 = vld [vmem:[%s3 + $0x1d0] sm:$0xff]
        %v1631 = vld [vmem:[%s3 + $0x1d8] sm:$0xff]
        %v1632 = vld [vmem:[%s3 + $0x1e0] sm:$0xff]
        %v1633 = vld [vmem:[%s3 + $0x1e8] sm:$0xff]
        %v1634 = vld [vmem:[%s3 + $0x1f0] sm:$0xff]
        %v1635 = vld [vmem:[%s3 + $0x1f8] sm:$0xff]
        %v1636 = vld [vmem:[%s4] sm:$0x1]
        %v1638 = vlaneseq
        %v1639 = vshrl.u32 %v1638, 7
        %v1640 = vsub.s32 0, %v1639
        %v1641 = vrot.slane %v1636, %v1640
        %1643 = vmatprep.subr.mxu0 0.0
        %1644 = vmatpush1.msra.mxu0 %v1587
        %1645 = vmatprep.subr.mxu0 0.0
        %1646 = vmatpush1.msra.mxu0 %v1586
        %1647 = vmatprep.subr.mxu0 0.0
        %1648 = vmatpush1.msra.mxu0 %v1585
        %1649 = vmatprep.subr.mxu0 0.0
        %1650 = vmatpush1.msra.mxu0 %v1584
        %1651 = vmatprep.subr.mxu0 0.0
        %1652 = vmatpush1.msra.mxu0 %v1583
        %1653 = vmatprep.subr.mxu0 0.0
        %1654 = vmatpush1.msra.mxu0 %v1582
        %1655 = vmatprep.subr.mxu0 0.0
        %1656 = vmatpush1.msra.mxu0 %v1581
        %1657 = vmatprep.subr.mxu0 0.0
        %1658 = vmatpush1.msra.mxu0 %v1580
        %1659 = vmatprep.subr.mxu0 0.0
        %1660 = vmatpush1.msra.mxu0 %v1579
        %1661 = vmatprep.subr.mxu0 0.0
        %1662 = vmatpush1.msra.mxu0 %v1578
        %1663 = vmatprep.subr.mxu0 0.0
        %1664 = vmatpush1.msra.mxu0 %v1577
        %1665 = vmatprep.subr.mxu0 0.0
        %1666 = vmatpush1.msra.mxu0 %v1576
        %1667 = vmatprep.subr.mxu0 0.0
        %1668 = vmatpush1.msra.mxu0 %v1575
        %1669 = vmatprep.subr.mxu0 0.0
        %1670 = vmatpush1.msra.mxu0 %v1574
        %1671 = vmatprep.subr.mxu0 0.0
        %1672 = vmatpush1.msra.mxu0 %v1573
        %1673 = vmatprep.subr.mxu0 0.0
        %1674 = vmatpush1.msra.mxu0 %v1572
        %1675 = vmatprep.subr.mxu0 0.0
        %1676 = vmatpush2.msra.mxu0 %v1603
        %1677 = vmatprep.subr.mxu0 0.0
        %1678 = vmatpush2.msra.mxu0 %v1602
        %1679 = vmatprep.subr.mxu0 0.0
        %1680 = vmatpush2.msra.mxu0 %v1601
        %1681 = vmatprep.subr.mxu0 0.0
        %1682 = vmatpush2.msra.mxu0 %v1600
        %1683 = vmatprep.subr.mxu0 0.0
        %1684 = vmatpush2.msra.mxu0 %v1599
        %1685 = vmatprep.subr.mxu0 0.0
        %1686 = vmatpush2.msra.mxu0 %v1598
        %1687 = vmatprep.subr.mxu0 0.0
        %1688 = vmatpush2.msra.mxu0 %v1597
        %1689 = vmatprep.subr.mxu0 0.0
        %1690 = vmatpush2.msra.mxu0 %v1596
        %1691 = vmatprep.subr.mxu0 0.0
        %1692 = vmatpush2.msra.mxu0 %v1595
        %1693 = vmatprep.subr.mxu0 0.0
        %1694 = vmatpush2.msra.mxu0 %v1594
        %1695 = vmatprep.subr.mxu0 0.0
        %1696 = vmatpush2.msra.mxu0 %v1593
        %1697 = vmatprep.subr.mxu0 0.0
        %1698 = vmatpush2.msra.mxu0 %v1592
        %1699 = vmatprep.subr.mxu0 0.0
        %1700 = vmatpush2.msra.mxu0 %v1591
        %1701 = vmatprep.subr.mxu0 0.0
        %1702 = vmatpush2.msra.mxu0 %v1590
        %1703 = vmatprep.subr.mxu0 0.0
        %1704 = vmatpush2.msra.mxu0 %v1589
        %1705 = vmatprep.subr.mxu0 0.0
        %1706 = vmatpush2.msra.mxu0 %v1588
        %1707 = vmatprep.mubr.f32.mxu0 %v1516
        %1708 = vmatmul.mubr.f32.gmra.mxu0 %v1492
        %v1709 = vpop.f32.mrf.mxu0
        %v1710 = vadd.f32 %v1641, %v1709
        %v1711 = vpop.f32.mrf.mxu0
        %1712 = vmatprep.mubr.f32.mxu0 %v1517
        %1713 = vmatmul.mubr.f32.gmra.mxu0 %v1493
        %v1714 = vpop.f32.mrf.mxu0
        %v1715 = vadd.f32 %v1641, %v1714
        %v1716 = vpop.f32.mrf.mxu0
        %1717 = vmatprep.mubr.f32.mxu0 %v1518
        %1718 = vmatmul.mubr.f32.gmra.mxu0 %v1494
        %v1719 = vpop.f32.mrf.mxu0
        %v1720 = vadd.f32 %v1641, %v1719
        %v1721 = vpop.f32.mrf.mxu0
        %1722 = vmatprep.mubr.f32.mxu0 %v1519
        %1723 = vmatmul.mubr.f32.gmra.mxu0 %v1495
        %v1724 = vpop.f32.mrf.mxu0
        %v1725 = vadd.f32 %v1641, %v1724
        %v1726 = vpop.f32.mrf.mxu0
        %1727 = vmatprep.mubr.f32.mxu0 %v1520
        %1728 = vmatmul.mubr.f32.gmra.mxu0 %v1496
        %v1729 = vpop.f32.mrf.mxu0
        %v1730 = vadd.f32 %v1641, %v1729
        %v1731 = vpop.f32.mrf.mxu0
        %1732 = vmatprep.mubr.f32.mxu0 %v1521
        %1733 = vmatmul.mubr.f32.gmra.mxu0 %v1497
        %v1734 = vpop.f32.mrf.mxu0
        %v1735 = vadd.f32 %v1641, %v1734
        %v1736 = vpop.f32.mrf.mxu0
        %1737 = vmatprep.mubr.f32.mxu0 %v1522
        %1738 = vmatmul.mubr.f32.gmra.mxu0 %v1498
        %v1739 = vpop.f32.mrf.mxu0
        %v1740 = vadd.f32 %v1641, %v1739
        %v1741 = vpop.f32.mrf.mxu0
        %1742 = vmatprep.mubr.f32.mxu0 %v1523
        %1743 = vmatmul.mubr.f32.gmra.mxu0 %v1499
        %v1744 = vpop.f32.mrf.mxu0
        %v1745 = vadd.f32 %v1641, %v1744
        %v1746 = vpop.f32.mrf.mxu0
        %1747 = vdwg.mxu0
        %1748 = vmatprep.subr.mxu0 0.0
        %1749 = vmatpush1.msra.mxu0 %v1619
        %1750 = vmatprep.subr.mxu0 0.0
        %1751 = vmatpush1.msra.mxu0 %v1618
        %1752 = vmatprep.subr.mxu0 0.0
        %1753 = vmatpush1.msra.mxu0 %v1617
        %1754 = vmatprep.subr.mxu0 0.0
        %1755 = vmatpush1.msra.mxu0 %v1616
        %1756 = vmatprep.subr.mxu0 0.0
        %1757 = vmatpush1.msra.mxu0 %v1615
        %1758 = vmatprep.subr.mxu0 0.0
        %1759 = vmatpush1.msra.mxu0 %v1614
        %1760 = vmatprep.subr.mxu0 0.0
        %1761 = vmatpush1.msra.mxu0 %v1613
        %1762 = vmatprep.subr.mxu0 0.0
        %1763 = vmatpush1.msra.mxu0 %v1612
        %1764 = vmatprep.subr.mxu0 0.0
        %1765 = vmatpush1.msra.mxu0 %v1611
        %1766 = vmatprep.subr.mxu0 0.0
        %1767 = vmatpush1.msra.mxu0 %v1610
        %1768 = vmatprep.subr.mxu0 0.0
        %1769 = vmatpush1.msra.mxu0 %v1609
        %1770 = vmatprep.subr.mxu0 0.0
        %1771 = vmatpush1.msra.mxu0 %v1608
        %1772 = vmatprep.subr.mxu0 0.0
        %1773 = vmatpush1.msra.mxu0 %v1607
        %1774 = vmatprep.subr.mxu0 0.0
        %1775 = vmatpush1.msra.mxu0 %v1606
        %1776 = vmatprep.subr.mxu0 0.0
        %1777 = vmatpush1.msra.mxu0 %v1605
        %1778 = vmatprep.subr.mxu0 0.0
        %1779 = vmatpush1.msra.mxu0 %v1604
        %1780 = vmatprep.subr.mxu0 0.0
        %1781 = vmatpush2.msra.mxu0 %v1635
        %1782 = vmatprep.subr.mxu0 0.0
        %1783 = vmatpush2.msra.mxu0 %v1634
        %1784 = vmatprep.subr.mxu0 0.0
        %1785 = vmatpush2.msra.mxu0 %v1633
        %1786 = vmatprep.subr.mxu0 0.0
        %1787 = vmatpush2.msra.mxu0 %v1632
        %1788 = vmatprep.subr.mxu0 0.0
        %1789 = vmatpush2.msra.mxu0 %v1631
        %1790 = vmatprep.subr.mxu0 0.0
        %1791 = vmatpush2.msra.mxu0 %v1630
        %1792 = vmatprep.subr.mxu0 0.0
        %1793 = vmatpush2.msra.mxu0 %v1629
        %1794 = vmatprep.subr.mxu0 0.0
        %1795 = vmatpush2.msra.mxu0 %v1628
        %1796 = vmatprep.subr.mxu0 0.0
        %1797 = vmatpush2.msra.mxu0 %v1627
        %1798 = vmatprep.subr.mxu0 0.0
        %1799 = vmatpush2.msra.mxu0 %v1626
        %1800 = vmatprep.subr.mxu0 0.0
        %1801 = vmatpush2.msra.mxu0 %v1625
        %1802 = vmatprep.subr.mxu0 0.0
        %1803 = vmatpush2.msra.mxu0 %v1624
        %1804 = vmatprep.subr.mxu0 0.0
        %1805 = vmatpush2.msra.mxu0 %v1623
        %1806 = vmatprep.subr.mxu0 0.0
        %1807 = vmatpush2.msra.mxu0 %v1622
        %1808 = vmatprep.subr.mxu0 0.0
        %1809 = vmatpush2.msra.mxu0 %v1621
        %1810 = vmatprep.subr.mxu0 0.0
        %1811 = vmatpush2.msra.mxu0 %v1620
        %1812 = vmatprep.mubr.f32.mxu0 %v1564
        %1813 = vmatmul.mubr.f32.gmra.mxu0 %v1540
        %v1814 = vpop.f32.mrf.mxu0
        %v1815 = vadd.f32 %v1710, %v1814
        %v1816 = vpop.f32.mrf.mxu0
        %1817 = vmatprep.mubr.f32.mxu0 %v1565
        %1818 = vmatmul.mubr.f32.gmra.mxu0 %v1541
        %v1819 = vpop.f32.mrf.mxu0
        %v1820 = vadd.f32 %v1715, %v1819
        %v1821 = vpop.f32.mrf.mxu0
        %1822 = vmatprep.mubr.f32.mxu0 %v1566
        %1823 = vmatmul.mubr.f32.gmra.mxu0 %v1542
        %v1824 = vpop.f32.mrf.mxu0
        %v1825 = vadd.f32 %v1720, %v1824
        %v1826 = vpop.f32.mrf.mxu0
        %1827 = vmatprep.mubr.f32.mxu0 %v1567
        %1828 = vmatmul.mubr.f32.gmra.mxu0 %v1543
        %v1829 = vpop.f32.mrf.mxu0
        %v1830 = vadd.f32 %v1725, %v1829
        %v1831 = vpop.f32.mrf.mxu0
        %1832 = vmatprep.mubr.f32.mxu0 %v1568
        %1833 = vmatmul.mubr.f32.gmra.mxu0 %v1544
        %v1834 = vpop.f32.mrf.mxu0
        %v1835 = vadd.f32 %v1730, %v1834
        %v1836 = vpop.f32.mrf.mxu0
        %1837 = vmatprep.mubr.f32.mxu0 %v1569
        %1838 = vmatmul.mubr.f32.gmra.mxu0 %v1545
        %v1839 = vpop.f32.mrf.mxu0
        %v1840 = vadd.f32 %v1735, %v1839
        %v1841 = vpop.f32.mrf.mxu0
        %1842 = vmatprep.mubr.f32.mxu0 %v1570
        %1843 = vmatmul.mubr.f32.gmra.mxu0 %v1546
        %v1844 = vpop.f32.mrf.mxu0
        %v1845 = vadd.f32 %v1740, %v1844
        %v1846 = vpop.f32.mrf.mxu0
        %1847 = vmatprep.mubr.f32.mxu0 %v1571
        %1848 = vmatmul.mubr.f32.gmra.mxu0 %v1547
        %v1849 = vpop.f32.mrf.mxu0
        %v1850 = vadd.f32 %v1745, %v1849
        %v1851 = vpop.f32.mrf.mxu0
        %1852 = vdwg.mxu0
        %v1853 = vmax.f32 %v1815, 0.0
        %v1854 = vmax.f32 %v1820, 0.0
        %v1855 = vmax.f32 %v1825, 0.0
        %v1856 = vmax.f32 %v1830, 0.0
        %v1857 = vmax.f32 %v1835, 0.0
        %v1858 = vmax.f32 %v1840, 0.0
        %v1859 = vmax.f32 %v1845, 0.0
        %v1860 = vmax.f32 %v1850, 0.0
        %v1861 = vld [vmem:[%s5] sm:$0xff]
        %v1862 = vld [vmem:[%s5 + $0x8] sm:$0xff]
        %v1863 = vld [vmem:[%s5 + $0x10] sm:$0xff]
        %v1864 = vld [vmem:[%s5 + $0x18] sm:$0xff]
        %v1865 = vld [vmem:[%s5 + $0x20] sm:$0xff]
        %v1866 = vld [vmem:[%s5 + $0x28] sm:$0xff]
        %v1867 = vld [vmem:[%s5 + $0x30] sm:$0xff]
        %v1868 = vld [vmem:[%s5 + $0x38] sm:$0xff]
        %v1869 = vld [vmem:[%s5 + $0x40] sm:$0xff]
        %v1870 = vld [vmem:[%s5 + $0x48] sm:$0xff]
        %v1871 = vld [vmem:[%s5 + $0x50] sm:$0xff]
        %v1872 = vld [vmem:[%s5 + $0x58] sm:$0xff]
        %v1873 = vld [vmem:[%s5 + $0x60] sm:$0xff]
        %v1874 = vld [vmem:[%s5 + $0x68] sm:$0xff]
        %v1875 = vld [vmem:[%s5 + $0x70] sm:$0xff]
        %v1876 = vld [vmem:[%s5 + $0x78] sm:$0xff]
        %v1878 = vsel %vm1482, %v1861, 0
        %v1881 = vsel %vm1482, %v1862, 0
        %v1884 = vsel %vm1482, %v1863, 0
        %v1887 = vsel %vm1482, %v1864, 0
        %v1890 = vsel %vm1482, %v1865, 0
        %v1893 = vsel %vm1482, %v1866, 0
        %v1896 = vsel %vm1482, %v1867, 0
        %v1899 = vsel %vm1482, %v1868, 0
        %v1902 = vsel %vm1482, %v1869, 0
        %v1905 = vsel %vm1482, %v1870, 0
        %v1908 = vsel %vm1482, %v1871, 0
        %v1911 = vsel %vm1482, %v1872, 0
        %v1914 = vsel %vm1482, %v1873, 0
        %v1917 = vsel %vm1482, %v1874, 0
        %v1920 = vsel %vm1482, %v1875, 0
        %v1923 = vsel %vm1482, %v1876, 0
        %1925 = vmatprep.subr.mxu0 0.0
        %1926 = vmatpush1.msra.mxu0 0.0
        %1927 = vmatprep.subr.mxu0 0.0
        %1928 = vmatpush1.msra.mxu0 0.0
        %1929 = vmatprep.subr.mxu0 0.0
        %1930 = vmatpush1.msra.mxu0 0.0
        %1931 = vmatprep.subr.mxu0 0.0
        %1932 = vmatpush1.msra.mxu0 0.0
        %1933 = vmatprep.subr.mxu0 0.0
        %1934 = vmatpush1.msra.mxu0 0.0
        %1935 = vmatprep.subr.mxu0 0.0
        %1936 = vmatpush1.msra.mxu0 0.0
        %1937 = vmatprep.subr.mxu0 0.0
        %1938 = vmatpush1.msra.mxu0 0.0
        %1939 = vmatprep.subr.mxu0 0.0
        %1940 = vmatpush1.msra.mxu0 0.0
        %1941 = vmatprep.subr.mxu0 0.0
        %1942 = vmatpush1.msra.mxu0 %v1860
        %1943 = vmatprep.subr.mxu0 0.0
        %1944 = vmatpush1.msra.mxu0 %v1859
        %1945 = vmatprep.subr.mxu0 0.0
        %1946 = vmatpush1.msra.mxu0 %v1858
        %1947 = vmatprep.subr.mxu0 0.0
        %1948 = vmatpush1.msra.mxu0 %v1857
        %1949 = vmatprep.subr.mxu0 0.0
        %1950 = vmatpush1.msra.mxu0 %v1856
        %1951 = vmatprep.subr.mxu0 0.0
        %1952 = vmatpush1.msra.mxu0 %v1855
        %1953 = vmatprep.subr.mxu0 0.0
        %1954 = vmatpush1.msra.mxu0 %v1854
        %1955 = vmatprep.subr.mxu0 0.0
        %1956 = vmatpush1.msra.mxu0 %v1853
        %1957 = vmatprep.subr.mxu0 0.0
        %1958 = vmatpush2.msra.mxu0 0.0
        %1959 = vmatprep.subr.mxu0 0.0
        %1960 = vmatpush2.msra.mxu0 0.0
        %1961 = vmatprep.subr.mxu0 0.0
        %1962 = vmatpush2.msra.mxu0 0.0
        %1963 = vmatprep.subr.mxu0 0.0
        %1964 = vmatpush2.msra.mxu0 0.0
        %1965 = vmatprep.subr.mxu0 0.0
        %1966 = vmatpush2.msra.mxu0 0.0
        %1967 = vmatprep.subr.mxu0 0.0
        %1968 = vmatpush2.msra.mxu0 0.0
        %1969 = vmatprep.subr.mxu0 0.0
        %1970 = vmatpush2.msra.mxu0 0.0
        %1971 = vmatprep.subr.mxu0 0.0
        %1972 = vmatpush2.msra.mxu0 0.0
        %1973 = vmatprep.subr.mxu0 0.0
        %1974 = vmatpush2.msra.mxu0 0.0
        %1975 = vmatprep.subr.mxu0 0.0
        %1976 = vmatpush2.msra.mxu0 0.0
        %1977 = vmatprep.subr.mxu0 0.0
        %1978 = vmatpush2.msra.mxu0 0.0
        %1979 = vmatprep.subr.mxu0 0.0
        %1980 = vmatpush2.msra.mxu0 0.0
        %1981 = vmatprep.subr.mxu0 0.0
        %1982 = vmatpush2.msra.mxu0 0.0
        %1983 = vmatprep.subr.mxu0 0.0
        %1984 = vmatpush2.msra.mxu0 0.0
        %1985 = vmatprep.subr.mxu0 0.0
        %1986 = vmatpush2.msra.mxu0 0.0
        %1987 = vmatprep.subr.mxu0 0.0
        %1988 = vmatpush2.msra.mxu0 0.0
        %1989 = vmatprep.mubr.f32.mxu0 0.0
        %1990 = vmatmul.mubr.f32.gmra.mxu0 %v1878
        %v1991 = vpop.f32.mrf.mxu0
        %v1992 = vadd.f32 0.0, %v1991
        %v1993 = vpop.f32.mrf.mxu0
        %1994 = vmatprep.mubr.f32.mxu0 0.0
        %1995 = vmatmul.mubr.f32.gmra.mxu0 %v1881
        %v1996 = vpop.f32.mrf.mxu0
        %v1997 = vadd.f32 0.0, %v1996
        %v1998 = vpop.f32.mrf.mxu0
        %1999 = vmatprep.mubr.f32.mxu0 0.0
        %2000 = vmatmul.mubr.f32.gmra.mxu0 %v1884
        %v2001 = vpop.f32.mrf.mxu0
        %v2002 = vadd.f32 0.0, %v2001
        %v2003 = vpop.f32.mrf.mxu0
        %2004 = vmatprep.mubr.f32.mxu0 0.0
        %2005 = vmatmul.mubr.f32.gmra.mxu0 %v1887
        %v2006 = vpop.f32.mrf.mxu0
        %v2007 = vadd.f32 0.0, %v2006
        %v2008 = vpop.f32.mrf.mxu0
        %2009 = vmatprep.mubr.f32.mxu0 0.0
        %2010 = vmatmul.mubr.f32.gmra.mxu0 %v1890
        %v2011 = vpop.f32.mrf.mxu0
        %v2012 = vadd.f32 0.0, %v2011
        %v2013 = vpop.f32.mrf.mxu0
        %2014 = vmatprep.mubr.f32.mxu0 0.0
        %2015 = vmatmul.mubr.f32.gmra.mxu0 %v1893
        %v2016 = vpop.f32.mrf.mxu0
        %v2017 = vadd.f32 0.0, %v2016
        %v2018 = vpop.f32.mrf.mxu0
        %2019 = vmatprep.mubr.f32.mxu0 0.0
        %2020 = vmatmul.mubr.f32.gmra.mxu0 %v1896
        %v2021 = vpop.f32.mrf.mxu0
        %v2022 = vadd.f32 0.0, %v2021
        %v2023 = vpop.f32.mrf.mxu0
        %2024 = vmatprep.mubr.f32.mxu0 0.0
        %2025 = vmatmul.mubr.f32.gmra.mxu0 %v1899
        %v2026 = vpop.f32.mrf.mxu0
        %v2027 = vadd.f32 0.0, %v2026
        %v2028 = vpop.f32.mrf.mxu0
        %2029 = vmatprep.mubr.f32.mxu0 0.0
        %2030 = vmatmul.mubr.f32.gmra.mxu0 %v1902
        %v2031 = vpop.f32.mrf.mxu0
        %v2032 = vadd.f32 0.0, %v2031
        %v2033 = vpop.f32.mrf.mxu0
        %2034 = vmatprep.mubr.f32.mxu0 0.0
        %2035 = vmatmul.mubr.f32.gmra.mxu0 %v1905
        %v2036 = vpop.f32.mrf.mxu0
        %v2037 = vadd.f32 0.0, %v2036
        %v2038 = vpop.f32.mrf.mxu0
        %2039 = vmatprep.mubr.f32.mxu0 0.0
        %2040 = vmatmul.mubr.f32.gmra.mxu0 %v1908
        %v2041 = vpop.f32.mrf.mxu0
        %v2042 = vadd.f32 0.0, %v2041
        %v2043 = vpop.f32.mrf.mxu0
        %2044 = vmatprep.mubr.f32.mxu0 0.0
        %2045 = vmatmul.mubr.f32.gmra.mxu0 %v1911
        %v2046 = vpop.f32.mrf.mxu0
        %v2047 = vadd.f32 0.0, %v2046
        %v2048 = vpop.f32.mrf.mxu0
        %2049 = vmatprep.mubr.f32.mxu0 0.0
        %2050 = vmatmul.mubr.f32.gmra.mxu0 %v1914
        %v2051 = vpop.f32.mrf.mxu0
        %v2052 = vadd.f32 0.0, %v2051
        %v2053 = vpop.f32.mrf.mxu0
        %2054 = vmatprep.mubr.f32.mxu0 0.0
        %2055 = vmatmul.mubr.f32.gmra.mxu0 %v1917
        %v2056 = vpop.f32.mrf.mxu0
        %v2057 = vadd.f32 0.0, %v2056
        %v2058 = vpop.f32.mrf.mxu0
        %2059 = vmatprep.mubr.f32.mxu0 0.0
        %2060 = vmatmul.mubr.f32.gmra.mxu0 %v1920
        %v2061 = vpop.f32.mrf.mxu0
        %v2062 = vadd.f32 0.0, %v2061
        %v2063 = vpop.f32.mrf.mxu0
        %2064 = vmatprep.mubr.f32.mxu0 0.0
        %2065 = vmatmul.mubr.f32.gmra.mxu0 %v1923
        %v2066 = vpop.f32.mrf.mxu0
        %v2067 = vadd.f32 0.0, %v2066
        %v2068 = vpop.f32.mrf.mxu0
        %2069 = vdwg.mxu0
        %s2070 = scalar_lea.vmem [#allocation6], 16
        %2071 = vst.msk [vmem:[%s2070 + $0x1] sm:$0xff] %vm413, %v1992
        %2072 = vst.msk [vmem:[%s2070 + $0x11] sm:$0xff] %vm413, %v1997
        %2073 = vst.msk [vmem:[%s2070 + $0x21] sm:$0xff] %vm413, %v2002
        %2074 = vst.msk [vmem:[%s2070 + $0x31] sm:$0xff] %vm413, %v2007
        %s2075 = scalar_lea.vmem [#allocation7], 16
        %2076 = vst.msk [vmem:[%s2075] sm:$0xff] %vm413, %v2012
        %2077 = vst.msk [vmem:[%s2075 + $0x10] sm:$0xff] %vm413, %v2017
        %2078 = vst.msk [vmem:[%s2075 + $0x20] sm:$0xff] %vm413, %v2022
        %2079 = vst.msk [vmem:[%s2075 + $0x30] sm:$0xff] %vm413, %v2027
        %2080 = vst.msk [vmem:[#allocation8 + $0x1] sm:$0xff] %vm413, %v2032
        %2081 = vst.msk [vmem:[#allocation8 + $0x11] sm:$0xff] %vm413, %v2037
        %2082 = vst.msk [vmem:[#allocation8 + $0x21] sm:$0xff] %vm413, %v2042
        %2083 = vst.msk [vmem:[#allocation8 + $0x31] sm:$0xff] %vm413, %v2047
        %2084 = vst.msk [vmem:[#allocation9] sm:$0xff] %vm413, %v2052
        %2085 = vst.msk [vmem:[#allocation9 + $0x10] sm:$0xff] %vm413, %v2057
        %2086 = vst.msk [vmem:[#allocation9 + $0x20] sm:$0xff] %vm413, %v2062
        %2087 = vst.msk [vmem:[#allocation9 + $0x30] sm:$0xff] %vm413, %v2067
        %v2088 = vld [vmem:[#allocation6] sm:$0xf]
        %v2089 = vld [vmem:[#allocation7] sm:$0xf]
        %v2090 = vld [vmem:[#allocation6 + $0x1] sm:$0xf]
        %v2091 = vld [vmem:[#allocation7 + $0x1] sm:$0xf]
        %v2092 = vld [vmem:[#allocation8] sm:$0xf]
        %v2093 = vld [vmem:[#allocation9] sm:$0xf]
        %v2094 = vld [vmem:[#allocation8 + $0x1] sm:$0xf]
        %v2095 = vld [vmem:[#allocation9 + $0x1] sm:$0xf]
        %v2096 = vld [vmem:[%s2070] sm:$0xf]
        %v2097 = vld [vmem:[%s2075] sm:$0xf]
        %v2098 = vld [vmem:[%s2070 + $0x1] sm:$0xf]
        %v2099 = vld [vmem:[%s2075 + $0x1] sm:$0xf]
        %s2100 = scalar_lea.vmem [#allocation8], 16
        %v2101 = vld [vmem:[%s2100] sm:$0xf]
        %s2102 = scalar_lea.vmem [#allocation9], 16
        %v2103 = vld [vmem:[%s2102] sm:$0xf]
        %v2104 = vld [vmem:[%s2100 + $0x1] sm:$0xf]
        %v2105 = vld [vmem:[%s2102 + $0x1] sm:$0xf]
        %2107 = vrot.lane.b32.xlu0 %v2089, 32
        %v2108 = vpop.permute.xlu0 %2107
        %2111 = vrot.lane.b32.xlu0 %v2090, 64
        %v2112 = vpop.permute.xlu0 %2111
        %2115 = vrot.lane.b32.xlu0 %v2091, 96
        %v2116 = vpop.permute.xlu0 %2115
        %2119 = vrot.lane.b32.xlu0 %v2093, 32
        %v2120 = vpop.permute.xlu0 %2119
        %2123 = vrot.lane.b32.xlu0 %v2094, 64
        %v2124 = vpop.permute.xlu0 %2123
        %2127 = vrot.lane.b32.xlu0 %v2095, 96
        %v2128 = vpop.permute.xlu0 %2127
        %2131 = vrot.lane.b32.xlu0 %v2097, 32
        %v2132 = vpop.permute.xlu0 %2131
        %2135 = vrot.lane.b32.xlu0 %v2098, 64
        %v2136 = vpop.permute.xlu0 %2135
        %2139 = vrot.lane.b32.xlu0 %v2099, 96
        %v2140 = vpop.permute.xlu0 %2139
        %2143 = vrot.lane.b32.xlu0 %v2103, 32
        %v2144 = vpop.permute.xlu0 %2143
        %2147 = vrot.lane.b32.xlu0 %v2104, 64
        %v2148 = vpop.permute.xlu0 %2147
        %2151 = vrot.lane.b32.xlu0 %v2105, 96
        %v2152 = vpop.permute.xlu0 %2151
        %v2154 = vsel %vm413, %v2088, %v2108
        %v2155 = vsel %vm1482, %v2154, %v2112
        %v2156 = vsel %vm1491, %v2155, %v2116
        %v2157 = vsel %vm413, %v2092, %v2120
        %v2158 = vsel %vm1482, %v2157, %v2124
        %v2159 = vsel %vm1491, %v2158, %v2128
        %v2160 = vsel %vm413, %v2096, %v2132
        %v2161 = vsel %vm1482, %v2160, %v2136
        %v2162 = vsel %vm1491, %v2161, %v2140
        %v2163 = vsel %vm413, %v2101, %v2144
        %v2164 = vsel %vm1482, %v2163, %v2148
        %v2165 = vsel %vm1491, %v2164, %v2152
        %v2166 = vld [vmem:[%s6] sm:$0xff]
        %v2167 = vld [vmem:[%s6 + $0x8] sm:$0xff]
        %v2168 = vld [vmem:[%s6 + $0x10] sm:$0xff]
        %v2169 = vld [vmem:[%s6 + $0x18] sm:$0xff]
        %v2170 = vld [vmem:[%s6 + $0x20] sm:$0xff]
        %v2171 = vld [vmem:[%s6 + $0x28] sm:$0xff]
        %v2172 = vld [vmem:[%s6 + $0x30] sm:$0xff]
        %v2173 = vld [vmem:[%s6 + $0x38] sm:$0xff]
        %v2174 = vld [vmem:[%s6 + $0x40] sm:$0xff]
        %v2175 = vld [vmem:[%s6 + $0x48] sm:$0xff]
        %v2176 = vld [vmem:[%s6 + $0x50] sm:$0xff]
        %v2177 = vld [vmem:[%s6 + $0x58] sm:$0xff]
        %v2178 = vld [vmem:[%s6 + $0x60] sm:$0xff]
        %v2179 = vld [vmem:[%s6 + $0x68] sm:$0xff]
        %v2180 = vld [vmem:[%s6 + $0x70] sm:$0xff]
        %v2181 = vld [vmem:[%s6 + $0x78] sm:$0xff]
        %v2182 = vld [vmem:[%s6 + $0x80] sm:$0xff]
        %v2183 = vld [vmem:[%s6 + $0x88] sm:$0xff]
        %v2184 = vld [vmem:[%s6 + $0x90] sm:$0xff]
        %v2185 = vld [vmem:[%s6 + $0x98] sm:$0xff]
        %v2186 = vld [vmem:[%s6 + $0xa0] sm:$0xff]
        %v2187 = vld [vmem:[%s6 + $0xa8] sm:$0xff]
        %v2188 = vld [vmem:[%s6 + $0xb0] sm:$0xff]
        %v2189 = vld [vmem:[%s6 + $0xb8] sm:$0xff]
        %v2190 = vld [vmem:[%s6 + $0xc0] sm:$0xff]
        %v2191 = vld [vmem:[%s6 + $0xc8] sm:$0xff]
        %v2192 = vld [vmem:[%s6 + $0xd0] sm:$0xff]
        %v2193 = vld [vmem:[%s6 + $0xd8] sm:$0xff]
        %v2194 = vld [vmem:[%s6 + $0xe0] sm:$0xff]
        %v2195 = vld [vmem:[%s6 + $0xe8] sm:$0xff]
        %v2196 = vld [vmem:[%s6 + $0xf0] sm:$0xff]
        %v2197 = vld [vmem:[%s6 + $0xf8] sm:$0xff]
        %v2198 = vld [vmem:[%s6 + $0x100] sm:$0xff]
        %v2199 = vld [vmem:[%s6 + $0x108] sm:$0xff]
        %v2200 = vld [vmem:[%s6 + $0x110] sm:$0xff]
        %v2201 = vld [vmem:[%s6 + $0x118] sm:$0xff]
        %v2202 = vld [vmem:[%s6 + $0x120] sm:$0xff]
        %v2203 = vld [vmem:[%s6 + $0x128] sm:$0xff]
        %v2204 = vld [vmem:[%s6 + $0x130] sm:$0xff]
        %v2205 = vld [vmem:[%s6 + $0x138] sm:$0xff]
        %v2206 = vld [vmem:[%s6 + $0x140] sm:$0xff]
        %v2207 = vld [vmem:[%s6 + $0x148] sm:$0xff]
        %v2208 = vld [vmem:[%s6 + $0x150] sm:$0xff]
        %v2209 = vld [vmem:[%s6 + $0x158] sm:$0xff]
        %v2210 = vld [vmem:[%s6 + $0x160] sm:$0xff]
        %v2211 = vld [vmem:[%s6 + $0x168] sm:$0xff]
        %v2212 = vld [vmem:[%s6 + $0x170] sm:$0xff]
        %v2213 = vld [vmem:[%s6 + $0x178] sm:$0xff]
        %v2214 = vld [vmem:[%s6 + $0x180] sm:$0xff]
        %v2215 = vld [vmem:[%s6 + $0x188] sm:$0xff]
        %v2216 = vld [vmem:[%s6 + $0x190] sm:$0xff]
        %v2217 = vld [vmem:[%s6 + $0x198] sm:$0xff]
        %v2218 = vld [vmem:[%s6 + $0x1a0] sm:$0xff]
        %v2219 = vld [vmem:[%s6 + $0x1a8] sm:$0xff]
        %v2220 = vld [vmem:[%s6 + $0x1b0] sm:$0xff]
        %v2221 = vld [vmem:[%s6 + $0x1b8] sm:$0xff]
        %v2222 = vld [vmem:[%s6 + $0x1c0] sm:$0xff]
        %v2223 = vld [vmem:[%s6 + $0x1c8] sm:$0xff]
        %v2224 = vld [vmem:[%s6 + $0x1d0] sm:$0xff]
        %v2225 = vld [vmem:[%s6 + $0x1d8] sm:$0xff]
        %v2226 = vld [vmem:[%s6 + $0x1e0] sm:$0xff]
        %v2227 = vld [vmem:[%s6 + $0x1e8] sm:$0xff]
        %v2228 = vld [vmem:[%s6 + $0x1f0] sm:$0xff]
        %v2229 = vld [vmem:[%s6 + $0x1f8] sm:$0xff]
        %v2230 = vld [vmem:[%s7] sm:$0x1]
        %v2232 = vlaneseq
        %v2233 = vshrl.u32 %v2232, 7
        %v2234 = vsub.s32 0, %v2233
        %v2235 = vrot.slane %v2230, %v2234
        %2237 = vmatprep.subr.mxu0 0.0
        %2238 = vmatpush1.msra.mxu0 %v2181
        %2239 = vmatprep.subr.mxu0 0.0
        %2240 = vmatpush1.msra.mxu0 %v2180
        %2241 = vmatprep.subr.mxu0 0.0
        %2242 = vmatpush1.msra.mxu0 %v2179
        %2243 = vmatprep.subr.mxu0 0.0
        %2244 = vmatpush1.msra.mxu0 %v2178
        %2245 = vmatprep.subr.mxu0 0.0
        %2246 = vmatpush1.msra.mxu0 %v2177
        %2247 = vmatprep.subr.mxu0 0.0
        %2248 = vmatpush1.msra.mxu0 %v2176
        %2249 = vmatprep.subr.mxu0 0.0
        %2250 = vmatpush1.msra.mxu0 %v2175
        %2251 = vmatprep.subr.mxu0 0.0
        %2252 = vmatpush1.msra.mxu0 %v2174
        %2253 = vmatprep.subr.mxu0 0.0
        %2254 = vmatpush1.msra.mxu0 %v2173
        %2255 = vmatprep.subr.mxu0 0.0
        %2256 = vmatpush1.msra.mxu0 %v2172
        %2257 = vmatprep.subr.mxu0 0.0
        %2258 = vmatpush1.msra.mxu0 %v2171
        %2259 = vmatprep.subr.mxu0 0.0
        %2260 = vmatpush1.msra.mxu0 %v2170
        %2261 = vmatprep.subr.mxu0 0.0
        %2262 = vmatpush1.msra.mxu0 %v2169
        %2263 = vmatprep.subr.mxu0 0.0
        %2264 = vmatpush1.msra.mxu0 %v2168
        %2265 = vmatprep.subr.mxu0 0.0
        %2266 = vmatpush1.msra.mxu0 %v2167
        %2267 = vmatprep.subr.mxu0 0.0
        %2268 = vmatpush1.msra.mxu0 %v2166
        %2269 = vmatprep.subr.mxu0 0.0
        %2270 = vmatpush2.msra.mxu0 %v2197
        %2271 = vmatprep.subr.mxu0 0.0
        %2272 = vmatpush2.msra.mxu0 %v2196
        %2273 = vmatprep.subr.mxu0 0.0
        %2274 = vmatpush2.msra.mxu0 %v2195
        %2275 = vmatprep.subr.mxu0 0.0
        %2276 = vmatpush2.msra.mxu0 %v2194
        %2277 = vmatprep.subr.mxu0 0.0
        %2278 = vmatpush2.msra.mxu0 %v2193
        %2279 = vmatprep.subr.mxu0 0.0
        %2280 = vmatpush2.msra.mxu0 %v2192
        %2281 = vmatprep.subr.mxu0 0.0
        %2282 = vmatpush2.msra.mxu0 %v2191
        %2283 = vmatprep.subr.mxu0 0.0
        %2284 = vmatpush2.msra.mxu0 %v2190
        %2285 = vmatprep.subr.mxu0 0.0
        %2286 = vmatpush2.msra.mxu0 %v2189
        %2287 = vmatprep.subr.mxu0 0.0
        %2288 = vmatpush2.msra.mxu0 %v2188
        %2289 = vmatprep.subr.mxu0 0.0
        %2290 = vmatpush2.msra.mxu0 %v2187
        %2291 = vmatprep.subr.mxu0 0.0
        %2292 = vmatpush2.msra.mxu0 %v2186
        %2293 = vmatprep.subr.mxu0 0.0
        %2294 = vmatpush2.msra.mxu0 %v2185
        %2295 = vmatprep.subr.mxu0 0.0
        %2296 = vmatpush2.msra.mxu0 %v2184
        %2297 = vmatprep.subr.mxu0 0.0
        %2298 = vmatpush2.msra.mxu0 %v2183
        %2299 = vmatprep.subr.mxu0 0.0
        %2300 = vmatpush2.msra.mxu0 %v2182
        %2301 = vmatprep.mubr.f32.mxu0 %v2159
        %2302 = vmatmul.mubr.f32.gmra.mxu0 %v2156
        %v2303 = vpop.f32.mrf.mxu0
        %v2304 = vadd.f32 %v2235, %v2303
        %v2305 = vpop.f32.mrf.mxu0
        %2306 = vdwg.mxu0
        %2307 = vmatprep.subr.mxu0 0.0
        %2308 = vmatpush1.msra.mxu0 %v2213
        %2309 = vmatprep.subr.mxu0 0.0
        %2310 = vmatpush1.msra.mxu0 %v2212
        %2311 = vmatprep.subr.mxu0 0.0
        %2312 = vmatpush1.msra.mxu0 %v2211
        %2313 = vmatprep.subr.mxu0 0.0
        %2314 = vmatpush1.msra.mxu0 %v2210
        %2315 = vmatprep.subr.mxu0 0.0
        %2316 = vmatpush1.msra.mxu0 %v2209
        %2317 = vmatprep.subr.mxu0 0.0
        %2318 = vmatpush1.msra.mxu0 %v2208
        %2319 = vmatprep.subr.mxu0 0.0
        %2320 = vmatpush1.msra.mxu0 %v2207
        %2321 = vmatprep.subr.mxu0 0.0
        %2322 = vmatpush1.msra.mxu0 %v2206
        %2323 = vmatprep.subr.mxu0 0.0
        %2324 = vmatpush1.msra.mxu0 %v2205
        %2325 = vmatprep.subr.mxu0 0.0
        %2326 = vmatpush1.msra.mxu0 %v2204
        %2327 = vmatprep.subr.mxu0 0.0
        %2328 = vmatpush1.msra.mxu0 %v2203
        %2329 = vmatprep.subr.mxu0 0.0
        %2330 = vmatpush1.msra.mxu0 %v2202
        %2331 = vmatprep.subr.mxu0 0.0
        %2332 = vmatpush1.msra.mxu0 %v2201
        %2333 = vmatprep.subr.mxu0 0.0
        %2334 = vmatpush1.msra.mxu0 %v2200
        %2335 = vmatprep.subr.mxu0 0.0
        %2336 = vmatpush1.msra.mxu0 %v2199
        %2337 = vmatprep.subr.mxu0 0.0
        %2338 = vmatpush1.msra.mxu0 %v2198
        %2339 = vmatprep.subr.mxu0 0.0
        %2340 = vmatpush2.msra.mxu0 %v2229
        %2341 = vmatprep.subr.mxu0 0.0
        %2342 = vmatpush2.msra.mxu0 %v2228
        %2343 = vmatprep.subr.mxu0 0.0
        %2344 = vmatpush2.msra.mxu0 %v2227
        %2345 = vmatprep.subr.mxu0 0.0
        %2346 = vmatpush2.msra.mxu0 %v2226
        %2347 = vmatprep.subr.mxu0 0.0
        %2348 = vmatpush2.msra.mxu0 %v2225
        %2349 = vmatprep.subr.mxu0 0.0
        %2350 = vmatpush2.msra.mxu0 %v2224
        %2351 = vmatprep.subr.mxu0 0.0
        %2352 = vmatpush2.msra.mxu0 %v2223
        %2353 = vmatprep.subr.mxu0 0.0
        %2354 = vmatpush2.msra.mxu0 %v2222
        %2355 = vmatprep.subr.mxu0 0.0
        %2356 = vmatpush2.msra.mxu0 %v2221
        %2357 = vmatprep.subr.mxu0 0.0
        %2358 = vmatpush2.msra.mxu0 %v2220
        %2359 = vmatprep.subr.mxu0 0.0
        %2360 = vmatpush2.msra.mxu0 %v2219
        %2361 = vmatprep.subr.mxu0 0.0
        %2362 = vmatpush2.msra.mxu0 %v2218
        %2363 = vmatprep.subr.mxu0 0.0
        %2364 = vmatpush2.msra.mxu0 %v2217
        %2365 = vmatprep.subr.mxu0 0.0
        %2366 = vmatpush2.msra.mxu0 %v2216
        %2367 = vmatprep.subr.mxu0 0.0
        %2368 = vmatpush2.msra.mxu0 %v2215
        %2369 = vmatprep.subr.mxu0 0.0
        %2370 = vmatpush2.msra.mxu0 %v2214
        %2371 = vmatprep.mubr.f32.mxu0 %v2165
        %2372 = vmatmul.mubr.f32.gmra.mxu0 %v2162
        %v2373 = vpop.f32.mrf.mxu0
        %v2374 = vadd.f32 %v2304, %v2373
        %v2375 = vpop.f32.mrf.mxu0
        %2376 = vdwg.mxu0
        %v2377 = vmax.f32 %v2374, 0.0
        %s2378 = scalar_lea.vmem [#allocation6], 32
        %v2379 = vld [vmem:[%s2378] sm:$0xf]
        %s2380 = scalar_lea.vmem [#allocation7], 32
        %v2381 = vld [vmem:[%s2380] sm:$0xf]
        %v2382 = vld [vmem:[%s2378 + $0x1] sm:$0xf]
        %v2383 = vld [vmem:[%s2380 + $0x1] sm:$0xf]
        %s2384 = scalar_lea.vmem [#allocation8], 32
        %v2385 = vld [vmem:[%s2384] sm:$0xf]
        %s2386 = scalar_lea.vmem [#allocation9], 32
        %v2387 = vld [vmem:[%s2386] sm:$0xf]
        %v2388 = vld [vmem:[%s2384 + $0x1] sm:$0xf]
        %v2389 = vld [vmem:[%s2386 + $0x1] sm:$0xf]
        %2391 = vrot.lane.b32.xlu0 %v2381, 32
        %v2392 = vpop.permute.xlu0 %2391
        %2395 = vrot.lane.b32.xlu0 %v2382, 64
        %v2396 = vpop.permute.xlu0 %2395
        %2399 = vrot.lane.b32.xlu0 %v2383, 96
        %v2400 = vpop.permute.xlu0 %2399
        %2403 = vrot.lane.b32.xlu0 %v2387, 32
        %v2404 = vpop.permute.xlu0 %2403
        %2407 = vrot.lane.b32.xlu0 %v2388, 64
        %v2408 = vpop.permute.xlu0 %2407
        %2411 = vrot.lane.b32.xlu0 %v2389, 96
        %v2412 = vpop.permute.xlu0 %2411
        %v2414 = vsel %vm413, %v2379, %v2392
        %v2415 = vsel %vm1482, %v2414, %v2396
        %v2416 = vsel %vm1491, %v2415, %v2400
        %v2417 = vsel %vm413, %v2385, %v2404
        %v2418 = vsel %vm1482, %v2417, %v2408
        %v2419 = vsel %vm1491, %v2418, %v2412
        %2420 = vmatprep.subr.mxu0 0.0
        %2421 = vmatpush1.msra.mxu0 %v2181
        %2422 = vmatprep.subr.mxu0 0.0
        %2423 = vmatpush1.msra.mxu0 %v2180
        %2424 = vmatprep.subr.mxu0 0.0
        %2425 = vmatpush1.msra.mxu0 %v2179
        %2426 = vmatprep.subr.mxu0 0.0
        %2427 = vmatpush1.msra.mxu0 %v2178
        %2428 = vmatprep.subr.mxu0 0.0
        %2429 = vmatpush1.msra.mxu0 %v2177
        %2430 = vmatprep.subr.mxu0 0.0
        %2431 = vmatpush1.msra.mxu0 %v2176
        %2432 = vmatprep.subr.mxu0 0.0
        %2433 = vmatpush1.msra.mxu0 %v2175
        %2434 = vmatprep.subr.mxu0 0.0
        %2435 = vmatpush1.msra.mxu0 %v2174
        %2436 = vmatprep.subr.mxu0 0.0
        %2437 = vmatpush1.msra.mxu0 %v2173
        %2438 = vmatprep.subr.mxu0 0.0
        %2439 = vmatpush1.msra.mxu0 %v2172
        %2440 = vmatprep.subr.mxu0 0.0
        %2441 = vmatpush1.msra.mxu0 %v2171
        %2442 = vmatprep.subr.mxu0 0.0
        %2443 = vmatpush1.msra.mxu0 %v2170
        %2444 = vmatprep.subr.mxu0 0.0
        %2445 = vmatpush1.msra.mxu0 %v2169
        %2446 = vmatprep.subr.mxu0 0.0
        %2447 = vmatpush1.msra.mxu0 %v2168
        %2448 = vmatprep.subr.mxu0 0.0
        %2449 = vmatpush1.msra.mxu0 %v2167
        %2450 = vmatprep.subr.mxu0 0.0
        %2451 = vmatpush1.msra.mxu0 %v2166
        %2452 = vmatprep.subr.mxu0 0.0
        %2453 = vmatpush2.msra.mxu0 %v2197
        %2454 = vmatprep.subr.mxu0 0.0
        %2455 = vmatpush2.msra.mxu0 %v2196
        %2456 = vmatprep.subr.mxu0 0.0
        %2457 = vmatpush2.msra.mxu0 %v2195
        %2458 = vmatprep.subr.mxu0 0.0
        %2459 = vmatpush2.msra.mxu0 %v2194
        %2460 = vmatprep.subr.mxu0 0.0
        %2461 = vmatpush2.msra.mxu0 %v2193
        %2462 = vmatprep.subr.mxu0 0.0
        %2463 = vmatpush2.msra.mxu0 %v2192
        %2464 = vmatprep.subr.mxu0 0.0
        %2465 = vmatpush2.msra.mxu0 %v2191
        %2466 = vmatprep.subr.mxu0 0.0
        %2467 = vmatpush2.msra.mxu0 %v2190
        %2468 = vmatprep.subr.mxu0 0.0
        %2469 = vmatpush2.msra.mxu0 %v2189
        %2470 = vmatprep.subr.mxu0 0.0
        %2471 = vmatpush2.msra.mxu0 %v2188
        %2472 = vmatprep.subr.mxu0 0.0
        %2473 = vmatpush2.msra.mxu0 %v2187
        %2474 = vmatprep.subr.mxu0 0.0
        %2475 = vmatpush2.msra.mxu0 %v2186
        %2476 = vmatprep.subr.mxu0 0.0
        %2477 = vmatpush2.msra.mxu0 %v2185
        %2478 = vmatprep.subr.mxu0 0.0
        %2479 = vmatpush2.msra.mxu0 %v2184
        %2480 = vmatprep.subr.mxu0 0.0
        %2481 = vmatpush2.msra.mxu0 %v2183
        %2482 = vmatprep.subr.mxu0 0.0
        %2483 = vmatpush2.msra.mxu0 %v2182
        %2484 = vmatprep.mubr.f32.mxu0 %v2165
        %2485 = vmatmul.mubr.f32.gmra.mxu0 %v2162
        %v2486 = vpop.f32.mrf.mxu0
        %v2487 = vadd.f32 %v2235, %v2486
        %v2488 = vpop.f32.mrf.mxu0
        %2489 = vdwg.mxu0
        %2490 = vmatprep.subr.mxu0 0.0
        %2491 = vmatpush1.msra.mxu0 %v2213
        %2492 = vmatprep.subr.mxu0 0.0
        %2493 = vmatpush1.msra.mxu0 %v2212
        %2494 = vmatprep.subr.mxu0 0.0
        %2495 = vmatpush1.msra.mxu0 %v2211
        %2496 = vmatprep.subr.mxu0 0.0
        %2497 = vmatpush1.msra.mxu0 %v2210
        %2498 = vmatprep.subr.mxu0 0.0
        %2499 = vmatpush1.msra.mxu0 %v2209
        %2500 = vmatprep.subr.mxu0 0.0
        %2501 = vmatpush1.msra.mxu0 %v2208
        %2502 = vmatprep.subr.mxu0 0.0
        %2503 = vmatpush1.msra.mxu0 %v2207
        %2504 = vmatprep.subr.mxu0 0.0
        %2505 = vmatpush1.msra.mxu0 %v2206
        %2506 = vmatprep.subr.mxu0 0.0
        %2507 = vmatpush1.msra.mxu0 %v2205
        %2508 = vmatprep.subr.mxu0 0.0
        %2509 = vmatpush1.msra.mxu0 %v2204
        %2510 = vmatprep.subr.mxu0 0.0
        %2511 = vmatpush1.msra.mxu0 %v2203
        %2512 = vmatprep.subr.mxu0 0.0
        %2513 = vmatpush1.msra.mxu0 %v2202
        %2514 = vmatprep.subr.mxu0 0.0
        %2515 = vmatpush1.msra.mxu0 %v2201
        %2516 = vmatprep.subr.mxu0 0.0
        %2517 = vmatpush1.msra.mxu0 %v2200
        %2518 = vmatprep.subr.mxu0 0.0
        %2519 = vmatpush1.msra.mxu0 %v2199
        %2520 = vmatprep.subr.mxu0 0.0
        %2521 = vmatpush1.msra.mxu0 %v2198
        %2522 = vmatprep.subr.mxu0 0.0
        %2523 = vmatpush2.msra.mxu0 %v2229
        %2524 = vmatprep.subr.mxu0 0.0
        %2525 = vmatpush2.msra.mxu0 %v2228
        %2526 = vmatprep.subr.mxu0 0.0
        %2527 = vmatpush2.msra.mxu0 %v2227
        %2528 = vmatprep.subr.mxu0 0.0
        %2529 = vmatpush2.msra.mxu0 %v2226
        %2530 = vmatprep.subr.mxu0 0.0
        %2531 = vmatpush2.msra.mxu0 %v2225
        %2532 = vmatprep.subr.mxu0 0.0
        %2533 = vmatpush2.msra.mxu0 %v2224
        %2534 = vmatprep.subr.mxu0 0.0
        %2535 = vmatpush2.msra.mxu0 %v2223
        %2536 = vmatprep.subr.mxu0 0.0
        %2537 = vmatpush2.msra.mxu0 %v2222
        %2538 = vmatprep.subr.mxu0 0.0
        %2539 = vmatpush2.msra.mxu0 %v2221
        %2540 = vmatprep.subr.mxu0 0.0
        %2541 = vmatpush2.msra.mxu0 %v2220
        %2542 = vmatprep.subr.mxu0 0.0
        %2543 = vmatpush2.msra.mxu0 %v2219
        %2544 = vmatprep.subr.mxu0 0.0
        %2545 = vmatpush2.msra.mxu0 %v2218
        %2546 = vmatprep.subr.mxu0 0.0
        %2547 = vmatpush2.msra.mxu0 %v2217
        %2548 = vmatprep.subr.mxu0 0.0
        %2549 = vmatpush2.msra.mxu0 %v2216
        %2550 = vmatprep.subr.mxu0 0.0
        %2551 = vmatpush2.msra.mxu0 %v2215
        %2552 = vmatprep.subr.mxu0 0.0
        %2553 = vmatpush2.msra.mxu0 %v2214
        %2554 = vmatprep.mubr.f32.mxu0 %v2419
        %2555 = vmatmul.mubr.f32.gmra.mxu0 %v2416
        %v2556 = vpop.f32.mrf.mxu0
        %v2557 = vadd.f32 %v2487, %v2556
        %v2558 = vpop.f32.mrf.mxu0
        %2559 = vdwg.mxu0
        %v2560 = vmax.f32 %v2557, 0.0
        %s2561 = scalar_lea.vmem [#allocation6], 48
        %v2562 = vld [vmem:[%s2561] sm:$0xf]
        %s2563 = scalar_lea.vmem [#allocation7], 48
        %v2564 = vld [vmem:[%s2563] sm:$0xf]
        %v2565 = vld [vmem:[%s2561 + $0x1] sm:$0xf]
        %v2566 = vld [vmem:[%s2563 + $0x1] sm:$0xf]
        %s2567 = scalar_lea.vmem [#allocation8], 48
        %v2568 = vld [vmem:[%s2567] sm:$0xf]
        %s2569 = scalar_lea.vmem [#allocation9], 48
        %v2570 = vld [vmem:[%s2569] sm:$0xf]
        %v2571 = vld [vmem:[%s2567 + $0x1] sm:$0xf]
        %v2572 = vld [vmem:[%s2569 + $0x1] sm:$0xf]
        %2574 = vrot.lane.b32.xlu0 %v2564, 32
        %v2575 = vpop.permute.xlu0 %2574
        %2578 = vrot.lane.b32.xlu0 %v2565, 64
        %v2579 = vpop.permute.xlu0 %2578
        %2582 = vrot.lane.b32.xlu0 %v2566, 96
        %v2583 = vpop.permute.xlu0 %2582
        %2586 = vrot.lane.b32.xlu0 %v2570, 32
        %v2587 = vpop.permute.xlu0 %2586
        %2590 = vrot.lane.b32.xlu0 %v2571, 64
        %v2591 = vpop.permute.xlu0 %2590
        %2594 = vrot.lane.b32.xlu0 %v2572, 96
        %v2595 = vpop.permute.xlu0 %2594
        %v2597 = vsel %vm413, %v2562, %v2575
        %v2598 = vsel %vm1482, %v2597, %v2579
        %v2599 = vsel %vm1491, %v2598, %v2583
        %v2600 = vsel %vm413, %v2568, %v2587
        %v2601 = vsel %vm1482, %v2600, %v2591
        %v2602 = vsel %vm1491, %v2601, %v2595
        %2603 = vmatprep.subr.mxu0 0.0
        %2604 = vmatpush1.msra.mxu0 %v2181
        %2605 = vmatprep.subr.mxu0 0.0
        %2606 = vmatpush1.msra.mxu0 %v2180
        %2607 = vmatprep.subr.mxu0 0.0
        %2608 = vmatpush1.msra.mxu0 %v2179
        %2609 = vmatprep.subr.mxu0 0.0
        %2610 = vmatpush1.msra.mxu0 %v2178
        %2611 = vmatprep.subr.mxu0 0.0
        %2612 = vmatpush1.msra.mxu0 %v2177
        %2613 = vmatprep.subr.mxu0 0.0
        %2614 = vmatpush1.msra.mxu0 %v2176
        %2615 = vmatprep.subr.mxu0 0.0
        %2616 = vmatpush1.msra.mxu0 %v2175
        %2617 = vmatprep.subr.mxu0 0.0
        %2618 = vmatpush1.msra.mxu0 %v2174
        %2619 = vmatprep.subr.mxu0 0.0
        %2620 = vmatpush1.msra.mxu0 %v2173
        %2621 = vmatprep.subr.mxu0 0.0
        %2622 = vmatpush1.msra.mxu0 %v2172
        %2623 = vmatprep.subr.mxu0 0.0
        %2624 = vmatpush1.msra.mxu0 %v2171
        %2625 = vmatprep.subr.mxu0 0.0
        %2626 = vmatpush1.msra.mxu0 %v2170
        %2627 = vmatprep.subr.mxu0 0.0
        %2628 = vmatpush1.msra.mxu0 %v2169
        %2629 = vmatprep.subr.mxu0 0.0
        %2630 = vmatpush1.msra.mxu0 %v2168
        %2631 = vmatprep.subr.mxu0 0.0
        %2632 = vmatpush1.msra.mxu0 %v2167
        %2633 = vmatprep.subr.mxu0 0.0
        %2634 = vmatpush1.msra.mxu0 %v2166
        %2635 = vmatprep.subr.mxu0 0.0
        %2636 = vmatpush2.msra.mxu0 %v2197
        %2637 = vmatprep.subr.mxu0 0.0
        %2638 = vmatpush2.msra.mxu0 %v2196
        %2639 = vmatprep.subr.mxu0 0.0
        %2640 = vmatpush2.msra.mxu0 %v2195
        %2641 = vmatprep.subr.mxu0 0.0
        %2642 = vmatpush2.msra.mxu0 %v2194
        %2643 = vmatprep.subr.mxu0 0.0
        %2644 = vmatpush2.msra.mxu0 %v2193
        %2645 = vmatprep.subr.mxu0 0.0
        %2646 = vmatpush2.msra.mxu0 %v2192
        %2647 = vmatprep.subr.mxu0 0.0
        %2648 = vmatpush2.msra.mxu0 %v2191
        %2649 = vmatprep.subr.mxu0 0.0
        %2650 = vmatpush2.msra.mxu0 %v2190
        %2651 = vmatprep.subr.mxu0 0.0
        %2652 = vmatpush2.msra.mxu0 %v2189
        %2653 = vmatprep.subr.mxu0 0.0
        %2654 = vmatpush2.msra.mxu0 %v2188
        %2655 = vmatprep.subr.mxu0 0.0
        %2656 = vmatpush2.msra.mxu0 %v2187
        %2657 = vmatprep.subr.mxu0 0.0
        %2658 = vmatpush2.msra.mxu0 %v2186
        %2659 = vmatprep.subr.mxu0 0.0
        %2660 = vmatpush2.msra.mxu0 %v2185
        %2661 = vmatprep.subr.mxu0 0.0
        %2662 = vmatpush2.msra.mxu0 %v2184
        %2663 = vmatprep.subr.mxu0 0.0
        %2664 = vmatpush2.msra.mxu0 %v2183
        %2665 = vmatprep.subr.mxu0 0.0
        %2666 = vmatpush2.msra.mxu0 %v2182
        %2667 = vmatprep.mubr.f32.mxu0 %v2419
        %2668 = vmatmul.mubr.f32.gmra.mxu0 %v2416
        %v2669 = vpop.f32.mrf.mxu0
        %v2670 = vadd.f32 %v2235, %v2669
        %v2671 = vpop.f32.mrf.mxu0
        %2672 = vdwg.mxu0
        %2673 = vmatprep.subr.mxu0 0.0
        %2674 = vmatpush1.msra.mxu0 %v2213
        %2675 = vmatprep.subr.mxu0 0.0
        %2676 = vmatpush1.msra.mxu0 %v2212
        %2677 = vmatprep.subr.mxu0 0.0
        %2678 = vmatpush1.msra.mxu0 %v2211
        %2679 = vmatprep.subr.mxu0 0.0
        %2680 = vmatpush1.msra.mxu0 %v2210
        %2681 = vmatprep.subr.mxu0 0.0
        %2682 = vmatpush1.msra.mxu0 %v2209
        %2683 = vmatprep.subr.mxu0 0.0
        %2684 = vmatpush1.msra.mxu0 %v2208
        %2685 = vmatprep.subr.mxu0 0.0
        %2686 = vmatpush1.msra.mxu0 %v2207
        %2687 = vmatprep.subr.mxu0 0.0
        %2688 = vmatpush1.msra.mxu0 %v2206
        %2689 = vmatprep.subr.mxu0 0.0
        %2690 = vmatpush1.msra.mxu0 %v2205
        %2691 = vmatprep.subr.mxu0 0.0
        %2692 = vmatpush1.msra.mxu0 %v2204
        %2693 = vmatprep.subr.mxu0 0.0
        %2694 = vmatpush1.msra.mxu0 %v2203
        %2695 = vmatprep.subr.mxu0 0.0
        %2696 = vmatpush1.msra.mxu0 %v2202
        %2697 = vmatprep.subr.mxu0 0.0
        %2698 = vmatpush1.msra.mxu0 %v2201
        %2699 = vmatprep.subr.mxu0 0.0
        %2700 = vmatpush1.msra.mxu0 %v2200
        %2701 = vmatprep.subr.mxu0 0.0
        %2702 = vmatpush1.msra.mxu0 %v2199
        %2703 = vmatprep.subr.mxu0 0.0
        %2704 = vmatpush1.msra.mxu0 %v2198
        %2705 = vmatprep.subr.mxu0 0.0
        %2706 = vmatpush2.msra.mxu0 %v2229
        %2707 = vmatprep.subr.mxu0 0.0
        %2708 = vmatpush2.msra.mxu0 %v2228
        %2709 = vmatprep.subr.mxu0 0.0
        %2710 = vmatpush2.msra.mxu0 %v2227
        %2711 = vmatprep.subr.mxu0 0.0
        %2712 = vmatpush2.msra.mxu0 %v2226
        %2713 = vmatprep.subr.mxu0 0.0
        %2714 = vmatpush2.msra.mxu0 %v2225
        %2715 = vmatprep.subr.mxu0 0.0
        %2716 = vmatpush2.msra.mxu0 %v2224
        %2717 = vmatprep.subr.mxu0 0.0
        %2718 = vmatpush2.msra.mxu0 %v2223
        %2719 = vmatprep.subr.mxu0 0.0
        %2720 = vmatpush2.msra.mxu0 %v2222
        %2721 = vmatprep.subr.mxu0 0.0
        %2722 = vmatpush2.msra.mxu0 %v2221
        %2723 = vmatprep.subr.mxu0 0.0
        %2724 = vmatpush2.msra.mxu0 %v2220
        %2725 = vmatprep.subr.mxu0 0.0
        %2726 = vmatpush2.msra.mxu0 %v2219
        %2727 = vmatprep.subr.mxu0 0.0
        %2728 = vmatpush2.msra.mxu0 %v2218
        %2729 = vmatprep.subr.mxu0 0.0
        %2730 = vmatpush2.msra.mxu0 %v2217
        %2731 = vmatprep.subr.mxu0 0.0
        %2732 = vmatpush2.msra.mxu0 %v2216
        %2733 = vmatprep.subr.mxu0 0.0
        %2734 = vmatpush2.msra.mxu0 %v2215
        %2735 = vmatprep.subr.mxu0 0.0
        %2736 = vmatpush2.msra.mxu0 %v2214
        %2737 = vmatprep.mubr.f32.mxu0 %v2602
        %2738 = vmatmul.mubr.f32.gmra.mxu0 %v2599
        %v2739 = vpop.f32.mrf.mxu0
        %v2740 = vadd.f32 %v2670, %v2739
        %v2741 = vpop.f32.mrf.mxu0
        %2742 = vdwg.mxu0
        %v2743 = vmax.f32 %v2740, 0.0
        %s2744 = scalar_lea.vmem [#allocation6], 64
        %v2745 = vld [vmem:[%s2744] sm:$0xf]
        %s2746 = scalar_lea.vmem [#allocation7], 64
        %v2747 = vld [vmem:[%s2746] sm:$0xf]
        %v2748 = vld [vmem:[%s2744 + $0x1] sm:$0xf]
        %v2749 = vld [vmem:[%s2746 + $0x1] sm:$0xf]
        %s2750 = scalar_lea.vmem [#allocation8], 64
        %v2751 = vld [vmem:[%s2750] sm:$0xf]
        %s2752 = scalar_lea.vmem [#allocation9], 64
        %v2753 = vld [vmem:[%s2752] sm:$0xf]
        %v2754 = vld [vmem:[%s2750 + $0x1] sm:$0xf]
        %v2755 = vld [vmem:[%s2752 + $0x1] sm:$0xf]
        %2757 = vrot.lane.b32.xlu0 %v2747, 32
        %v2758 = vpop.permute.xlu0 %2757
        %2761 = vrot.lane.b32.xlu0 %v2748, 64
        %v2762 = vpop.permute.xlu0 %2761
        %2765 = vrot.lane.b32.xlu0 %v2749, 96
        %v2766 = vpop.permute.xlu0 %2765
        %2769 = vrot.lane.b32.xlu0 %v2753, 32
        %v2770 = vpop.permute.xlu0 %2769
        %2773 = vrot.lane.b32.xlu0 %v2754, 64
        %v2774 = vpop.permute.xlu0 %2773
        %2777 = vrot.lane.b32.xlu0 %v2755, 96
        %v2778 = vpop.permute.xlu0 %2777
        %v2780 = vsel %vm413, %v2745, %v2758
        %v2781 = vsel %vm1482, %v2780, %v2762
        %v2782 = vsel %vm1491, %v2781, %v2766
        %v2783 = vsel %vm413, %v2751, %v2770
        %v2784 = vsel %vm1482, %v2783, %v2774
        %v2785 = vsel %vm1491, %v2784, %v2778
        %2786 = vmatprep.subr.mxu0 0.0
        %2787 = vmatpush1.msra.mxu0 %v2181
        %2788 = vmatprep.subr.mxu0 0.0
        %2789 = vmatpush1.msra.mxu0 %v2180
        %2790 = vmatprep.subr.mxu0 0.0
        %2791 = vmatpush1.msra.mxu0 %v2179
        %2792 = vmatprep.subr.mxu0 0.0
        %2793 = vmatpush1.msra.mxu0 %v2178
        %2794 = vmatprep.subr.mxu0 0.0
        %2795 = vmatpush1.msra.mxu0 %v2177
        %2796 = vmatprep.subr.mxu0 0.0
        %2797 = vmatpush1.msra.mxu0 %v2176
        %2798 = vmatprep.subr.mxu0 0.0
        %2799 = vmatpush1.msra.mxu0 %v2175
        %2800 = vmatprep.subr.mxu0 0.0
        %2801 = vmatpush1.msra.mxu0 %v2174
        %2802 = vmatprep.subr.mxu0 0.0
        %2803 = vmatpush1.msra.mxu0 %v2173
        %2804 = vmatprep.subr.mxu0 0.0
        %2805 = vmatpush1.msra.mxu0 %v2172
        %2806 = vmatprep.subr.mxu0 0.0
        %2807 = vmatpush1.msra.mxu0 %v2171
        %2808 = vmatprep.subr.mxu0 0.0
        %2809 = vmatpush1.msra.mxu0 %v2170
        %2810 = vmatprep.subr.mxu0 0.0
        %2811 = vmatpush1.msra.mxu0 %v2169
        %2812 = vmatprep.subr.mxu0 0.0
        %2813 = vmatpush1.msra.mxu0 %v2168
        %2814 = vmatprep.subr.mxu0 0.0
        %2815 = vmatpush1.msra.mxu0 %v2167
        %2816 = vmatprep.subr.mxu0 0.0
        %2817 = vmatpush1.msra.mxu0 %v2166
        %2818 = vmatprep.subr.mxu0 0.0
        %2819 = vmatpush2.msra.mxu0 %v2197
        %2820 = vmatprep.subr.mxu0 0.0
        %2821 = vmatpush2.msra.mxu0 %v2196
        %2822 = vmatprep.subr.mxu0 0.0
        %2823 = vmatpush2.msra.mxu0 %v2195
        %2824 = vmatprep.subr.mxu0 0.0
        %2825 = vmatpush2.msra.mxu0 %v2194
        %2826 = vmatprep.subr.mxu0 0.0
        %2827 = vmatpush2.msra.mxu0 %v2193
        %2828 = vmatprep.subr.mxu0 0.0
        %2829 = vmatpush2.msra.mxu0 %v2192
        %2830 = vmatprep.subr.mxu0 0.0
        %2831 = vmatpush2.msra.mxu0 %v2191
        %2832 = vmatprep.subr.mxu0 0.0
        %2833 = vmatpush2.msra.mxu0 %v2190
        %2834 = vmatprep.subr.mxu0 0.0
        %2835 = vmatpush2.msra.mxu0 %v2189
        %2836 = vmatprep.subr.mxu0 0.0
        %2837 = vmatpush2.msra.mxu0 %v2188
        %2838 = vmatprep.subr.mxu0 0.0
        %2839 = vmatpush2.msra.mxu0 %v2187
        %2840 = vmatprep.subr.mxu0 0.0
        %2841 = vmatpush2.msra.mxu0 %v2186
        %2842 = vmatprep.subr.mxu0 0.0
        %2843 = vmatpush2.msra.mxu0 %v2185
        %2844 = vmatprep.subr.mxu0 0.0
        %2845 = vmatpush2.msra.mxu0 %v2184
        %2846 = vmatprep.subr.mxu0 0.0
        %2847 = vmatpush2.msra.mxu0 %v2183
        %2848 = vmatprep.subr.mxu0 0.0
        %2849 = vmatpush2.msra.mxu0 %v2182
        %2850 = vmatprep.mubr.f32.mxu0 %v2602
        %2851 = vmatmul.mubr.f32.gmra.mxu0 %v2599
        %v2852 = vpop.f32.mrf.mxu0
        %v2853 = vadd.f32 %v2235, %v2852
        %v2854 = vpop.f32.mrf.mxu0
        %2855 = vdwg.mxu0
        %2856 = vmatprep.subr.mxu0 0.0
        %2857 = vmatpush1.msra.mxu0 %v2213
        %2858 = vmatprep.subr.mxu0 0.0
        %2859 = vmatpush1.msra.mxu0 %v2212
        %2860 = vmatprep.subr.mxu0 0.0
        %2861 = vmatpush1.msra.mxu0 %v2211
        %2862 = vmatprep.subr.mxu0 0.0
        %2863 = vmatpush1.msra.mxu0 %v2210
        %2864 = vmatprep.subr.mxu0 0.0
        %2865 = vmatpush1.msra.mxu0 %v2209
        %2866 = vmatprep.subr.mxu0 0.0
        %2867 = vmatpush1.msra.mxu0 %v2208
        %2868 = vmatprep.subr.mxu0 0.0
        %2869 = vmatpush1.msra.mxu0 %v2207
        %2870 = vmatprep.subr.mxu0 0.0
        %2871 = vmatpush1.msra.mxu0 %v2206
        %2872 = vmatprep.subr.mxu0 0.0
        %2873 = vmatpush1.msra.mxu0 %v2205
        %2874 = vmatprep.subr.mxu0 0.0
        %2875 = vmatpush1.msra.mxu0 %v2204
        %2876 = vmatprep.subr.mxu0 0.0
        %2877 = vmatpush1.msra.mxu0 %v2203
        %2878 = vmatprep.subr.mxu0 0.0
        %2879 = vmatpush1.msra.mxu0 %v2202
        %2880 = vmatprep.subr.mxu0 0.0
        %2881 = vmatpush1.msra.mxu0 %v2201
        %2882 = vmatprep.subr.mxu0 0.0
        %2883 = vmatpush1.msra.mxu0 %v2200
        %2884 = vmatprep.subr.mxu0 0.0
        %2885 = vmatpush1.msra.mxu0 %v2199
        %2886 = vmatprep.subr.mxu0 0.0
        %2887 = vmatpush1.msra.mxu0 %v2198
        %2888 = vmatprep.subr.mxu0 0.0
        %2889 = vmatpush2.msra.mxu0 %v2229
        %2890 = vmatprep.subr.mxu0 0.0
        %2891 = vmatpush2.msra.mxu0 %v2228
        %2892 = vmatprep.subr.mxu0 0.0
        %2893 = vmatpush2.msra.mxu0 %v2227
        %2894 = vmatprep.subr.mxu0 0.0
        %2895 = vmatpush2.msra.mxu0 %v2226
        %2896 = vmatprep.subr.mxu0 0.0
        %2897 = vmatpush2.msra.mxu0 %v2225
        %2898 = vmatprep.subr.mxu0 0.0
        %2899 = vmatpush2.msra.mxu0 %v2224
        %2900 = vmatprep.subr.mxu0 0.0
        %2901 = vmatpush2.msra.mxu0 %v2223
        %2902 = vmatprep.subr.mxu0 0.0
        %2903 = vmatpush2.msra.mxu0 %v2222
        %2904 = vmatprep.subr.mxu0 0.0
        %2905 = vmatpush2.msra.mxu0 %v2221
        %2906 = vmatprep.subr.mxu0 0.0
        %2907 = vmatpush2.msra.mxu0 %v2220
        %2908 = vmatprep.subr.mxu0 0.0
        %2909 = vmatpush2.msra.mxu0 %v2219
        %2910 = vmatprep.subr.mxu0 0.0
        %2911 = vmatpush2.msra.mxu0 %v2218
        %2912 = vmatprep.subr.mxu0 0.0
        %2913 = vmatpush2.msra.mxu0 %v2217
        %2914 = vmatprep.subr.mxu0 0.0
        %2915 = vmatpush2.msra.mxu0 %v2216
        %2916 = vmatprep.subr.mxu0 0.0
        %2917 = vmatpush2.msra.mxu0 %v2215
        %2918 = vmatprep.subr.mxu0 0.0
        %2919 = vmatpush2.msra.mxu0 %v2214
        %2920 = vmatprep.mubr.f32.mxu0 %v2785
        %2921 = vmatmul.mubr.f32.gmra.mxu0 %v2782
        %v2922 = vpop.f32.mrf.mxu0
        %v2923 = vadd.f32 %v2853, %v2922
        %v2924 = vpop.f32.mrf.mxu0
        %2925 = vdwg.mxu0
        %v2926 = vmax.f32 %v2923, 0.0
        %v2928 = vrot.slane %v2377, 1
        %2929 = vrot.lane.b32.xlu0 %v2928, 32
        %v2930 = vpop.permute.xlu0 %2929
        %v2932 = vrot.slane %v2377, 2
        %2933 = vrot.lane.b32.xlu0 %v2932, 64
        %v2934 = vpop.permute.xlu0 %2933
        %v2936 = vrot.slane %v2377, 3
        %2937 = vrot.lane.b32.xlu0 %v2936, 96
        %v2938 = vpop.permute.xlu0 %2937
        %v2941 = vrot.slane %v2560, 1
        %2942 = vrot.lane.b32.xlu0 %v2941, 32
        %v2943 = vpop.permute.xlu0 %2942
        %v2945 = vrot.slane %v2560, 2
        %2946 = vrot.lane.b32.xlu0 %v2945, 64
        %v2947 = vpop.permute.xlu0 %2946
        %v2949 = vrot.slane %v2560, 3
        %2950 = vrot.lane.b32.xlu0 %v2949, 96
        %v2951 = vpop.permute.xlu0 %2950
        %v2954 = vrot.slane %v2743, 1
        %2955 = vrot.lane.b32.xlu0 %v2954, 32
        %v2956 = vpop.permute.xlu0 %2955
        %v2958 = vrot.slane %v2743, 2
        %2959 = vrot.lane.b32.xlu0 %v2958, 64
        %v2960 = vpop.permute.xlu0 %2959
        %v2962 = vrot.slane %v2743, 3
        %2963 = vrot.lane.b32.xlu0 %v2962, 96
        %v2964 = vpop.permute.xlu0 %2963
        %v2967 = vrot.slane %v2926, 1
        %2968 = vrot.lane.b32.xlu0 %v2967, 32
        %v2969 = vpop.permute.xlu0 %2968
        %v2971 = vrot.slane %v2926, 2
        %2972 = vrot.lane.b32.xlu0 %v2971, 64
        %v2973 = vpop.permute.xlu0 %2972
        %v2975 = vrot.slane %v2926, 3
        %2976 = vrot.lane.b32.xlu0 %v2975, 96
        %v2977 = vpop.permute.xlu0 %2976
        %v2979 = vsel %vm413, %v2377, %v2930
        %v2980 = vsel %vm1482, %v2979, %v2934
        %v2981 = vsel %vm1491, %v2980, %v2938
        %v2982 = vsel %vm413, %v2560, %v2943
        %v2983 = vsel %vm1482, %v2982, %v2947
        %v2984 = vsel %vm1491, %v2983, %v2951
        %v2985 = vsel %vm413, %v2743, %v2956
        %v2986 = vsel %vm1482, %v2985, %v2960
        %v2987 = vsel %vm1491, %v2986, %v2964
        %v2988 = vsel %vm413, %v2926, %v2969
        %v2989 = vsel %vm1482, %v2988, %v2973
        %v2990 = vsel %vm1491, %v2989, %v2977
        %v2991 = vld [vmem:[%s8] sm:$0xff]
        %v2992 = vld [vmem:[%s8 + $0x8] sm:$0xff]
        %v2993 = vld [vmem:[%s8 + $0x10] sm:$0xff]
        %v2994 = vld [vmem:[%s8 + $0x18] sm:$0xff]
        %v2995 = vld [vmem:[%s8 + $0x20] sm:$0xff]
        %v2996 = vld [vmem:[%s8 + $0x28] sm:$0xff]
        %v2997 = vld [vmem:[%s8 + $0x30] sm:$0xff]
        %v2998 = vld [vmem:[%s8 + $0x38] sm:$0xff]
        %v2999 = vld [vmem:[%s8 + $0x40] sm:$0xff]
        %v3000 = vld [vmem:[%s8 + $0x48] sm:$0xff]
        %v3001 = vld [vmem:[%s8 + $0x50] sm:$0xff]
        %v3002 = vld [vmem:[%s8 + $0x58] sm:$0xff]
        %v3003 = vld [vmem:[%s8 + $0x60] sm:$0xff]
        %v3004 = vld [vmem:[%s8 + $0x68] sm:$0xff]
        %v3005 = vld [vmem:[%s8 + $0x70] sm:$0xff]
        %v3006 = vld [vmem:[%s8 + $0x78] sm:$0xff]
        %v3007 = vld [vmem:[%s8 + $0x80] sm:$0xff]
        %v3008 = vld [vmem:[%s8 + $0x88] sm:$0xff]
        %v3009 = vld [vmem:[%s8 + $0x90] sm:$0xff]
        %v3010 = vld [vmem:[%s8 + $0x98] sm:$0xff]
        %v3011 = vld [vmem:[%s8 + $0xa0] sm:$0xff]
        %v3012 = vld [vmem:[%s8 + $0xa8] sm:$0xff]
        %v3013 = vld [vmem:[%s8 + $0xb0] sm:$0xff]
        %v3014 = vld [vmem:[%s8 + $0xb8] sm:$0xff]
        %v3015 = vld [vmem:[%s8 + $0xc0] sm:$0xff]
        %v3016 = vld [vmem:[%s8 + $0xc8] sm:$0xff]
        %v3017 = vld [vmem:[%s8 + $0xd0] sm:$0xff]
        %v3018 = vld [vmem:[%s8 + $0xd8] sm:$0xff]
        %v3019 = vld [vmem:[%s8 + $0xe0] sm:$0xff]
        %v3020 = vld [vmem:[%s8 + $0xe8] sm:$0xff]
        %v3021 = vld [vmem:[%s8 + $0xf0] sm:$0xff]
        %v3022 = vld [vmem:[%s8 + $0xf8] sm:$0xff]
        %v3023 = vld [vmem:[%s8 + $0x100] sm:$0xff]
        %v3024 = vld [vmem:[%s8 + $0x108] sm:$0xff]
        %v3025 = vld [vmem:[%s8 + $0x110] sm:$0xff]
        %v3026 = vld [vmem:[%s8 + $0x118] sm:$0xff]
        %v3027 = vld [vmem:[%s8 + $0x120] sm:$0xff]
        %v3028 = vld [vmem:[%s8 + $0x128] sm:$0xff]
        %v3029 = vld [vmem:[%s8 + $0x130] sm:$0xff]
        %v3030 = vld [vmem:[%s8 + $0x138] sm:$0xff]
        %v3031 = vld [vmem:[%s8 + $0x140] sm:$0xff]
        %v3032 = vld [vmem:[%s8 + $0x148] sm:$0xff]
        %v3033 = vld [vmem:[%s8 + $0x150] sm:$0xff]
        %v3034 = vld [vmem:[%s8 + $0x158] sm:$0xff]
        %v3035 = vld [vmem:[%s8 + $0x160] sm:$0xff]
        %v3036 = vld [vmem:[%s8 + $0x168] sm:$0xff]
        %v3037 = vld [vmem:[%s8 + $0x170] sm:$0xff]
        %v3038 = vld [vmem:[%s8 + $0x178] sm:$0xff]
        %v3039 = vld [vmem:[%s8 + $0x180] sm:$0xff]
        %v3040 = vld [vmem:[%s8 + $0x188] sm:$0xff]
        %v3041 = vld [vmem:[%s8 + $0x190] sm:$0xff]
        %v3042 = vld [vmem:[%s8 + $0x198] sm:$0xff]
        %v3043 = vld [vmem:[%s8 + $0x1a0] sm:$0xff]
        %v3044 = vld [vmem:[%s8 + $0x1a8] sm:$0xff]
        %v3045 = vld [vmem:[%s8 + $0x1b0] sm:$0xff]
        %v3046 = vld [vmem:[%s8 + $0x1b8] sm:$0xff]
        %v3047 = vld [vmem:[%s8 + $0x1c0] sm:$0xff]
        %v3048 = vld [vmem:[%s8 + $0x1c8] sm:$0xff]
        %v3049 = vld [vmem:[%s8 + $0x1d0] sm:$0xff]
        %v3050 = vld [vmem:[%s8 + $0x1d8] sm:$0xff]
        %v3051 = vld [vmem:[%s8 + $0x1e0] sm:$0xff]
        %v3052 = vld [vmem:[%s8 + $0x1e8] sm:$0xff]
        %v3053 = vld [vmem:[%s8 + $0x1f0] sm:$0xff]
        %v3054 = vld [vmem:[%s8 + $0x1f8] sm:$0xff]
        %v3055 = vld [vmem:[%s8 + $0x200] sm:$0xff]
        %v3056 = vld [vmem:[%s8 + $0x208] sm:$0xff]
        %v3057 = vld [vmem:[%s8 + $0x210] sm:$0xff]
        %v3058 = vld [vmem:[%s8 + $0x218] sm:$0xff]
        %v3059 = vld [vmem:[%s8 + $0x220] sm:$0xff]
        %v3060 = vld [vmem:[%s8 + $0x228] sm:$0xff]
        %v3061 = vld [vmem:[%s8 + $0x230] sm:$0xff]
        %v3062 = vld [vmem:[%s8 + $0x238] sm:$0xff]
        %v3063 = vld [vmem:[%s8 + $0x240] sm:$0xff]
        %v3064 = vld [vmem:[%s8 + $0x248] sm:$0xff]
        %v3065 = vld [vmem:[%s8 + $0x250] sm:$0xff]
        %v3066 = vld [vmem:[%s8 + $0x258] sm:$0xff]
        %v3067 = vld [vmem:[%s8 + $0x260] sm:$0xff]
        %v3068 = vld [vmem:[%s8 + $0x268] sm:$0xff]
        %v3069 = vld [vmem:[%s8 + $0x270] sm:$0xff]
        %v3070 = vld [vmem:[%s8 + $0x278] sm:$0xff]
        %v3071 = vld [vmem:[%s8 + $0x280] sm:$0xff]
        %v3072 = vld [vmem:[%s8 + $0x288] sm:$0xff]
        %v3073 = vld [vmem:[%s8 + $0x290] sm:$0xff]
        %v3074 = vld [vmem:[%s8 + $0x298] sm:$0xff]
        %v3075 = vld [vmem:[%s8 + $0x2a0] sm:$0xff]
        %v3076 = vld [vmem:[%s8 + $0x2a8] sm:$0xff]
        %v3077 = vld [vmem:[%s8 + $0x2b0] sm:$0xff]
        %v3078 = vld [vmem:[%s8 + $0x2b8] sm:$0xff]
        %v3079 = vld [vmem:[%s8 + $0x2c0] sm:$0xff]
        %v3080 = vld [vmem:[%s8 + $0x2c8] sm:$0xff]
        %v3081 = vld [vmem:[%s8 + $0x2d0] sm:$0xff]
        %v3082 = vld [vmem:[%s8 + $0x2d8] sm:$0xff]
        %v3083 = vld [vmem:[%s8 + $0x2e0] sm:$0xff]
        %v3084 = vld [vmem:[%s8 + $0x2e8] sm:$0xff]
        %v3085 = vld [vmem:[%s8 + $0x2f0] sm:$0xff]
        %v3086 = vld [vmem:[%s8 + $0x2f8] sm:$0xff]
        %v3087 = vld [vmem:[%s8 + $0x300] sm:$0xff]
        %v3088 = vld [vmem:[%s8 + $0x308] sm:$0xff]
        %v3089 = vld [vmem:[%s8 + $0x310] sm:$0xff]
        %v3090 = vld [vmem:[%s8 + $0x318] sm:$0xff]
        %v3091 = vld [vmem:[%s8 + $0x320] sm:$0xff]
        %v3092 = vld [vmem:[%s8 + $0x328] sm:$0xff]
        %v3093 = vld [vmem:[%s8 + $0x330] sm:$0xff]
        %v3094 = vld [vmem:[%s8 + $0x338] sm:$0xff]
        %v3095 = vld [vmem:[%s8 + $0x340] sm:$0xff]
        %v3096 = vld [vmem:[%s8 + $0x348] sm:$0xff]
        %v3097 = vld [vmem:[%s8 + $0x350] sm:$0xff]
        %v3098 = vld [vmem:[%s8 + $0x358] sm:$0xff]
        %v3099 = vld [vmem:[%s8 + $0x360] sm:$0xff]
        %v3100 = vld [vmem:[%s8 + $0x368] sm:$0xff]
        %v3101 = vld [vmem:[%s8 + $0x370] sm:$0xff]
        %v3102 = vld [vmem:[%s8 + $0x378] sm:$0xff]
        %v3103 = vld [vmem:[%s8 + $0x380] sm:$0xff]
        %v3104 = vld [vmem:[%s8 + $0x388] sm:$0xff]
        %v3105 = vld [vmem:[%s8 + $0x390] sm:$0xff]
        %v3106 = vld [vmem:[%s8 + $0x398] sm:$0xff]
        %v3107 = vld [vmem:[%s8 + $0x3a0] sm:$0xff]
        %v3108 = vld [vmem:[%s8 + $0x3a8] sm:$0xff]
        %v3109 = vld [vmem:[%s8 + $0x3b0] sm:$0xff]
        %v3110 = vld [vmem:[%s8 + $0x3b8] sm:$0xff]
        %v3111 = vld [vmem:[%s8 + $0x3c0] sm:$0xff]
        %v3112 = vld [vmem:[%s8 + $0x3c8] sm:$0xff]
        %v3113 = vld [vmem:[%s8 + $0x3d0] sm:$0xff]
        %v3114 = vld [vmem:[%s8 + $0x3d8] sm:$0xff]
        %v3115 = vld [vmem:[%s8 + $0x3e0] sm:$0xff]
        %v3116 = vld [vmem:[%s8 + $0x3e8] sm:$0xff]
        %v3117 = vld [vmem:[%s8 + $0x3f0] sm:$0xff]
        %v3118 = vld [vmem:[%s8 + $0x3f8] sm:$0xff]
        %v3119 = vld [vmem:[%s9] sm:$0x3]
        %v3121 = vlaneseq
        %v3122 = vshrl.u32 %v3121, 7
        %v3123 = vsub.s32 0, %v3122
        %v3124 = vrot.slane %v3119, %v3123
        %v3125 = vlaneseq
        %v3126 = vshrl.u32 %v3125, 7
        %v3127 = vsub.s32 1, %v3126
        %v3128 = vrot.slane %v3119, %v3127
        %3131 = vmatprep.subr.mxu0 %v3022
        %3132 = vmatpush1.msra.mxu0 %v3021
        %3133 = vmatprep.subr.mxu0 %v3020
        %3134 = vmatpush1.msra.mxu0 %v3019
        %3135 = vmatprep.subr.mxu0 %v3018
        %3136 = vmatpush1.msra.mxu0 %v3017
        %3137 = vmatprep.subr.mxu0 %v3016
        %3138 = vmatpush1.msra.mxu0 %v3015
        %3139 = vmatprep.subr.mxu0 %v3014
        %3140 = vmatpush1.msra.mxu0 %v3013
        %3141 = vmatprep.subr.mxu0 %v3012
        %3142 = vmatpush1.msra.mxu0 %v3011
        %3143 = vmatprep.subr.mxu0 %v3010
        %3144 = vmatpush1.msra.mxu0 %v3009
        %3145 = vmatprep.subr.mxu0 %v3008
        %3146 = vmatpush1.msra.mxu0 %v3007
        %3147 = vmatprep.subr.mxu0 %v3006
        %3148 = vmatpush1.msra.mxu0 %v3005
        %3149 = vmatprep.subr.mxu0 %v3004
        %3150 = vmatpush1.msra.mxu0 %v3003
        %3151 = vmatprep.subr.mxu0 %v3002
        %3152 = vmatpush1.msra.mxu0 %v3001
        %3153 = vmatprep.subr.mxu0 %v3000
        %3154 = vmatpush1.msra.mxu0 %v2999
        %3155 = vmatprep.subr.mxu0 %v2998
        %3156 = vmatpush1.msra.mxu0 %v2997
        %3157 = vmatprep.subr.mxu0 %v2996
        %3158 = vmatpush1.msra.mxu0 %v2995
        %3159 = vmatprep.subr.mxu0 %v2994
        %3160 = vmatpush1.msra.mxu0 %v2993
        %3161 = vmatprep.subr.mxu0 %v2992
        %3162 = vmatpush1.msra.mxu0 %v2991
        %3163 = vmatprep.subr.mxu0 %v3054
        %3164 = vmatpush2.msra.mxu0 %v3053
        %3165 = vmatprep.subr.mxu0 %v3052
        %3166 = vmatpush2.msra.mxu0 %v3051
        %3167 = vmatprep.subr.mxu0 %v3050
        %3168 = vmatpush2.msra.mxu0 %v3049
        %3169 = vmatprep.subr.mxu0 %v3048
        %3170 = vmatpush2.msra.mxu0 %v3047
        %3171 = vmatprep.subr.mxu0 %v3046
        %3172 = vmatpush2.msra.mxu0 %v3045
        %3173 = vmatprep.subr.mxu0 %v3044
        %3174 = vmatpush2.msra.mxu0 %v3043
        %3175 = vmatprep.subr.mxu0 %v3042
        %3176 = vmatpush2.msra.mxu0 %v3041
        %3177 = vmatprep.subr.mxu0 %v3040
        %3178 = vmatpush2.msra.mxu0 %v3039
        %3179 = vmatprep.subr.mxu0 %v3038
        %3180 = vmatpush2.msra.mxu0 %v3037
        %3181 = vmatprep.subr.mxu0 %v3036
        %3182 = vmatpush2.msra.mxu0 %v3035
        %3183 = vmatprep.subr.mxu0 %v3034
        %3184 = vmatpush2.msra.mxu0 %v3033
        %3185 = vmatprep.subr.mxu0 %v3032
        %3186 = vmatpush2.msra.mxu0 %v3031
        %3187 = vmatprep.subr.mxu0 %v3030
        %3188 = vmatpush2.msra.mxu0 %v3029
        %3189 = vmatprep.subr.mxu0 %v3028
        %3190 = vmatpush2.msra.mxu0 %v3027
        %3191 = vmatprep.subr.mxu0 %v3026
        %3192 = vmatpush2.msra.mxu0 %v3025
        %3193 = vmatprep.subr.mxu0 %v3024
        %3194 = vmatpush2.msra.mxu0 %v3023
        %3195 = vmatprep.mubr.f32.mxu0 %v2984
        %3196 = vmatmul.mubr.f32.gmra.mxu0 %v2981
        %v3197 = vpop.f32.mrf.mxu0
        %v3198 = vadd.f32 %v3124, %v3197
        %v3199 = vpop.f32.mrf.mxu0
        %v3200 = vadd.f32 %v3128, %v3199
        %3201 = vdwg.mxu0
        %3202 = vmatprep.subr.mxu0 %v3086
        %3203 = vmatpush1.msra.mxu0 %v3085
        %3204 = vmatprep.subr.mxu0 %v3084
        %3205 = vmatpush1.msra.mxu0 %v3083
        %3206 = vmatprep.subr.mxu0 %v3082
        %3207 = vmatpush1.msra.mxu0 %v3081
        %3208 = vmatprep.subr.mxu0 %v3080
        %3209 = vmatpush1.msra.mxu0 %v3079
        %3210 = vmatprep.subr.mxu0 %v3078
        %3211 = vmatpush1.msra.mxu0 %v3077
        %3212 = vmatprep.subr.mxu0 %v3076
        %3213 = vmatpush1.msra.mxu0 %v3075
        %3214 = vmatprep.subr.mxu0 %v3074
        %3215 = vmatpush1.msra.mxu0 %v3073
        %3216 = vmatprep.subr.mxu0 %v3072
        %3217 = vmatpush1.msra.mxu0 %v3071
        %3218 = vmatprep.subr.mxu0 %v3070
        %3219 = vmatpush1.msra.mxu0 %v3069
        %3220 = vmatprep.subr.mxu0 %v3068
        %3221 = vmatpush1.msra.mxu0 %v3067
        %3222 = vmatprep.subr.mxu0 %v3066
        %3223 = vmatpush1.msra.mxu0 %v3065
        %3224 = vmatprep.subr.mxu0 %v3064
        %3225 = vmatpush1.msra.mxu0 %v3063
        %3226 = vmatprep.subr.mxu0 %v3062
        %3227 = vmatpush1.msra.mxu0 %v3061
        %3228 = vmatprep.subr.mxu0 %v3060
        %3229 = vmatpush1.msra.mxu0 %v3059
        %3230 = vmatprep.subr.mxu0 %v3058
        %3231 = vmatpush1.msra.mxu0 %v3057
        %3232 = vmatprep.subr.mxu0 %v3056
        %3233 = vmatpush1.msra.mxu0 %v3055
        %3234 = vmatprep.subr.mxu0 %v3118
        %3235 = vmatpush2.msra.mxu0 %v3117
        %3236 = vmatprep.subr.mxu0 %v3116
        %3237 = vmatpush2.msra.mxu0 %v3115
        %3238 = vmatprep.subr.mxu0 %v3114
        %3239 = vmatpush2.msra.mxu0 %v3113
        %3240 = vmatprep.subr.mxu0 %v3112
        %3241 = vmatpush2.msra.mxu0 %v3111
        %3242 = vmatprep.subr.mxu0 %v3110
        %3243 = vmatpush2.msra.mxu0 %v3109
        %3244 = vmatprep.subr.mxu0 %v3108
        %3245 = vmatpush2.msra.mxu0 %v3107
        %3246 = vmatprep.subr.mxu0 %v3106
        %3247 = vmatpush2.msra.mxu0 %v3105
        %3248 = vmatprep.subr.mxu0 %v3104
        %3249 = vmatpush2.msra.mxu0 %v3103
        %3250 = vmatprep.subr.mxu0 %v3102
        %3251 = vmatpush2.msra.mxu0 %v3101
        %3252 = vmatprep.subr.mxu0 %v3100
        %3253 = vmatpush2.msra.mxu0 %v3099
        %3254 = vmatprep.subr.mxu0 %v3098
        %3255 = vmatpush2.msra.mxu0 %v3097
        %3256 = vmatprep.subr.mxu0 %v3096
        %3257 = vmatpush2.msra.mxu0 %v3095
        %3258 = vmatprep.subr.mxu0 %v3094
        %3259 = vmatpush2.msra.mxu0 %v3093
        %3260 = vmatprep.subr.mxu0 %v3092
        %3261 = vmatpush2.msra.mxu0 %v3091
        %3262 = vmatprep.subr.mxu0 %v3090
        %3263 = vmatpush2.msra.mxu0 %v3089
        %3264 = vmatprep.subr.mxu0 %v3088
        %3265 = vmatpush2.msra.mxu0 %v3087
        %3266 = vmatprep.mubr.f32.mxu0 %v2990
        %3267 = vmatmul.mubr.f32.gmra.mxu0 %v2987
        %v3268 = vpop.f32.mrf.mxu0
        %v3269 = vadd.f32 %v3198, %v3268
        %v3270 = vpop.f32.mrf.mxu0
        %v3271 = vadd.f32 %v3200, %v3270
        %3272 = vdwg.mxu0
        %v3273 = vmax.f32 %v3269, 0.0
        %v3274 = vmax.f32 %v3271, 0.0
        %v3275 = vld [vmem:[%s10] sm:$0xff]
        %v3276 = vld [vmem:[%s10 + $0x8] sm:$0xff]
        %v3277 = vld [vmem:[%s10 + $0x10] sm:$0xff]
        %v3278 = vld [vmem:[%s10 + $0x18] sm:$0xff]
        %v3279 = vld [vmem:[%s10 + $0x20] sm:$0xff]
        %v3280 = vld [vmem:[%s10 + $0x28] sm:$0xff]
        %v3281 = vld [vmem:[%s10 + $0x30] sm:$0xff]
        %v3282 = vld [vmem:[%s10 + $0x38] sm:$0xff]
        %v3283 = vld [vmem:[%s10 + $0x40] sm:$0xff]
        %v3284 = vld [vmem:[%s10 + $0x48] sm:$0xff]
        %v3285 = vld [vmem:[%s10 + $0x50] sm:$0xff]
        %v3286 = vld [vmem:[%s10 + $0x58] sm:$0xff]
        %v3287 = vld [vmem:[%s10 + $0x60] sm:$0xff]
        %v3288 = vld [vmem:[%s10 + $0x68] sm:$0xff]
        %v3289 = vld [vmem:[%s10 + $0x70] sm:$0xff]
        %v3290 = vld [vmem:[%s10 + $0x78] sm:$0xff]
        %v3291 = vld [vmem:[%s10 + $0x80] sm:$0xff]
        %v3292 = vld [vmem:[%s10 + $0x88] sm:$0xff]
        %v3293 = vld [vmem:[%s10 + $0x90] sm:$0xff]
        %v3294 = vld [vmem:[%s10 + $0x98] sm:$0xff]
        %v3295 = vld [vmem:[%s10 + $0xa0] sm:$0xff]
        %v3296 = vld [vmem:[%s10 + $0xa8] sm:$0xff]
        %v3297 = vld [vmem:[%s10 + $0xb0] sm:$0xff]
        %v3298 = vld [vmem:[%s10 + $0xb8] sm:$0xff]
        %v3299 = vld [vmem:[%s10 + $0xc0] sm:$0xff]
        %v3300 = vld [vmem:[%s10 + $0xc8] sm:$0xff]
        %v3301 = vld [vmem:[%s10 + $0xd0] sm:$0xff]
        %v3302 = vld [vmem:[%s10 + $0xd8] sm:$0xff]
        %v3303 = vld [vmem:[%s10 + $0xe0] sm:$0xff]
        %v3304 = vld [vmem:[%s10 + $0xe8] sm:$0xff]
        %v3305 = vld [vmem:[%s10 + $0xf0] sm:$0xff]
        %v3306 = vld [vmem:[%s10 + $0xf8] sm:$0xff]
        %v3307 = vld [vmem:[%s11] sm:$0x1]
        %3308 = vmatprep.subr.mxu0 0.0
        %3309 = vmatpush1.msra.mxu0 %v3290
        %3310 = vmatprep.subr.mxu0 0.0
        %3311 = vmatpush1.msra.mxu0 %v3289
        %3312 = vmatprep.subr.mxu0 0.0
        %3313 = vmatpush1.msra.mxu0 %v3288
        %3314 = vmatprep.subr.mxu0 0.0
        %3315 = vmatpush1.msra.mxu0 %v3287
        %3316 = vmatprep.subr.mxu0 0.0
        %3317 = vmatpush1.msra.mxu0 %v3286
        %3318 = vmatprep.subr.mxu0 0.0
        %3319 = vmatpush1.msra.mxu0 %v3285
        %3320 = vmatprep.subr.mxu0 0.0
        %3321 = vmatpush1.msra.mxu0 %v3284
        %3322 = vmatprep.subr.mxu0 0.0
        %3323 = vmatpush1.msra.mxu0 %v3283
        %3324 = vmatprep.subr.mxu0 0.0
        %3325 = vmatpush1.msra.mxu0 %v3282
        %3326 = vmatprep.subr.mxu0 0.0
        %3327 = vmatpush1.msra.mxu0 %v3281
        %3328 = vmatprep.subr.mxu0 0.0
        %3329 = vmatpush1.msra.mxu0 %v3280
        %3330 = vmatprep.subr.mxu0 0.0
        %3331 = vmatpush1.msra.mxu0 %v3279
        %3332 = vmatprep.subr.mxu0 0.0
        %3333 = vmatpush1.msra.mxu0 %v3278
        %3334 = vmatprep.subr.mxu0 0.0
        %3335 = vmatpush1.msra.mxu0 %v3277
        %3336 = vmatprep.subr.mxu0 0.0
        %3337 = vmatpush1.msra.mxu0 %v3276
        %3338 = vmatprep.subr.mxu0 0.0
        %3339 = vmatpush1.msra.mxu0 %v3275
        %3340 = vmatprep.subr.mxu0 0.0
        %3341 = vmatpush2.msra.mxu0 %v3306
        %3342 = vmatprep.subr.mxu0 0.0
        %3343 = vmatpush2.msra.mxu0 %v3305
        %3344 = vmatprep.subr.mxu0 0.0
        %3345 = vmatpush2.msra.mxu0 %v3304
        %3346 = vmatprep.subr.mxu0 0.0
        %3347 = vmatpush2.msra.mxu0 %v3303
        %3348 = vmatprep.subr.mxu0 0.0
        %3349 = vmatpush2.msra.mxu0 %v3302
        %3350 = vmatprep.subr.mxu0 0.0
        %3351 = vmatpush2.msra.mxu0 %v3301
        %3352 = vmatprep.subr.mxu0 0.0
        %3353 = vmatpush2.msra.mxu0 %v3300
        %3354 = vmatprep.subr.mxu0 0.0
        %3355 = vmatpush2.msra.mxu0 %v3299
        %3356 = vmatprep.subr.mxu0 0.0
        %3357 = vmatpush2.msra.mxu0 %v3298
        %3358 = vmatprep.subr.mxu0 0.0
        %3359 = vmatpush2.msra.mxu0 %v3297
        %3360 = vmatprep.subr.mxu0 0.0
        %3361 = vmatpush2.msra.mxu0 %v3296
        %3362 = vmatprep.subr.mxu0 0.0
        %3363 = vmatpush2.msra.mxu0 %v3295
        %3364 = vmatprep.subr.mxu0 0.0
        %3365 = vmatpush2.msra.mxu0 %v3294
        %3366 = vmatprep.subr.mxu0 0.0
        %3367 = vmatpush2.msra.mxu0 %v3293
        %3368 = vmatprep.subr.mxu0 0.0
        %3369 = vmatpush2.msra.mxu0 %v3292
        %3370 = vmatprep.subr.mxu0 0.0
        %3371 = vmatpush2.msra.mxu0 %v3291
        %3372 = vmatprep.mubr.f32.mxu0 %v3274
        %3373 = vmatmul.mubr.f32.gmra.mxu0 %v3273
        %v3374 = vpop.f32.mrf.mxu0
        %v3375 = vadd.f32 %v3307, %v3374
        %v3376 = vpop.f32.mrf.mxu0
        %3377 = vdwg.mxu0
        %v3378 = vmax.f32 %v3375, 0.0
        %3379 = vst [vmem:[%s406] sm:$0x1] %v3378
        %s3380 = sand.u32 %s291, 1
        %s3381 = scalar_lea.sflag [#allocation11], %s3380
        %s3382 = sand.u32 %s291, 1
        %s3383 = scalar_lea.vmem [#allocation10], %s3382
        // Predicated region
        $region69: #{encoder_conv_forward.1} parent=67 // pred_check
          %p3384 = pneg %p301
        $region70: #{encoder_conv_forward.1} parent=67 // pred_check_branch
          %3386 = sbr.rel (%p3384) target = $region72
        $region71: #{encoder_conv_forward.1} parent=67 // pred_region
          %s3388 = ssub.s32 16, 16
          %3389 = vsyncadd %s3381, %s3388
          %s3390 = smul.addr %s26, 16
          %s3391 = scalar_lea.hbm %s12, %s3390
          %s3393 = sshll.u32 %s3383, 4
          %s3394 = int_to_ptr.vmem [resolvable:$true] %s3393
          %3396 = dma.vmem_to_hbm [thread:$0]  %s3394, 16, %s3391, %s3381
        $region72: #{encoder_conv_forward.1} parent=67 // pred_fallthru
          _
      $region68: #{encoder_conv_forward.1} parent=5 // pred_fallthru
        _
      %p3397 = scmp.le.s32.totalorder 2, %s21
      // Predicated region
      $region73: #{encoder_conv_forward.1} parent=5 // pred_check
        %p3398 = pneg %p3397
      $region74: #{encoder_conv_forward.1} parent=5 // pred_check_branch
        %3400 = sbr.rel (%p3398) target = $region76
      $region75: #{encoder_conv_forward.1} parent=5 // pred_region
        %s3401 = ssub.s32 %s21, 2
        // Predicated region
        $region77: #{encoder_conv_forward.1} parent=75 // pred_check
          %p3402 = pneg %p307
        $region78: #{encoder_conv_forward.1} parent=75 // pred_check_branch
          %3404 = sbr.rel (%p3402) target = $region80
        $region79: #{encoder_conv_forward.1} parent=75 // pred_region
          %s3405 = sand.u32 %s292, 1
          %s3406 = scalar_lea.sflag [#allocation11], %s3405
          %s3407 = sand.u32 %s292, 1
          %s3408 = scalar_lea.vmem [#allocation10], %s3407
          %3409 = dma.done %s3406, 16
        $region80: #{encoder_conv_forward.1} parent=75 // pred_fallthru
          _
      $region76: #{encoder_conv_forward.1} parent=5 // pred_fallthru
        _
    $region6: #{encoder_conv_forward.1} parent=1 // loop_footer
      %s25 = sadd.s32 1, %s21
    $region7: #{encoder_conv_forward.1} parent=1 // loop_footer_branch
      %20 = sbr.rel target = $region3
    $region8: #{encoder_conv_forward.1} parent=1 // loop_exit
      _
    %3410 = vsyncpa [#allocation11], 1
    %s3411 = scalar_lea.sflag [#allocation11], 1
    %3412 = vsyncpa %s3411, 1

</llo_original>
